<compile_context>
chip_gen: v6e
topology: v6e:2x2x1
jax: 0.10.0
libtpu: 0.0.40
codegen_flags: <defaults>
</compile_context>

<pallas_src>
import math
import functools

import jax
import jax.numpy as jnp
from jax.experimental import pallas as pl
from jax.experimental.pallas import tpu as pltpu

# ---------------- configuration (small, synthetic "args") ----------------
B = 2            # batch
S = 8            # sequence length
TEXT_DIM = 32    # args.text_feat_dim (== base_dim, required by the concat)
VIDEO_DIM = 24   # args.video_feat_dim
AUDIO_DIM = 16   # args.audio_feat_dim
BASE_DIM = 32    # args.base_dim
NUM_HEADS = 4    # args.nheads
LAYERS_V = 1     # args.encoder_layers_v
LAYERS_A = 1     # args.encoder_layers_a

BLOB_LANES = 128                      # lane width of the packed parameter blob
OUT_WIDTH = TEXT_DIM + 3 * BASE_DIM   # 32 + 96 = 128 -> lane-dense output

_VMEM = pl.BlockSpec(memory_space=pltpu.MemorySpace.VMEM)


# --------------------------- host-side helpers ------------------------------
def sinusoidal_pos_emb(seq_len, dim):
    # fairseq-style sinusoidal embedding; positions start at padding_idx+1 = 1.
    half = dim // 2
    emb = math.log(10000.0) / (half - 1)
    freqs = jnp.exp(jnp.arange(half, dtype=jnp.float32) * -emb)
    pos = jnp.arange(1, seq_len + 1, dtype=jnp.float32)
    args = pos[:, None] * freqs[None, :]
    pe = jnp.concatenate([jnp.sin(args), jnp.cos(args)], axis=1)
    if dim % 2 == 1:
        pe = jnp.concatenate([pe, jnp.zeros((seq_len, 1), jnp.float32)], axis=1)
    return pe


def pack_params(params):
    """One-time setup: fold head scale into Q, fuse QKV, pack EVERYTHING
    (weights, biases, LN params, pos-embeddings, projections) into a single
    contiguous f32 [R, 128] blob plus a static {name: (row, rows, cols)}
    layout used for free static slicing inside the kernel."""
    entries = []

    def add(name, arr):
        arr = jnp.asarray(arr, jnp.float32)
        if arr.ndim == 1:
            arr = arr[None, :]
        assert arr.ndim == 2 and arr.shape[1] <= BLOB_LANES, (name, arr.shape)
        entries.append((name, arr))

    def add_encoder(prefix, enc, d):
        dh = d // NUM_HEADS
        scale = dh ** -0.5
        add(f"{prefix}.pos", sinusoidal_pos_emb(S, d))
        for li, lp in enumerate(enc["layers"]):
            p = f"{prefix}.l{li}."
            add(p + "ln0_g", lp["ln0_g"])
            add(p + "ln0_b", lp["ln0_b"])
            # (x Wq + bq) * s == x (Wq * s) + (bq * s); fuse QKV into [D, 3D]
            add(p + "wqkv",
                jnp.concatenate([lp["wq"] * scale, lp["wk"], lp["wv"]], axis=1))
            add(p + "bqkv",
                jnp.concatenate([lp["bq"] * scale, lp["bk"], lp["bv"]], axis=1))
            add(p + "wo", lp["wo"])
            add(p + "bo", lp["bo"])
            add(p + "ln1_g", lp["ln1_g"])
            add(p + "ln1_b", lp["ln1_b"])
            add(p + "w1", lp["w1"])
            add(p + "b1", lp["b1"])
            add(p + "w2", lp["w2"])
            add(p + "b2", lp["b2"])
        add(f"{prefix}.lnf_g", enc["lnf_g"])
        add(f"{prefix}.lnf_b", enc["lnf_b"])

    add_encoder("v", params["v_encoder"], VIDEO_DIM)
    add_encoder("a", params["a_encoder"], AUDIO_DIM)
    add("video_proj_w", params["video_proj_w"])
    add("video_proj_b", params["video_proj_b"])
    add("audio_proj_w", params["audio_proj_w"])
    add("audio_proj_b", params["audio_proj_b"])
    add("fusion_w", params["fusion_w"])
    add("fusion_b", params["fusion_b"])

    layout = {}
    off = 0
    for name, arr in entries:
        r, c = arr.shape
        layout[name] = (off, r, c)
        off += ((r + 7) // 8) * 8          # 8-row (sublane) aligned windows

    blob = jnp.zeros((off, BLOB_LANES), jnp.float32)
    for name, arr in entries:
        o, r, c = layout[name]
        blob = blob.at[o:o + r, :c].set(arr)
    return blob, layout


# ------------------------- in-kernel building blocks -----------------------
def _get(blob_ref, layout, name):
    off, rows, cols = layout[name]
    return blob_ref[pl.ds(off, rows), pl.ds(0, cols)]   # static window -> load


def _layernorm(x, g, b):
    mu = jnp.mean(x, axis=-1, keepdims=True)
    var = jnp.mean((x - mu) ** 2, axis=-1, keepdims=True)
    return (x - mu) * jax.lax.rsqrt(var + 1e-5) * g + b


def _encoder(x3, blob_ref, layout, prefix, num_layers, num_heads):
    """Pre-norm MulT TransformerEncoder + final LN + mean over seq."""
    b, s, d = x3.shape
    n = b * s
    dh = d // num_heads

    # input scaling by sqrt(D) + sinusoidal positional embedding (from blob)
    pos = _get(blob_ref, layout, f"{prefix}.pos")               # (S, D)
    x = (x3 * math.sqrt(d) + pos[None, :, :]).reshape(n, d)

    for li in range(num_layers):
        pfx = f"{prefix}.l{li}."
        g = lambda name: _get(blob_ref, layout, pfx + name)

        # --- self-attention block (pre-norm) --------------------------------
        res = x
        xn = _layernorm(x, g("ln0_g"), g("ln0_b"))
        # fused QKV projection; head scale already folded into the Q columns
        qkv = (jnp.dot(xn, g("wqkv"), preferred_element_type=jnp.float32)
               + g("bqkv"))
        q = qkv[:, 0 * d:1 * d].reshape(b, s, d)
        k = qkv[:, 1 * d:2 * d].reshape(b, s, d)
        v = qkv[:, 2 * d:3 * d].reshape(b, s, d)

        ctx_heads = []
        for hi in range(num_heads):            # static unroll, tiny head count
            sl = slice(hi * dh, (hi + 1) * dh)
            sc = jnp.einsum('bqd,bkd->bqk', q[:, :, sl], k[:, :, sl],
                            preferred_element_type=jnp.float32)
            sc = sc - jnp.max(sc, axis=-1, keepdims=True)
            p = jnp.exp(sc)
            p = p / jnp.sum(p, axis=-1, keepdims=True)   # exact softmax denom
            ctx_heads.append(
                jnp.einsum('bqk,bkd->bqd', p, v[:, :, sl],
                           preferred_element_type=jnp.float32))
        ctx = jnp.concatenate(ctx_heads, axis=-1).reshape(n, d)
        x = (res
             + jnp.dot(ctx, g("wo"), preferred_element_type=jnp.float32)
             + g("bo"))

        # --- feed-forward block (pre-norm) ----------------------------------
        res = x
        xn = _layernorm(x, g("ln1_g"), g("ln1_b"))
        hid = jnp.maximum(
            jnp.dot(xn, g("w1"), preferred_element_type=jnp.float32)
            + g("b1"), 0.0)
        x = (res
             + jnp.dot(hid, g("w2"), preferred_element_type=jnp.float32)
             + g("b2"))

    x = _layernorm(x, _get(blob_ref, layout, f"{prefix}.lnf_g"),
                   _get(blob_ref, layout, f"{prefix}.lnf_b"))
    return jnp.mean(x.reshape(b, s, d), axis=1)           # [B, D]


# ------------------------------ fused kernel -------------------------------
def fused_forward_kernel(t_ref, v_ref, a_ref, blob_ref, out_ref, *,
                         layout, num_heads, layers_v, layers_a):
    v_feat = _encoder(v_ref[...], blob_ref, layout, "v", layers_v, num_heads)
    visual_out = (jnp.dot(v_feat, _get(blob_ref, layout, "video_proj_w"),
                          preferred_element_type=jnp.float32)
                  + _get(blob_ref, layout, "video_proj_b"))

    a_feat = _encoder(a_ref[...], blob_ref, layout, "a", layers_a, num_heads)
    acoustic_out = (jnp.dot(a_feat, _get(blob_ref, layout, "audio_proj_w"),
                            preferred_element_type=jnp.float32)
                    + _get(blob_ref, layout, "audio_proj_b"))

    textual_out = t_ref[...]                               # [B, TEXT_DIM]

    feats = jnp.concatenate([textual_out, visual_out, acoustic_out], axis=-1)
    fused = (jnp.dot(feats, _get(blob_ref, layout, "fusion_w"),
                     preferred_element_type=jnp.float32)
             + _get(blob_ref, layout, "fusion_b"))

    # single lane-dense [B, 128] writeback (text | visual | acoustic | fused)
    out_ref[...] = jnp.concatenate([feats, fused], axis=-1)


def make_fusion_forward(layout):
    kernel = functools.partial(fused_forward_kernel, layout=layout,
                               num_heads=NUM_HEADS,
                               layers_v=LAYERS_V, layers_a=LAYERS_A)

    @jax.jit
    def forward(textual, visual, acoustic, blob):
        b = textual.shape[0]
        t_row = textual[:, 0, :]          # identity slice stays on the XLA side
        out = pl.pallas_call(
            kernel,
            out_shape=jax.ShapeDtypeStruct((b, OUT_WIDTH), jnp.float32),
            in_specs=[_VMEM, _VMEM, _VMEM, _VMEM],
            out_specs=_VMEM,
        )(t_row, visual, acoustic, blob)
        return (out[:, 0:TEXT_DIM],
                out[:, TEXT_DIM:TEXT_DIM + BASE_DIM],
                out[:, TEXT_DIM + BASE_DIM:TEXT_DIM + 2 * BASE_DIM],
                out[:, TEXT_DIM + 2 * BASE_DIM:OUT_WIDTH])

    return forward


# ------------------------- pure-JAX reference ------------------------------
def reference_forward(textual, visual, acoustic, params):
    def layernorm(x, g, b):
        mu = jnp.mean(x, -1, keepdims=True)
        var = jnp.mean((x - mu) ** 2, -1, keepdims=True)
        return (x - mu) / jnp.sqrt(var + 1e-5) * g + b

    def encoder(x, enc, nh):
        b, s, d = x.shape
        dh = d // nh
        scale = dh ** -0.5
        x = x * math.sqrt(d) + sinusoidal_pos_emb(s, d)[None]
        for lp in enc['layers']:
            res = x
            xn = layernorm(x, lp['ln0_g'], lp['ln0_b']).reshape(b * s, d)
            q = ((xn @ lp['wq'] + lp['bq']) * scale).reshape(b, s, nh, dh)
            k = (xn @ lp['wk'] + lp['bk']).reshape(b, s, nh, dh)
            v = (xn @ lp['wv'] + lp['bv']).reshape(b, s, nh, dh)
            sc = jnp.einsum('bqhd,bkhd->bhqk', q, k)
            p = jax.nn.softmax(sc, axis=-1)
            ctx = jnp.einsum('bhqk,bkhd->bqhd', p, v).reshape(b * s, d)
            x = res + (ctx @ lp['wo'] + lp['bo']).reshape(b, s, d)
            res = x
            xn = layernorm(x, lp['ln1_g'], lp['ln1_b']).reshape(b * s, d)
            hid = jax.nn.relu(xn @ lp['w1'] + lp['b1'])
            x = res + (hid @ lp['w2'] + lp['b2']).reshape(b, s, d)
        x = layernorm(x, enc['lnf_g'], enc['lnf_b'])
        return jnp.mean(x, axis=1)

    v_out = (encoder(visual, params['v_encoder'], NUM_HEADS)
             @ params['video_proj_w'] + params['video_proj_b'])
    a_out = (encoder(acoustic, params['a_encoder'], NUM_HEADS)
             @ params['audio_proj_w'] + params['audio_proj_b'])
    t_out = textual[:, 0]
    fused = (jnp.concatenate([t_out, v_out, a_out], axis=-1)
             @ params['fusion_w'] + params['fusion_b'])
    return t_out, v_out, a_out, fused


# --------------------------- parameter init --------------------------------
def init_params(key):
    keys = iter(jax.random.split(key, 64))

    def w(shape, scale=0.05):
        return jax.random.normal(next(keys), shape, jnp.float32) * scale

    def zeros(shape):
        return jnp.zeros(shape, jnp.float32)

    def ones(shape):
        return jnp.ones(shape, jnp.float32)

    def encoder_params(d, n_layers):
        layers = []
        for _ in range(n_layers):
            layers.append(dict(
                wq=w((d, d)), wk=w((d, d)), wv=w((d, d)), wo=w((d, d)),
                bq=zeros((1, d)), bk=zeros((1, d)),
                bv=zeros((1, d)), bo=zeros((1, d)),
                ln0_g=ones((1, d)), ln0_b=zeros((1, d)),
                w1=w((d, 4 * d)), b1=zeros((1, 4 * d)),
                w2=w((4 * d, d)), b2=zeros((1, d)),
                ln1_g=ones((1, d)), ln1_b=zeros((1, d)),
            ))
        return dict(layers=layers, lnf_g=ones((1, d)), lnf_b=zeros((1, d)))

    return dict(
        v_encoder=encoder_params(VIDEO_DIM, LAYERS_V),
        a_encoder=encoder_params(AUDIO_DIM, LAYERS_A),
        video_proj_w=w((VIDEO_DIM, BASE_DIM)), video_proj_b=zeros((1, BASE_DIM)),
        audio_proj_w=w((AUDIO_DIM, BASE_DIM)), audio_proj_b=zeros((1, BASE_DIM)),
        fusion_w=w((3 * BASE_DIM, BASE_DIM)), fusion_b=zeros((1, BASE_DIM)),
    )


# --------------------------------- main -------------------------------------
if __name__ == "__main__":
    key = jax.random.PRNGKey(0)
    k_t, k_v, k_a, k_p = jax.random.split(key, 4)
    textual = jax.random.normal(k_t, (B, S, TEXT_DIM), jnp.float32)
    visual = jax.random.normal(k_v, (B, S, VIDEO_DIM), jnp.float32)
    acoustic = jax.random.normal(k_a, (B, S, AUDIO_DIM), jnp.float32)

    params = init_params(k_p)

    # One-time setup (hoisted out of the per-call path): pack every parameter
    # leaf + pos-embeddings into a single contiguous VMEM blob.
    blob, layout = pack_params(params)
    forward = make_fusion_forward(layout)

    outs = forward(textual, visual, acoustic, blob)
    jax.block_until_ready(outs)
    t_out, v_out, a_out, f_out = outs

    assert t_out.shape == (B, TEXT_DIM)
    assert v_out.shape == (B, BASE_DIM)
    assert a_out.shape == (B, BASE_DIM)
    assert f_out.shape == (B, BASE_DIM)
    assert bool(jnp.all(jnp.isfinite(f_out)))

    # Cross-check against a pure-JAX reference (full-precision matmuls).
    with jax.default_matmul_precision("float32"):
        refs = reference_forward(textual, visual, acoustic, params)
    for got, want in zip(outs, refs):
        assert bool(jnp.allclose(got, want, rtol=1e-2, atol=1e-3))

    print("KERNEL_OK")
</pallas_src>

<mosaic_0001>
module attributes {stable_mosaic.version = 11 : i64} {
  func.func @fused_forward_kernel(%arg0: memref<2x32xf32, #tpu.memory_space<vmem>>, %arg1: memref<2x8x24xf32, #tpu.memory_space<vmem>>, %arg2: memref<2x8x16xf32, #tpu.memory_space<vmem>>, %arg3: memref<616x128xf32, #tpu.memory_space<vmem>>, %arg4: memref<2x128xf32, #tpu.memory_space<vmem>>) attributes {dimension_semantics = [], scalar_prefetch = 0 : i64, scratch_operands = 0 : i64, tpu.core_type = #tpu.core_type<tc>} {
    %c0 = arith.constant 0 : index
    %c0_0 = arith.constant 0 : index
    %c0_1 = arith.constant 0 : index
    %0 = vector.load %arg1[%c0, %c0_0, %c0_1] : memref<2x8x24xf32, #tpu.memory_space<vmem>>, vector<2x8x24xf32>
    %c0_2 = arith.constant 0 : index
    %c0_3 = arith.constant 0 : index
    %1 = vector.load %arg3[%c0_2, %c0_3] : memref<616x128xf32, #tpu.memory_space<vmem>>, vector<8x24xf32>
    %cst = arith.constant 4.89897966 : f32
    %2 = vector.broadcast %cst : f32 to vector<2x8x24xf32>
    %3 = arith.mulf %0, %2 : vector<2x8x24xf32>
    %4 = vector.shape_cast %1 : vector<8x24xf32> to vector<1x8x24xf32>
    %5 = vector.broadcast %4 : vector<1x8x24xf32> to vector<2x8x24xf32>
    %6 = arith.addf %3, %5 : vector<2x8x24xf32>
    %7 = vector.shape_cast %6 : vector<2x8x24xf32> to vector<16x24xf32>
    %c8 = arith.constant 8 : index
    %c0_4 = arith.constant 0 : index
    %8 = vector.load %arg3[%c8, %c0_4] : memref<616x128xf32, #tpu.memory_space<vmem>>, vector<1x24xf32>
    %c16 = arith.constant 16 : index
    %c0_5 = arith.constant 0 : index
    %9 = vector.load %arg3[%c16, %c0_5] : memref<616x128xf32, #tpu.memory_space<vmem>>, vector<1x24xf32>
    %cst_6 = arith.constant dense<0.000000e+00> : vector<16xf32>
    %10 = vector.multi_reduction <add>, %7, %cst_6 [1] : vector<16x24xf32> to vector<16xf32>
    %11 = vector.shape_cast %10 : vector<16xf32> to vector<16x1xf32>
    %cst_7 = arith.constant 2.400000e+01 : f32
    %12 = vector.broadcast %cst_7 : f32 to vector<16x1xf32>
    %13 = arith.divf %11, %12 : vector<16x1xf32>
    %14 = vector.broadcast %13 : vector<16x1xf32> to vector<16x24xf32>
    %15 = arith.subf %7, %14 : vector<16x24xf32>
    %16 = arith.mulf %15, %15 : vector<16x24xf32>
    %cst_8 = arith.constant dense<0.000000e+00> : vector<16xf32>
    %17 = vector.multi_reduction <add>, %16, %cst_8 [1] : vector<16x24xf32> to vector<16xf32>
    %18 = vector.shape_cast %17 : vector<16xf32> to vector<16x1xf32>
    %cst_9 = arith.constant 2.400000e+01 : f32
    %19 = vector.broadcast %cst_9 : f32 to vector<16x1xf32>
    %20 = arith.divf %18, %19 : vector<16x1xf32>
    %21 = vector.broadcast %13 : vector<16x1xf32> to vector<16x24xf32>
    %22 = arith.subf %7, %21 : vector<16x24xf32>
    %cst_10 = arith.constant 9.99999974E-6 : f32
    %23 = vector.broadcast %cst_10 : f32 to vector<16x1xf32>
    %24 = arith.addf %20, %23 : vector<16x1xf32>
    %25 = math.rsqrt %24 : vector<16x1xf32>
    %26 = vector.broadcast %25 : vector<16x1xf32> to vector<16x24xf32>
    %27 = arith.mulf %22, %26 : vector<16x24xf32>
    %28 = vector.broadcast %8 : vector<1x24xf32> to vector<16x24xf32>
    %29 = arith.mulf %27, %28 : vector<16x24xf32>
    %30 = vector.broadcast %9 : vector<1x24xf32> to vector<16x24xf32>
    %31 = arith.addf %29, %30 : vector<16x24xf32>
    %c24 = arith.constant 24 : index
    %c0_11 = arith.constant 0 : index
    %32 = vector.load %arg3[%c24, %c0_11] : memref<616x128xf32, #tpu.memory_space<vmem>>, vector<24x72xf32>
    %cst_12 = arith.constant dense<0.000000e+00> : vector<16x72xf32>
    %33 = tpu.matmul %31, %32, %cst_12 {dimension_numbers = #tpu.dot_dimension_numbers<[1], [0], [0], [1], [0, 0, 1, 1], [], []>} : vector<16x24xf32>, vector<24x72xf32>, vector<16x72xf32> -> vector<16x72xf32>
    %c48 = arith.constant 48 : index
    %c0_13 = arith.constant 0 : index
    %34 = vector.load %arg3[%c48, %c0_13] : memref<616x128xf32, #tpu.memory_space<vmem>>, vector<1x72xf32>
    %35 = vector.broadcast %34 : vector<1x72xf32> to vector<16x72xf32>
    %36 = arith.addf %33, %35 : vector<16x72xf32>
    %37 = vector.extract_strided_slice %36 {offsets = [0, 0], sizes = [16, 24], strides = [1, 1]} : vector<16x72xf32> to vector<16x24xf32>
    %38 = vector.shape_cast %37 : vector<16x24xf32> to vector<2x8x24xf32>
    %39 = vector.extract_strided_slice %36 {offsets = [0, 24], sizes = [16, 24], strides = [1, 1]} : vector<16x72xf32> to vector<16x24xf32>
    %40 = vector.shape_cast %39 : vector<16x24xf32> to vector<2x8x24xf32>
    %41 = vector.extract_strided_slice %36 {offsets = [0, 48], sizes = [16, 24], strides = [1, 1]} : vector<16x72xf32> to vector<16x24xf32>
    %42 = vector.shape_cast %41 : vector<16x24xf32> to vector<2x8x24xf32>
    %43 = vector.extract_strided_slice %38 {offsets = [0, 0, 0], sizes = [2, 8, 6], strides = [1, 1, 1]} : vector<2x8x24xf32> to vector<2x8x6xf32>
    %44 = vector.extract_strided_slice %40 {offsets = [0, 0, 0], sizes = [2, 8, 6], strides = [1, 1, 1]} : vector<2x8x24xf32> to vector<2x8x6xf32>
    "tpu.trace_start"() <{level = 10 : i32, message = "bqd,bkd->bqk"}> : () -> ()
    %cst_14 = arith.constant dense<0.000000e+00> : vector<2x8x8xf32>
    %45 = tpu.matmul %43, %44, %cst_14 {dimension_numbers = #tpu.dot_dimension_numbers<[2], [2], [1], [1], [0, 0, 0, 1, 1, 1], [0], [0]>} : vector<2x8x6xf32>, vector<2x8x6xf32>, vector<2x8x8xf32> -> vector<2x8x8xf32>
    "tpu.trace_stop"() : () -> ()
    %cst_15 = arith.constant dense<0xFF800000> : vector<2x8xf32>
    %46 = vector.multi_reduction <maximumf>, %45, %cst_15 [2] : vector<2x8x8xf32> to vector<2x8xf32>
    %47 = vector.shape_cast %46 : vector<2x8xf32> to vector<2x8x1xf32>
    %48 = vector.broadcast %47 : vector<2x8x1xf32> to vector<2x8x8xf32>
    %49 = arith.subf %45, %48 : vector<2x8x8xf32>
    %50 = math.exp %49 : vector<2x8x8xf32>
    %cst_16 = arith.constant dense<0.000000e+00> : vector<2x8xf32>
    %51 = vector.multi_reduction <add>, %50, %cst_16 [2] : vector<2x8x8xf32> to vector<2x8xf32>
    %52 = vector.shape_cast %51 : vector<2x8xf32> to vector<2x8x1xf32>
    %53 = vector.broadcast %52 : vector<2x8x1xf32> to vector<2x8x8xf32>
    %54 = arith.divf %50, %53 : vector<2x8x8xf32>
    %55 = vector.extract_strided_slice %42 {offsets = [0, 0, 0], sizes = [2, 8, 6], strides = [1, 1, 1]} : vector<2x8x24xf32> to vector<2x8x6xf32>
    "tpu.trace_start"() <{level = 10 : i32, message = "bqk,bkd->bqd"}> : () -> ()
    %cst_17 = arith.constant dense<0.000000e+00> : vector<2x8x6xf32>
    %56 = tpu.matmul %54, %55, %cst_17 {dimension_numbers = #tpu.dot_dimension_numbers<[2], [1], [1], [2], [0, 0, 0, 1, 1, 2], [0], [0]>} : vector<2x8x8xf32>, vector<2x8x6xf32>, vector<2x8x6xf32> -> vector<2x8x6xf32>
    "tpu.trace_stop"() : () -> ()
    %57 = vector.extract_strided_slice %38 {offsets = [0, 0, 6], sizes = [2, 8, 6], strides = [1, 1, 1]} : vector<2x8x24xf32> to vector<2x8x6xf32>
    %58 = vector.extract_strided_slice %40 {offsets = [0, 0, 6], sizes = [2, 8, 6], strides = [1, 1, 1]} : vector<2x8x24xf32> to vector<2x8x6xf32>
    "tpu.trace_start"() <{level = 10 : i32, message = "bqd,bkd->bqk"}> : () -> ()
    %cst_18 = arith.constant dense<0.000000e+00> : vector<2x8x8xf32>
    %59 = tpu.matmul %57, %58, %cst_18 {dimension_numbers = #tpu.dot_dimension_numbers<[2], [2], [1], [1], [0, 0, 0, 1, 1, 1], [0], [0]>} : vector<2x8x6xf32>, vector<2x8x6xf32>, vector<2x8x8xf32> -> vector<2x8x8xf32>
    "tpu.trace_stop"() : () -> ()
    %cst_19 = arith.constant dense<0xFF800000> : vector<2x8xf32>
    %60 = vector.multi_reduction <maximumf>, %59, %cst_19 [2] : vector<2x8x8xf32> to vector<2x8xf32>
    %61 = vector.shape_cast %60 : vector<2x8xf32> to vector<2x8x1xf32>
    %62 = vector.broadcast %61 : vector<2x8x1xf32> to vector<2x8x8xf32>
    %63 = arith.subf %59, %62 : vector<2x8x8xf32>
    %64 = math.exp %63 : vector<2x8x8xf32>
    %cst_20 = arith.constant dense<0.000000e+00> : vector<2x8xf32>
    %65 = vector.multi_reduction <add>, %64, %cst_20 [2] : vector<2x8x8xf32> to vector<2x8xf32>
    %66 = vector.shape_cast %65 : vector<2x8xf32> to vector<2x8x1xf32>
    %67 = vector.broadcast %66 : vector<2x8x1xf32> to vector<2x8x8xf32>
    %68 = arith.divf %64, %67 : vector<2x8x8xf32>
    %69 = vector.extract_strided_slice %42 {offsets = [0, 0, 6], sizes = [2, 8, 6], strides = [1, 1, 1]} : vector<2x8x24xf32> to vector<2x8x6xf32>
    "tpu.trace_start"() <{level = 10 : i32, message = "bqk,bkd->bqd"}> : () -> ()
    %cst_21 = arith.constant dense<0.000000e+00> : vector<2x8x6xf32>
    %70 = tpu.matmul %68, %69, %cst_21 {dimension_numbers = #tpu.dot_dimension_numbers<[2], [1], [1], [2], [0, 0, 0, 1, 1, 2], [0], [0]>} : vector<2x8x8xf32>, vector<2x8x6xf32>, vector<2x8x6xf32> -> vector<2x8x6xf32>
    "tpu.trace_stop"() : () -> ()
    %71 = vector.extract_strided_slice %38 {offsets = [0, 0, 12], sizes = [2, 8, 6], strides = [1, 1, 1]} : vector<2x8x24xf32> to vector<2x8x6xf32>
    %72 = vector.extract_strided_slice %40 {offsets = [0, 0, 12], sizes = [2, 8, 6], strides = [1, 1, 1]} : vector<2x8x24xf32> to vector<2x8x6xf32>
    "tpu.trace_start"() <{level = 10 : i32, message = "bqd,bkd->bqk"}> : () -> ()
    %cst_22 = arith.constant dense<0.000000e+00> : vector<2x8x8xf32>
    %73 = tpu.matmul %71, %72, %cst_22 {dimension_numbers = #tpu.dot_dimension_numbers<[2], [2], [1], [1], [0, 0, 0, 1, 1, 1], [0], [0]>} : vector<2x8x6xf32>, vector<2x8x6xf32>, vector<2x8x8xf32> -> vector<2x8x8xf32>
    "tpu.trace_stop"() : () -> ()
    %cst_23 = arith.constant dense<0xFF800000> : vector<2x8xf32>
    %74 = vector.multi_reduction <maximumf>, %73, %cst_23 [2] : vector<2x8x8xf32> to vector<2x8xf32>
    %75 = vector.shape_cast %74 : vector<2x8xf32> to vector<2x8x1xf32>
    %76 = vector.broadcast %75 : vector<2x8x1xf32> to vector<2x8x8xf32>
    %77 = arith.subf %73, %76 : vector<2x8x8xf32>
    %78 = math.exp %77 : vector<2x8x8xf32>
    %cst_24 = arith.constant dense<0.000000e+00> : vector<2x8xf32>
    %79 = vector.multi_reduction <add>, %78, %cst_24 [2] : vector<2x8x8xf32> to vector<2x8xf32>
    %80 = vector.shape_cast %79 : vector<2x8xf32> to vector<2x8x1xf32>
    %81 = vector.broadcast %80 : vector<2x8x1xf32> to vector<2x8x8xf32>
    %82 = arith.divf %78, %81 : vector<2x8x8xf32>
    %83 = vector.extract_strided_slice %42 {offsets = [0, 0, 12], sizes = [2, 8, 6], strides = [1, 1, 1]} : vector<2x8x24xf32> to vector<2x8x6xf32>
    "tpu.trace_start"() <{level = 10 : i32, message = "bqk,bkd->bqd"}> : () -> ()
    %cst_25 = arith.constant dense<0.000000e+00> : vector<2x8x6xf32>
    %84 = tpu.matmul %82, %83, %cst_25 {dimension_numbers = #tpu.dot_dimension_numbers<[2], [1], [1], [2], [0, 0, 0, 1, 1, 2], [0], [0]>} : vector<2x8x8xf32>, vector<2x8x6xf32>, vector<2x8x6xf32> -> vector<2x8x6xf32>
    "tpu.trace_stop"() : () -> ()
    %85 = vector.extract_strided_slice %38 {offsets = [0, 0, 18], sizes = [2, 8, 6], strides = [1, 1, 1]} : vector<2x8x24xf32> to vector<2x8x6xf32>
    %86 = vector.extract_strided_slice %40 {offsets = [0, 0, 18], sizes = [2, 8, 6], strides = [1, 1, 1]} : vector<2x8x24xf32> to vector<2x8x6xf32>
    "tpu.trace_start"() <{level = 10 : i32, message = "bqd,bkd->bqk"}> : () -> ()
    %cst_26 = arith.constant dense<0.000000e+00> : vector<2x8x8xf32>
    %87 = tpu.matmul %85, %86, %cst_26 {dimension_numbers = #tpu.dot_dimension_numbers<[2], [2], [1], [1], [0, 0, 0, 1, 1, 1], [0], [0]>} : vector<2x8x6xf32>, vector<2x8x6xf32>, vector<2x8x8xf32> -> vector<2x8x8xf32>
    "tpu.trace_stop"() : () -> ()
    %cst_27 = arith.constant dense<0xFF800000> : vector<2x8xf32>
    %88 = vector.multi_reduction <maximumf>, %87, %cst_27 [2] : vector<2x8x8xf32> to vector<2x8xf32>
    %89 = vector.shape_cast %88 : vector<2x8xf32> to vector<2x8x1xf32>
    %90 = vector.broadcast %89 : vector<2x8x1xf32> to vector<2x8x8xf32>
    %91 = arith.subf %87, %90 : vector<2x8x8xf32>
    %92 = math.exp %91 : vector<2x8x8xf32>
    %cst_28 = arith.constant dense<0.000000e+00> : vector<2x8xf32>
    %93 = vector.multi_reduction <add>, %92, %cst_28 [2] : vector<2x8x8xf32> to vector<2x8xf32>
    %94 = vector.shape_cast %93 : vector<2x8xf32> to vector<2x8x1xf32>
    %95 = vector.broadcast %94 : vector<2x8x1xf32> to vector<2x8x8xf32>
    %96 = arith.divf %92, %95 : vector<2x8x8xf32>
    %97 = vector.extract_strided_slice %42 {offsets = [0, 0, 18], sizes = [2, 8, 6], strides = [1, 1, 1]} : vector<2x8x24xf32> to vector<2x8x6xf32>
    "tpu.trace_start"() <{level = 10 : i32, message = "bqk,bkd->bqd"}> : () -> ()
    %cst_29 = arith.constant dense<0.000000e+00> : vector<2x8x6xf32>
    %98 = tpu.matmul %96, %97, %cst_29 {dimension_numbers = #tpu.dot_dimension_numbers<[2], [1], [1], [2], [0, 0, 0, 1, 1, 2], [0], [0]>} : vector<2x8x8xf32>, vector<2x8x6xf32>, vector<2x8x6xf32> -> vector<2x8x6xf32>
    "tpu.trace_stop"() : () -> ()
    %99 = tpu.concatenate %56, %70, %84, %98 in 2 : vector<2x8x6xf32>, vector<2x8x6xf32>, vector<2x8x6xf32>, vector<2x8x6xf32> -> vector<2x8x24xf32>
    %100 = vector.shape_cast %99 : vector<2x8x24xf32> to vector<16x24xf32>
    %c56 = arith.constant 56 : index
    %c0_30 = arith.constant 0 : index
    %101 = vector.load %arg3[%c56, %c0_30] : memref<616x128xf32, #tpu.memory_space<vmem>>, vector<24x24xf32>
    %cst_31 = arith.constant dense<0.000000e+00> : vector<16x24xf32>
    %102 = tpu.matmul %100, %101, %cst_31 {dimension_numbers = #tpu.dot_dimension_numbers<[1], [0], [0], [1], [0, 0, 1, 1], [], []>} : vector<16x24xf32>, vector<24x24xf32>, vector<16x24xf32> -> vector<16x24xf32>
    %103 = arith.addf %7, %102 : vector<16x24xf32>
    %c80 = arith.constant 80 : index
    %c0_32 = arith.constant 0 : index
    %104 = vector.load %arg3[%c80, %c0_32] : memref<616x128xf32, #tpu.memory_space<vmem>>, vector<1x24xf32>
    %105 = vector.broadcast %104 : vector<1x24xf32> to vector<16x24xf32>
    %106 = arith.addf %103, %105 : vector<16x24xf32>
    %c88 = arith.constant 88 : index
    %c0_33 = arith.constant 0 : index
    %107 = vector.load %arg3[%c88, %c0_33] : memref<616x128xf32, #tpu.memory_space<vmem>>, vector<1x24xf32>
    %c96 = arith.constant 96 : index
    %c0_34 = arith.constant 0 : index
    %108 = vector.load %arg3[%c96, %c0_34] : memref<616x128xf32, #tpu.memory_space<vmem>>, vector<1x24xf32>
    %cst_35 = arith.constant dense<0.000000e+00> : vector<16xf32>
    %109 = vector.multi_reduction <add>, %106, %cst_35 [1] : vector<16x24xf32> to vector<16xf32>
    %110 = vector.shape_cast %109 : vector<16xf32> to vector<16x1xf32>
    %cst_36 = arith.constant 2.400000e+01 : f32
    %111 = vector.broadcast %cst_36 : f32 to vector<16x1xf32>
    %112 = arith.divf %110, %111 : vector<16x1xf32>
    %113 = vector.broadcast %112 : vector<16x1xf32> to vector<16x24xf32>
    %114 = arith.subf %106, %113 : vector<16x24xf32>
    %115 = arith.mulf %114, %114 : vector<16x24xf32>
    %cst_37 = arith.constant dense<0.000000e+00> : vector<16xf32>
    %116 = vector.multi_reduction <add>, %115, %cst_37 [1] : vector<16x24xf32> to vector<16xf32>
    %117 = vector.shape_cast %116 : vector<16xf32> to vector<16x1xf32>
    %cst_38 = arith.constant 2.400000e+01 : f32
    %118 = vector.broadcast %cst_38 : f32 to vector<16x1xf32>
    %119 = arith.divf %117, %118 : vector<16x1xf32>
    %120 = vector.broadcast %112 : vector<16x1xf32> to vector<16x24xf32>
    %121 = arith.subf %106, %120 : vector<16x24xf32>
    %cst_39 = arith.constant 9.99999974E-6 : f32
    %122 = vector.broadcast %cst_39 : f32 to vector<16x1xf32>
    %123 = arith.addf %119, %122 : vector<16x1xf32>
    %124 = math.rsqrt %123 : vector<16x1xf32>
    %125 = vector.broadcast %124 : vector<16x1xf32> to vector<16x24xf32>
    %126 = arith.mulf %121, %125 : vector<16x24xf32>
    %127 = vector.broadcast %107 : vector<1x24xf32> to vector<16x24xf32>
    %128 = arith.mulf %126, %127 : vector<16x24xf32>
    %129 = vector.broadcast %108 : vector<1x24xf32> to vector<16x24xf32>
    %130 = arith.addf %128, %129 : vector<16x24xf32>
    %c104 = arith.constant 104 : index
    %c0_40 = arith.constant 0 : index
    %131 = vector.load %arg3[%c104, %c0_40] : memref<616x128xf32, #tpu.memory_space<vmem>>, vector<24x96xf32>
    %cst_41 = arith.constant dense<0.000000e+00> : vector<16x96xf32>
    %132 = tpu.matmul %130, %131, %cst_41 {dimension_numbers = #tpu.dot_dimension_numbers<[1], [0], [0], [1], [0, 0, 1, 1], [], []>} : vector<16x24xf32>, vector<24x96xf32>, vector<16x96xf32> -> vector<16x96xf32>
    %c128 = arith.constant 128 : index
    %c0_42 = arith.constant 0 : index
    %133 = vector.load %arg3[%c128, %c0_42] : memref<616x128xf32, #tpu.memory_space<vmem>>, vector<1x96xf32>
    %134 = vector.broadcast %133 : vector<1x96xf32> to vector<16x96xf32>
    %135 = arith.addf %132, %134 : vector<16x96xf32>
    %cst_43 = arith.constant 0.000000e+00 : f32
    %136 = vector.broadcast %cst_43 : f32 to vector<16x96xf32>
    %137 = arith.maximumf %135, %136 : vector<16x96xf32>
    %c136 = arith.constant 136 : index
    %c0_44 = arith.constant 0 : index
    %138 = vector.load %arg3[%c136, %c0_44] : memref<616x128xf32, #tpu.memory_space<vmem>>, vector<96x24xf32>
    %cst_45 = arith.constant dense<0.000000e+00> : vector<16x24xf32>
    %139 = tpu.matmul %137, %138, %cst_45 {dimension_numbers = #tpu.dot_dimension_numbers<[1], [0], [0], [1], [0, 0, 1, 1], [], []>} : vector<16x96xf32>, vector<96x24xf32>, vector<16x24xf32> -> vector<16x24xf32>
    %140 = arith.addf %106, %139 : vector<16x24xf32>
    %c232 = arith.constant 232 : index
    %c0_46 = arith.constant 0 : index
    %141 = vector.load %arg3[%c232, %c0_46] : memref<616x128xf32, #tpu.memory_space<vmem>>, vector<1x24xf32>
    %142 = vector.broadcast %141 : vector<1x24xf32> to vector<16x24xf32>
    %143 = arith.addf %140, %142 : vector<16x24xf32>
    %c240 = arith.constant 240 : index
    %c0_47 = arith.constant 0 : index
    %144 = vector.load %arg3[%c240, %c0_47] : memref<616x128xf32, #tpu.memory_space<vmem>>, vector<1x24xf32>
    %c248 = arith.constant 248 : index
    %c0_48 = arith.constant 0 : index
    %145 = vector.load %arg3[%c248, %c0_48] : memref<616x128xf32, #tpu.memory_space<vmem>>, vector<1x24xf32>
    %cst_49 = arith.constant dense<0.000000e+00> : vector<16xf32>
    %146 = vector.multi_reduction <add>, %143, %cst_49 [1] : vector<16x24xf32> to vector<16xf32>
    %147 = vector.shape_cast %146 : vector<16xf32> to vector<16x1xf32>
    %cst_50 = arith.constant 2.400000e+01 : f32
    %148 = vector.broadcast %cst_50 : f32 to vector<16x1xf32>
    %149 = arith.divf %147, %148 : vector<16x1xf32>
    %150 = vector.broadcast %149 : vector<16x1xf32> to vector<16x24xf32>
    %151 = arith.subf %143, %150 : vector<16x24xf32>
    %152 = arith.mulf %151, %151 : vector<16x24xf32>
    %cst_51 = arith.constant dense<0.000000e+00> : vector<16xf32>
    %153 = vector.multi_reduction <add>, %152, %cst_51 [1] : vector<16x24xf32> to vector<16xf32>
    %154 = vector.shape_cast %153 : vector<16xf32> to vector<16x1xf32>
    %cst_52 = arith.constant 2.400000e+01 : f32
    %155 = vector.broadcast %cst_52 : f32 to vector<16x1xf32>
    %156 = arith.divf %154, %155 : vector<16x1xf32>
    %157 = vector.broadcast %149 : vector<16x1xf32> to vector<16x24xf32>
    %158 = arith.subf %143, %157 : vector<16x24xf32>
    %cst_53 = arith.constant 9.99999974E-6 : f32
    %159 = vector.broadcast %cst_53 : f32 to vector<16x1xf32>
    %160 = arith.addf %156, %159 : vector<16x1xf32>
    %161 = math.rsqrt %160 : vector<16x1xf32>
    %162 = vector.broadcast %161 : vector<16x1xf32> to vector<16x24xf32>
    %163 = arith.mulf %158, %162 : vector<16x24xf32>
    %164 = vector.broadcast %144 : vector<1x24xf32> to vector<16x24xf32>
    %165 = arith.mulf %163, %164 : vector<16x24xf32>
    %166 = vector.broadcast %145 : vector<1x24xf32> to vector<16x24xf32>
    %167 = arith.addf %165, %166 : vector<16x24xf32>
    %168 = vector.shape_cast %167 : vector<16x24xf32> to vector<2x8x24xf32>
    %cst_54 = arith.constant dense<0.000000e+00> : vector<2x24xf32>
    %169 = vector.multi_reduction <add>, %168, %cst_54 [1] : vector<2x8x24xf32> to vector<2x24xf32>
    %cst_55 = arith.constant 8.000000e+00 : f32
    %170 = vector.broadcast %cst_55 : f32 to vector<2x24xf32>
    %171 = arith.divf %169, %170 : vector<2x24xf32>
    %c456 = arith.constant 456 : index
    %c0_56 = arith.constant 0 : index
    %172 = vector.load %arg3[%c456, %c0_56] : memref<616x128xf32, #tpu.memory_space<vmem>>, vector<24x32xf32>
    %cst_57 = arith.constant dense<0.000000e+00> : vector<2x32xf32>
    %173 = tpu.matmul %171, %172, %cst_57 {dimension_numbers = #tpu.dot_dimension_numbers<[1], [0], [0], [1], [0, 0, 1, 1], [], []>} : vector<2x24xf32>, vector<24x32xf32>, vector<2x32xf32> -> vector<2x32xf32>
    %c480 = arith.constant 480 : index
    %c0_58 = arith.constant 0 : index
    %174 = vector.load %arg3[%c480, %c0_58] : memref<616x128xf32, #tpu.memory_space<vmem>>, vector<1x32xf32>
    %175 = vector.broadcast %174 : vector<1x32xf32> to vector<2x32xf32>
    %176 = arith.addf %173, %175 : vector<2x32xf32>
    %c0_59 = arith.constant 0 : index
    %c0_60 = arith.constant 0 : index
    %c0_61 = arith.constant 0 : index
    %177 = vector.load %arg2[%c0_59, %c0_60, %c0_61] : memref<2x8x16xf32, #tpu.memory_space<vmem>>, vector<2x8x16xf32>
    %c256 = arith.constant 256 : index
    %c0_62 = arith.constant 0 : index
    %178 = vector.load %arg3[%c256, %c0_62] : memref<616x128xf32, #tpu.memory_space<vmem>>, vector<8x16xf32>
    %cst_63 = arith.constant 4.000000e+00 : f32
    %179 = vector.broadcast %cst_63 : f32 to vector<2x8x16xf32>
    %180 = arith.mulf %177, %179 : vector<2x8x16xf32>
    %181 = vector.shape_cast %178 : vector<8x16xf32> to vector<1x8x16xf32>
    %182 = vector.broadcast %181 : vector<1x8x16xf32> to vector<2x8x16xf32>
    %183 = arith.addf %180, %182 : vector<2x8x16xf32>
    %184 = vector.shape_cast %183 : vector<2x8x16xf32> to vector<16x16xf32>
    %c264 = arith.constant 264 : index
    %c0_64 = arith.constant 0 : index
    %185 = vector.load %arg3[%c264, %c0_64] : memref<616x128xf32, #tpu.memory_space<vmem>>, vector<1x16xf32>
    %c272 = arith.constant 272 : index
    %c0_65 = arith.constant 0 : index
    %186 = vector.load %arg3[%c272, %c0_65] : memref<616x128xf32, #tpu.memory_space<vmem>>, vector<1x16xf32>
    %cst_66 = arith.constant dense<0.000000e+00> : vector<16xf32>
    %187 = vector.multi_reduction <add>, %184, %cst_66 [1] : vector<16x16xf32> to vector<16xf32>
    %188 = vector.shape_cast %187 : vector<16xf32> to vector<16x1xf32>
    %cst_67 = arith.constant 1.600000e+01 : f32
    %189 = vector.broadcast %cst_67 : f32 to vector<16x1xf32>
    %190 = arith.divf %188, %189 : vector<16x1xf32>
    %191 = vector.broadcast %190 : vector<16x1xf32> to vector<16x16xf32>
    %192 = arith.subf %184, %191 : vector<16x16xf32>
    %193 = arith.mulf %192, %192 : vector<16x16xf32>
    %cst_68 = arith.constant dense<0.000000e+00> : vector<16xf32>
    %194 = vector.multi_reduction <add>, %193, %cst_68 [1] : vector<16x16xf32> to vector<16xf32>
    %195 = vector.shape_cast %194 : vector<16xf32> to vector<16x1xf32>
    %cst_69 = arith.constant 1.600000e+01 : f32
    %196 = vector.broadcast %cst_69 : f32 to vector<16x1xf32>
    %197 = arith.divf %195, %196 : vector<16x1xf32>
    %198 = vector.broadcast %190 : vector<16x1xf32> to vector<16x16xf32>
    %199 = arith.subf %184, %198 : vector<16x16xf32>
    %cst_70 = arith.constant 9.99999974E-6 : f32
    %200 = vector.broadcast %cst_70 : f32 to vector<16x1xf32>
    %201 = arith.addf %197, %200 : vector<16x1xf32>
    %202 = math.rsqrt %201 : vector<16x1xf32>
    %203 = vector.broadcast %202 : vector<16x1xf32> to vector<16x16xf32>
    %204 = arith.mulf %199, %203 : vector<16x16xf32>
    %205 = vector.broadcast %185 : vector<1x16xf32> to vector<16x16xf32>
    %206 = arith.mulf %204, %205 : vector<16x16xf32>
    %207 = vector.broadcast %186 : vector<1x16xf32> to vector<16x16xf32>
    %208 = arith.addf %206, %207 : vector<16x16xf32>
    %c280 = arith.constant 280 : index
    %c0_71 = arith.constant 0 : index
    %209 = vector.load %arg3[%c280, %c0_71] : memref<616x128xf32, #tpu.memory_space<vmem>>, vector<16x48xf32>
    %cst_72 = arith.constant dense<0.000000e+00> : vector<16x48xf32>
    %210 = tpu.matmul %208, %209, %cst_72 {dimension_numbers = #tpu.dot_dimension_numbers<[1], [0], [0], [1], [0, 0, 1, 1], [], []>} : vector<16x16xf32>, vector<16x48xf32>, vector<16x48xf32> -> vector<16x48xf32>
    %c296 = arith.constant 296 : index
    %c0_73 = arith.constant 0 : index
    %211 = vector.load %arg3[%c296, %c0_73] : memref<616x128xf32, #tpu.memory_space<vmem>>, vector<1x48xf32>
    %212 = vector.broadcast %211 : vector<1x48xf32> to vector<16x48xf32>
    %213 = arith.addf %210, %212 : vector<16x48xf32>
    %214 = vector.extract_strided_slice %213 {offsets = [0, 0], sizes = [16, 16], strides = [1, 1]} : vector<16x48xf32> to vector<16x16xf32>
    %215 = vector.shape_cast %214 : vector<16x16xf32> to vector<2x8x16xf32>
    %216 = vector.extract_strided_slice %213 {offsets = [0, 16], sizes = [16, 16], strides = [1, 1]} : vector<16x48xf32> to vector<16x16xf32>
    %217 = vector.shape_cast %216 : vector<16x16xf32> to vector<2x8x16xf32>
    %218 = vector.extract_strided_slice %213 {offsets = [0, 32], sizes = [16, 16], strides = [1, 1]} : vector<16x48xf32> to vector<16x16xf32>
    %219 = vector.shape_cast %218 : vector<16x16xf32> to vector<2x8x16xf32>
    %220 = vector.extract_strided_slice %215 {offsets = [0, 0, 0], sizes = [2, 8, 4], strides = [1, 1, 1]} : vector<2x8x16xf32> to vector<2x8x4xf32>
    %221 = vector.extract_strided_slice %217 {offsets = [0, 0, 0], sizes = [2, 8, 4], strides = [1, 1, 1]} : vector<2x8x16xf32> to vector<2x8x4xf32>
    "tpu.trace_start"() <{level = 10 : i32, message = "bqd,bkd->bqk"}> : () -> ()
    %cst_74 = arith.constant dense<0.000000e+00> : vector<2x8x8xf32>
    %222 = tpu.matmul %220, %221, %cst_74 {dimension_numbers = #tpu.dot_dimension_numbers<[2], [2], [1], [1], [0, 0, 0, 1, 1, 1], [0], [0]>} : vector<2x8x4xf32>, vector<2x8x4xf32>, vector<2x8x8xf32> -> vector<2x8x8xf32>
    "tpu.trace_stop"() : () -> ()
    %cst_75 = arith.constant dense<0xFF800000> : vector<2x8xf32>
    %223 = vector.multi_reduction <maximumf>, %222, %cst_75 [2] : vector<2x8x8xf32> to vector<2x8xf32>
    %224 = vector.shape_cast %223 : vector<2x8xf32> to vector<2x8x1xf32>
    %225 = vector.broadcast %224 : vector<2x8x1xf32> to vector<2x8x8xf32>
    %226 = arith.subf %222, %225 : vector<2x8x8xf32>
    %227 = math.exp %226 : vector<2x8x8xf32>
    %cst_76 = arith.constant dense<0.000000e+00> : vector<2x8xf32>
    %228 = vector.multi_reduction <add>, %227, %cst_76 [2] : vector<2x8x8xf32> to vector<2x8xf32>
    %229 = vector.shape_cast %228 : vector<2x8xf32> to vector<2x8x1xf32>
    %230 = vector.broadcast %229 : vector<2x8x1xf32> to vector<2x8x8xf32>
    %231 = arith.divf %227, %230 : vector<2x8x8xf32>
    %232 = vector.extract_strided_slice %219 {offsets = [0, 0, 0], sizes = [2, 8, 4], strides = [1, 1, 1]} : vector<2x8x16xf32> to vector<2x8x4xf32>
    "tpu.trace_start"() <{level = 10 : i32, message = "bqk,bkd->bqd"}> : () -> ()
    %cst_77 = arith.constant dense<0.000000e+00> : vector<2x8x4xf32>
    %233 = tpu.matmul %231, %232, %cst_77 {dimension_numbers = #tpu.dot_dimension_numbers<[2], [1], [1], [2], [0, 0, 0, 1, 1, 2], [0], [0]>} : vector<2x8x8xf32>, vector<2x8x4xf32>, vector<2x8x4xf32> -> vector<2x8x4xf32>
    "tpu.trace_stop"() : () -> ()
    %234 = vector.extract_strided_slice %215 {offsets = [0, 0, 4], sizes = [2, 8, 4], strides = [1, 1, 1]} : vector<2x8x16xf32> to vector<2x8x4xf32>
    %235 = vector.extract_strided_slice %217 {offsets = [0, 0, 4], sizes = [2, 8, 4], strides = [1, 1, 1]} : vector<2x8x16xf32> to vector<2x8x4xf32>
    "tpu.trace_start"() <{level = 10 : i32, message = "bqd,bkd->bqk"}> : () -> ()
    %cst_78 = arith.constant dense<0.000000e+00> : vector<2x8x8xf32>
    %236 = tpu.matmul %234, %235, %cst_78 {dimension_numbers = #tpu.dot_dimension_numbers<[2], [2], [1], [1], [0, 0, 0, 1, 1, 1], [0], [0]>} : vector<2x8x4xf32>, vector<2x8x4xf32>, vector<2x8x8xf32> -> vector<2x8x8xf32>
    "tpu.trace_stop"() : () -> ()
    %cst_79 = arith.constant dense<0xFF800000> : vector<2x8xf32>
    %237 = vector.multi_reduction <maximumf>, %236, %cst_79 [2] : vector<2x8x8xf32> to vector<2x8xf32>
    %238 = vector.shape_cast %237 : vector<2x8xf32> to vector<2x8x1xf32>
    %239 = vector.broadcast %238 : vector<2x8x1xf32> to vector<2x8x8xf32>
    %240 = arith.subf %236, %239 : vector<2x8x8xf32>
    %241 = math.exp %240 : vector<2x8x8xf32>
    %cst_80 = arith.constant dense<0.000000e+00> : vector<2x8xf32>
    %242 = vector.multi_reduction <add>, %241, %cst_80 [2] : vector<2x8x8xf32> to vector<2x8xf32>
    %243 = vector.shape_cast %242 : vector<2x8xf32> to vector<2x8x1xf32>
    %244 = vector.broadcast %243 : vector<2x8x1xf32> to vector<2x8x8xf32>
    %245 = arith.divf %241, %244 : vector<2x8x8xf32>
    %246 = vector.extract_strided_slice %219 {offsets = [0, 0, 4], sizes = [2, 8, 4], strides = [1, 1, 1]} : vector<2x8x16xf32> to vector<2x8x4xf32>
    "tpu.trace_start"() <{level = 10 : i32, message = "bqk,bkd->bqd"}> : () -> ()
    %cst_81 = arith.constant dense<0.000000e+00> : vector<2x8x4xf32>
    %247 = tpu.matmul %245, %246, %cst_81 {dimension_numbers = #tpu.dot_dimension_numbers<[2], [1], [1], [2], [0, 0, 0, 1, 1, 2], [0], [0]>} : vector<2x8x8xf32>, vector<2x8x4xf32>, vector<2x8x4xf32> -> vector<2x8x4xf32>
    "tpu.trace_stop"() : () -> ()
    %248 = vector.extract_strided_slice %215 {offsets = [0, 0, 8], sizes = [2, 8, 4], strides = [1, 1, 1]} : vector<2x8x16xf32> to vector<2x8x4xf32>
    %249 = vector.extract_strided_slice %217 {offsets = [0, 0, 8], sizes = [2, 8, 4], strides = [1, 1, 1]} : vector<2x8x16xf32> to vector<2x8x4xf32>
    "tpu.trace_start"() <{level = 10 : i32, message = "bqd,bkd->bqk"}> : () -> ()
    %cst_82 = arith.constant dense<0.000000e+00> : vector<2x8x8xf32>
    %250 = tpu.matmul %248, %249, %cst_82 {dimension_numbers = #tpu.dot_dimension_numbers<[2], [2], [1], [1], [0, 0, 0, 1, 1, 1], [0], [0]>} : vector<2x8x4xf32>, vector<2x8x4xf32>, vector<2x8x8xf32> -> vector<2x8x8xf32>
    "tpu.trace_stop"() : () -> ()
    %cst_83 = arith.constant dense<0xFF800000> : vector<2x8xf32>
    %251 = vector.multi_reduction <maximumf>, %250, %cst_83 [2] : vector<2x8x8xf32> to vector<2x8xf32>
    %252 = vector.shape_cast %251 : vector<2x8xf32> to vector<2x8x1xf32>
    %253 = vector.broadcast %252 : vector<2x8x1xf32> to vector<2x8x8xf32>
    %254 = arith.subf %250, %253 : vector<2x8x8xf32>
    %255 = math.exp %254 : vector<2x8x8xf32>
    %cst_84 = arith.constant dense<0.000000e+00> : vector<2x8xf32>
    %256 = vector.multi_reduction <add>, %255, %cst_84 [2] : vector<2x8x8xf32> to vector<2x8xf32>
    %257 = vector.shape_cast %256 : vector<2x8xf32> to vector<2x8x1xf32>
    %258 = vector.broadcast %257 : vector<2x8x1xf32> to vector<2x8x8xf32>
    %259 = arith.divf %255, %258 : vector<2x8x8xf32>
    %260 = vector.extract_strided_slice %219 {offsets = [0, 0, 8], sizes = [2, 8, 4], strides = [1, 1, 1]} : vector<2x8x16xf32> to vector<2x8x4xf32>
    "tpu.trace_start"() <{level = 10 : i32, message = "bqk,bkd->bqd"}> : () -> ()
    %cst_85 = arith.constant dense<0.000000e+00> : vector<2x8x4xf32>
    %261 = tpu.matmul %259, %260, %cst_85 {dimension_numbers = #tpu.dot_dimension_numbers<[2], [1], [1], [2], [0, 0, 0, 1, 1, 2], [0], [0]>} : vector<2x8x8xf32>, vector<2x8x4xf32>, vector<2x8x4xf32> -> vector<2x8x4xf32>
    "tpu.trace_stop"() : () -> ()
    %262 = vector.extract_strided_slice %215 {offsets = [0, 0, 12], sizes = [2, 8, 4], strides = [1, 1, 1]} : vector<2x8x16xf32> to vector<2x8x4xf32>
    %263 = vector.extract_strided_slice %217 {offsets = [0, 0, 12], sizes = [2, 8, 4], strides = [1, 1, 1]} : vector<2x8x16xf32> to vector<2x8x4xf32>
    "tpu.trace_start"() <{level = 10 : i32, message = "bqd,bkd->bqk"}> : () -> ()
    %cst_86 = arith.constant dense<0.000000e+00> : vector<2x8x8xf32>
    %264 = tpu.matmul %262, %263, %cst_86 {dimension_numbers = #tpu.dot_dimension_numbers<[2], [2], [1], [1], [0, 0, 0, 1, 1, 1], [0], [0]>} : vector<2x8x4xf32>, vector<2x8x4xf32>, vector<2x8x8xf32> -> vector<2x8x8xf32>
    "tpu.trace_stop"() : () -> ()
    %cst_87 = arith.constant dense<0xFF800000> : vector<2x8xf32>
    %265 = vector.multi_reduction <maximumf>, %264, %cst_87 [2] : vector<2x8x8xf32> to vector<2x8xf32>
    %266 = vector.shape_cast %265 : vector<2x8xf32> to vector<2x8x1xf32>
    %267 = vector.broadcast %266 : vector<2x8x1xf32> to vector<2x8x8xf32>
    %268 = arith.subf %264, %267 : vector<2x8x8xf32>
    %269 = math.exp %268 : vector<2x8x8xf32>
    %cst_88 = arith.constant dense<0.000000e+00> : vector<2x8xf32>
    %270 = vector.multi_reduction <add>, %269, %cst_88 [2] : vector<2x8x8xf32> to vector<2x8xf32>
    %271 = vector.shape_cast %270 : vector<2x8xf32> to vector<2x8x1xf32>
    %272 = vector.broadcast %271 : vector<2x8x1xf32> to vector<2x8x8xf32>
    %273 = arith.divf %269, %272 : vector<2x8x8xf32>
    %274 = vector.extract_strided_slice %219 {offsets = [0, 0, 12], sizes = [2, 8, 4], strides = [1, 1, 1]} : vector<2x8x16xf32> to vector<2x8x4xf32>
    "tpu.trace_start"() <{level = 10 : i32, message = "bqk,bkd->bqd"}> : () -> ()
    %cst_89 = arith.constant dense<0.000000e+00> : vector<2x8x4xf32>
    %275 = tpu.matmul %273, %274, %cst_89 {dimension_numbers = #tpu.dot_dimension_numbers<[2], [1], [1], [2], [0, 0, 0, 1, 1, 2], [0], [0]>} : vector<2x8x8xf32>, vector<2x8x4xf32>, vector<2x8x4xf32> -> vector<2x8x4xf32>
    "tpu.trace_stop"() : () -> ()
    %276 = tpu.concatenate %233, %247, %261, %275 in 2 : vector<2x8x4xf32>, vector<2x8x4xf32>, vector<2x8x4xf32>, vector<2x8x4xf32> -> vector<2x8x16xf32>
    %277 = vector.shape_cast %276 : vector<2x8x16xf32> to vector<16x16xf32>
    %c304 = arith.constant 304 : index
    %c0_90 = arith.constant 0 : index
    %278 = vector.load %arg3[%c304, %c0_90] : memref<616x128xf32, #tpu.memory_space<vmem>>, vector<16x16xf32>
    %cst_91 = arith.constant dense<0.000000e+00> : vector<16x16xf32>
    %279 = tpu.matmul %277, %278, %cst_91 {dimension_numbers = #tpu.dot_dimension_numbers<[1], [0], [0], [1], [0, 0, 1, 1], [], []>} : vector<16x16xf32>, vector<16x16xf32>, vector<16x16xf32> -> vector<16x16xf32>
    %280 = arith.addf %184, %279 : vector<16x16xf32>
    %c320 = arith.constant 320 : index
    %c0_92 = arith.constant 0 : index
    %281 = vector.load %arg3[%c320, %c0_92] : memref<616x128xf32, #tpu.memory_space<vmem>>, vector<1x16xf32>
    %282 = vector.broadcast %281 : vector<1x16xf32> to vector<16x16xf32>
    %283 = arith.addf %280, %282 : vector<16x16xf32>
    %c328 = arith.constant 328 : index
    %c0_93 = arith.constant 0 : index
    %284 = vector.load %arg3[%c328, %c0_93] : memref<616x128xf32, #tpu.memory_space<vmem>>, vector<1x16xf32>
    %c336 = arith.constant 336 : index
    %c0_94 = arith.constant 0 : index
    %285 = vector.load %arg3[%c336, %c0_94] : memref<616x128xf32, #tpu.memory_space<vmem>>, vector<1x16xf32>
    %cst_95 = arith.constant dense<0.000000e+00> : vector<16xf32>
    %286 = vector.multi_reduction <add>, %283, %cst_95 [1] : vector<16x16xf32> to vector<16xf32>
    %287 = vector.shape_cast %286 : vector<16xf32> to vector<16x1xf32>
    %cst_96 = arith.constant 1.600000e+01 : f32
    %288 = vector.broadcast %cst_96 : f32 to vector<16x1xf32>
    %289 = arith.divf %287, %288 : vector<16x1xf32>
    %290 = vector.broadcast %289 : vector<16x1xf32> to vector<16x16xf32>
    %291 = arith.subf %283, %290 : vector<16x16xf32>
    %292 = arith.mulf %291, %291 : vector<16x16xf32>
    %cst_97 = arith.constant dense<0.000000e+00> : vector<16xf32>
    %293 = vector.multi_reduction <add>, %292, %cst_97 [1] : vector<16x16xf32> to vector<16xf32>
    %294 = vector.shape_cast %293 : vector<16xf32> to vector<16x1xf32>
    %cst_98 = arith.constant 1.600000e+01 : f32
    %295 = vector.broadcast %cst_98 : f32 to vector<16x1xf32>
    %296 = arith.divf %294, %295 : vector<16x1xf32>
    %297 = vector.broadcast %289 : vector<16x1xf32> to vector<16x16xf32>
    %298 = arith.subf %283, %297 : vector<16x16xf32>
    %cst_99 = arith.constant 9.99999974E-6 : f32
    %299 = vector.broadcast %cst_99 : f32 to vector<16x1xf32>
    %300 = arith.addf %296, %299 : vector<16x1xf32>
    %301 = math.rsqrt %300 : vector<16x1xf32>
    %302 = vector.broadcast %301 : vector<16x1xf32> to vector<16x16xf32>
    %303 = arith.mulf %298, %302 : vector<16x16xf32>
    %304 = vector.broadcast %284 : vector<1x16xf32> to vector<16x16xf32>
    %305 = arith.mulf %303, %304 : vector<16x16xf32>
    %306 = vector.broadcast %285 : vector<1x16xf32> to vector<16x16xf32>
    %307 = arith.addf %305, %306 : vector<16x16xf32>
    %c344 = arith.constant 344 : index
    %c0_100 = arith.constant 0 : index
    %308 = vector.load %arg3[%c344, %c0_100] : memref<616x128xf32, #tpu.memory_space<vmem>>, vector<16x64xf32>
    %cst_101 = arith.constant dense<0.000000e+00> : vector<16x64xf32>
    %309 = tpu.matmul %307, %308, %cst_101 {dimension_numbers = #tpu.dot_dimension_numbers<[1], [0], [0], [1], [0, 0, 1, 1], [], []>} : vector<16x16xf32>, vector<16x64xf32>, vector<16x64xf32> -> vector<16x64xf32>
    %c360 = arith.constant 360 : index
    %c0_102 = arith.constant 0 : index
    %310 = vector.load %arg3[%c360, %c0_102] : memref<616x128xf32, #tpu.memory_space<vmem>>, vector<1x64xf32>
    %311 = vector.broadcast %310 : vector<1x64xf32> to vector<16x64xf32>
    %312 = arith.addf %309, %311 : vector<16x64xf32>
    %cst_103 = arith.constant 0.000000e+00 : f32
    %313 = vector.broadcast %cst_103 : f32 to vector<16x64xf32>
    %314 = arith.maximumf %312, %313 : vector<16x64xf32>
    %c368 = arith.constant 368 : index
    %c0_104 = arith.constant 0 : index
    %315 = vector.load %arg3[%c368, %c0_104] : memref<616x128xf32, #tpu.memory_space<vmem>>, vector<64x16xf32>
    %cst_105 = arith.constant dense<0.000000e+00> : vector<16x16xf32>
    %316 = tpu.matmul %314, %315, %cst_105 {dimension_numbers = #tpu.dot_dimension_numbers<[1], [0], [0], [1], [0, 0, 1, 1], [], []>} : vector<16x64xf32>, vector<64x16xf32>, vector<16x16xf32> -> vector<16x16xf32>
    %317 = arith.addf %283, %316 : vector<16x16xf32>
    %c432 = arith.constant 432 : index
    %c0_106 = arith.constant 0 : index
    %318 = vector.load %arg3[%c432, %c0_106] : memref<616x128xf32, #tpu.memory_space<vmem>>, vector<1x16xf32>
    %319 = vector.broadcast %318 : vector<1x16xf32> to vector<16x16xf32>
    %320 = arith.addf %317, %319 : vector<16x16xf32>
    %c440 = arith.constant 440 : index
    %c0_107 = arith.constant 0 : index
    %321 = vector.load %arg3[%c440, %c0_107] : memref<616x128xf32, #tpu.memory_space<vmem>>, vector<1x16xf32>
    %c448 = arith.constant 448 : index
    %c0_108 = arith.constant 0 : index
    %322 = vector.load %arg3[%c448, %c0_108] : memref<616x128xf32, #tpu.memory_space<vmem>>, vector<1x16xf32>
    %cst_109 = arith.constant dense<0.000000e+00> : vector<16xf32>
    %323 = vector.multi_reduction <add>, %320, %cst_109 [1] : vector<16x16xf32> to vector<16xf32>
    %324 = vector.shape_cast %323 : vector<16xf32> to vector<16x1xf32>
    %cst_110 = arith.constant 1.600000e+01 : f32
    %325 = vector.broadcast %cst_110 : f32 to vector<16x1xf32>
    %326 = arith.divf %324, %325 : vector<16x1xf32>
    %327 = vector.broadcast %326 : vector<16x1xf32> to vector<16x16xf32>
    %328 = arith.subf %320, %327 : vector<16x16xf32>
    %329 = arith.mulf %328, %328 : vector<16x16xf32>
    %cst_111 = arith.constant dense<0.000000e+00> : vector<16xf32>
    %330 = vector.multi_reduction <add>, %329, %cst_111 [1] : vector<16x16xf32> to vector<16xf32>
    %331 = vector.shape_cast %330 : vector<16xf32> to vector<16x1xf32>
    %cst_112 = arith.constant 1.600000e+01 : f32
    %332 = vector.broadcast %cst_112 : f32 to vector<16x1xf32>
    %333 = arith.divf %331, %332 : vector<16x1xf32>
    %334 = vector.broadcast %326 : vector<16x1xf32> to vector<16x16xf32>
    %335 = arith.subf %320, %334 : vector<16x16xf32>
    %cst_113 = arith.constant 9.99999974E-6 : f32
    %336 = vector.broadcast %cst_113 : f32 to vector<16x1xf32>
    %337 = arith.addf %333, %336 : vector<16x1xf32>
    %338 = math.rsqrt %337 : vector<16x1xf32>
    %339 = vector.broadcast %338 : vector<16x1xf32> to vector<16x16xf32>
    %340 = arith.mulf %335, %339 : vector<16x16xf32>
    %341 = vector.broadcast %321 : vector<1x16xf32> to vector<16x16xf32>
    %342 = arith.mulf %340, %341 : vector<16x16xf32>
    %343 = vector.broadcast %322 : vector<1x16xf32> to vector<16x16xf32>
    %344 = arith.addf %342, %343 : vector<16x16xf32>
    %345 = vector.shape_cast %344 : vector<16x16xf32> to vector<2x8x16xf32>
    %cst_114 = arith.constant dense<0.000000e+00> : vector<2x16xf32>
    %346 = vector.multi_reduction <add>, %345, %cst_114 [1] : vector<2x8x16xf32> to vector<2x16xf32>
    %cst_115 = arith.constant 8.000000e+00 : f32
    %347 = vector.broadcast %cst_115 : f32 to vector<2x16xf32>
    %348 = arith.divf %346, %347 : vector<2x16xf32>
    %c488 = arith.constant 488 : index
    %c0_116 = arith.constant 0 : index
    %349 = vector.load %arg3[%c488, %c0_116] : memref<616x128xf32, #tpu.memory_space<vmem>>, vector<16x32xf32>
    %cst_117 = arith.constant dense<0.000000e+00> : vector<2x32xf32>
    %350 = tpu.matmul %348, %349, %cst_117 {dimension_numbers = #tpu.dot_dimension_numbers<[1], [0], [0], [1], [0, 0, 1, 1], [], []>} : vector<2x16xf32>, vector<16x32xf32>, vector<2x32xf32> -> vector<2x32xf32>
    %c504 = arith.constant 504 : index
    %c0_118 = arith.constant 0 : index
    %351 = vector.load %arg3[%c504, %c0_118] : memref<616x128xf32, #tpu.memory_space<vmem>>, vector<1x32xf32>
    %352 = vector.broadcast %351 : vector<1x32xf32> to vector<2x32xf32>
    %353 = arith.addf %350, %352 : vector<2x32xf32>
    %c0_119 = arith.constant 0 : index
    %c0_120 = arith.constant 0 : index
    %354 = vector.load %arg0[%c0_119, %c0_120] : memref<2x32xf32, #tpu.memory_space<vmem>>, vector<2x32xf32>
    %355 = tpu.concatenate %354, %176, %353 in 1 : vector<2x32xf32>, vector<2x32xf32>, vector<2x32xf32> -> vector<2x96xf32>
    %c512 = arith.constant 512 : index
    %c0_121 = arith.constant 0 : index
    %356 = vector.load %arg3[%c512, %c0_121] : memref<616x128xf32, #tpu.memory_space<vmem>>, vector<96x32xf32>
    %cst_122 = arith.constant dense<0.000000e+00> : vector<2x32xf32>
    %357 = tpu.matmul %355, %356, %cst_122 {dimension_numbers = #tpu.dot_dimension_numbers<[1], [0], [0], [1], [0, 0, 1, 1], [], []>} : vector<2x96xf32>, vector<96x32xf32>, vector<2x32xf32> -> vector<2x32xf32>
    %c608 = arith.constant 608 : index
    %c0_123 = arith.constant 0 : index
    %358 = vector.load %arg3[%c608, %c0_123] : memref<616x128xf32, #tpu.memory_space<vmem>>, vector<1x32xf32>
    %359 = vector.broadcast %358 : vector<1x32xf32> to vector<2x32xf32>
    %360 = arith.addf %357, %359 : vector<2x32xf32>
    %361 = tpu.concatenate %355, %360 in 1 : vector<2x96xf32>, vector<2x32xf32> -> vector<2x128xf32>
    %c0_124 = arith.constant 0 : index
    %c0_125 = arith.constant 0 : index
    %362 = vector.load %arg4[%c0_124, %c0_125] : memref<2x128xf32, #tpu.memory_space<vmem>>, vector<2x128xf32>
    tpu.vector_store %arg4[%c0_124, %c0_125], %361 {strides = array<i32>} : memref<2x128xf32, #tpu.memory_space<vmem>>, vector<2x128xf32>,
    return
  }
}

</mosaic_0001>

<llo_original>
// kernel: forward.1
$region0: #{forward.1}
  #allocation0 [shape = 'u32[]', space=smem, size = 0x4, offset = 0x4, fixed_abs, tag = 'smem constant byte address 0x4 - core index']
  #allocation1 [shape = 'u32[144,128]{1,0:T(1,128)}', space=vmem, size = 0x12000, scoped, tag = 'internal scratch']
  %s0 = inlined_call_operand.vmem [shape: f32[2,32], index: 0, kind: input, shape index: {}]
  %s1 = inlined_call_operand.hbm [shape: f32[2,8,24], index: 1, kind: input, shape index: {}]
  %s2 = inlined_call_operand.hbm [shape: f32[2,8,16], index: 2, kind: input, shape index: {}]
  %s3 = inlined_call_operand.hbm [shape: f32[616,128], index: 3, kind: input, shape index: {}]
  %s4 = inlined_call_operand.vmem [shape: f32[2,128], index: 4, kind: output, shape index: {}]
  %s5 = sld [smem:[#allocation0]]
  $region38: #{forward.1} parent=0
    _
  %s7 = ssub.s32 1, %s5
  %s8 = scalar_select 0, %s7, %s5
  $region1: #{forward.1} parent=0
    #allocation2 [shape = 'u8[8192]{0}', space=vmem, size = 0x2000, scoped, tag = 'input window, operand 1, single buffered']
    #allocation3 [shape = 's32[1]{0}', space=sflag, size = 0x4, scoped, tag = 'scoped memory for forward.1']
    #allocation4 [shape = 'u8[8192]{0}', space=vmem, size = 0x2000, scoped, tag = 'input window, operand 2, single buffered']
    #allocation5 [shape = 's32[1]{0}', space=sflag, size = 0x4, scoped, tag = 'scoped memory for forward.1']
    #allocation6 [shape = 'u8[315392]{0}', space=vmem, size = 0x4d000, scoped, tag = 'input window, operand 3, single buffered']
    %9 = vsyncpa [#allocation3], 0
    %10 = vsyncpa [#allocation5], 0
    // Predicated region
    $region2: #{forward.1} parent=1 // pred_check
      _
    $region3: #{forward.1} parent=1 // pred_check_branch
      %12 = sbr.rel (0) target = $region5
    $region4: #{forward.1} parent=1 // pred_region
      _
    $region5: #{forward.1} parent=1 // pred_fallthru
      _
    // Predicated region
    $region6: #{forward.1} parent=1 // pred_check
      _
    $region7: #{forward.1} parent=1 // pred_check_branch
      %14 = sbr.rel (0) target = $region9
    $region8: #{forward.1} parent=1 // pred_region
      %s16 = ssub.s32 256, 256
      %17 = vsyncadd [#allocation3], %s16
      %s18 = sshll.u32 [#allocation2], 4
      %s19 = int_to_ptr.vmem [resolvable:$true] %s18
      %24 = dma.hbm_to_vmem [thread:$0]  %s1, 256, %s19, [#allocation3], 128, 128, 8
    $region9: #{forward.1} parent=1 // pred_fallthru
      _
    // Predicated region
    $region10: #{forward.1} parent=1 // pred_check
      _
    $region11: #{forward.1} parent=1 // pred_check_branch
      %26 = sbr.rel (0) target = $region13
    $region12: #{forward.1} parent=1 // pred_region
      %s28 = ssub.s32 256, 256
      %29 = vsyncadd [#allocation5], %s28
      %s30 = sshll.u32 [#allocation4], 4
      %s31 = int_to_ptr.vmem [resolvable:$true] %s30
      %36 = dma.hbm_to_vmem [thread:$0]  %s2, 256, %s31, [#allocation5], 128, 128, 8
    $region13: #{forward.1} parent=1 // pred_fallthru
      _
    // Predicated region
    $region14: #{forward.1} parent=1 // pred_check
      _
    $region15: #{forward.1} parent=1 // pred_check_branch
      %38 = sbr.rel (0) target = $region17
    $region16: #{forward.1} parent=1 // pred_region
      %s40 = ssub.s32 9856, 9856
      %41 = vsyncadd [#allocation5], %s40
      %s42 = sshll.u32 [#allocation6], 4
      %s43 = int_to_ptr.vmem [resolvable:$true] %s42
      %48 = dma.hbm_to_vmem [thread:$0]  %s3, 9856, %s43, [#allocation5], 128, 128, 8
    $region17: #{forward.1} parent=1 // pred_fallthru
      _
    // Predicated region
    $region18: #{forward.1} parent=1 // pred_check
      _
    $region19: #{forward.1} parent=1 // pred_check_branch
      %50 = sbr.rel (0) target = $region21
    $region20: #{forward.1} parent=1 // pred_region
      %51 = dma.done [#allocation3], 256
    $region21: #{forward.1} parent=1 // pred_fallthru
      _
    // Predicated region
    $region22: #{forward.1} parent=1 // pred_check
      _
    $region23: #{forward.1} parent=1 // pred_check_branch
      %53 = sbr.rel (0) target = $region25
    $region24: #{forward.1} parent=1 // pred_region
      %54 = dma.done [#allocation5], 256
    $region25: #{forward.1} parent=1 // pred_fallthru
      _
    // Predicated region
    $region26: #{forward.1} parent=1 // pred_check
      _
    $region27: #{forward.1} parent=1 // pred_check_branch
      %56 = sbr.rel (0) target = $region29
    $region28: #{forward.1} parent=1 // pred_region
      %57 = dma.done [#allocation5], 9856
    $region29: #{forward.1} parent=1 // pred_fallthru
      _
    %v58 = vld [vmem:[#allocation2] sm:$0xff]
    %v59 = vld [vmem:[#allocation2 + $0x8] sm:$0xff]
    %v60 = vld [vmem:[#allocation6] sm:$0xff]
    %v61 = vmul.f32 %v58, 4.8989797
    %v62 = vmul.f32 %v59, 4.8989797
    %v63 = vadd.f32 %v61, %v60
    %v64 = vadd.f32 %v62, %v60
    %v65 = vld [vmem:[#allocation6 + $0x8] sm:$0x1]
    %v66 = vld [vmem:[#allocation6 + $0x10] sm:$0x1]
    %vm67 = vcmask 195584
    %v68 = vsel %vm67, %v63, 0.0
    %69 = vadd.xlane.f32.xlu0 %v68
    %v70 = vpop.xlane.xlu0 %69
    %v71 = vsel %vm67, %v64, 0.0
    %72 = vadd.xlane.f32.xlu0 %v71
    %v73 = vpop.xlane.xlu0 %72
    %v74 = vrcp.pop 24.0
    %v75 = vmul.f32 %v70, %v74
    %v76 = vmul.f32 %v73, %v74
    %v77 = vsub.f32 %v63, %v75
    %v78 = vsub.f32 %v64, %v76
    %v79 = vmul.f32 %v77, %v77
    %v80 = vmul.f32 %v78, %v78
    %v81 = vsel %vm67, %v79, 0.0
    %82 = vadd.xlane.f32.xlu0 %v81
    %v83 = vpop.xlane.xlu0 %82
    %v84 = vsel %vm67, %v80, 0.0
    %85 = vadd.xlane.f32.xlu0 %v84
    %v86 = vpop.xlane.xlu0 %85
    %v87 = vmul.f32 %v83, %v74
    %v88 = vmul.f32 %v86, %v74
    %v89 = vadd.f32 %v87, 1e-05
    %v90 = vadd.f32 %v88, 1e-05
    %v91 = vrsqrt.pop %v89
    %v92 = vrsqrt.pop %v90
    %v93 = vmul.f32 %v77, %v91
    %v94 = vmul.f32 %v78, %v92
    %v95 = vlaneseq
    %v96 = vshrl.u32 %v95, 7
    %v97 = vsub.s32 0, %v96
    %v98 = vrot.slane %v65, %v97
    %v99 = vmul.f32 %v93, %v98
    %v100 = vmul.f32 %v94, %v98
    %v101 = vlaneseq
    %v102 = vshrl.u32 %v101, 7
    %v103 = vsub.s32 0, %v102
    %v104 = vrot.slane %v66, %v103
    %v105 = vadd.f32 %v99, %v104
    %v106 = vadd.f32 %v100, %v104
    %v107 = vld [vmem:[#allocation6 + $0x18] sm:$0xff]
    %v108 = vld [vmem:[#allocation6 + $0x20] sm:$0xff]
    %v109 = vld [vmem:[#allocation6 + $0x28] sm:$0xff]
    %v110 = vld [vmem:[#allocation6 + $0x30] sm:$0x1]
    %v111 = vlaneseq
    %v112 = vshrl.u32 %v111, 7
    %v113 = vsub.s32 0, %v112
    %v114 = vrot.slane %v110, %v113
    %v116 = vsel %vm67, %v105, 0
    %v119 = vsel %vm67, %v106, 0
    %121 = vmatprep.subr.mxu0 0.0
    %122 = vmatpush1.msra.mxu0 0.0
    %123 = vmatprep.subr.mxu0 0.0
    %124 = vmatpush1.msra.mxu0 0.0
    %125 = vmatprep.subr.mxu0 0.0
    %126 = vmatpush1.msra.mxu0 0.0
    %127 = vmatprep.subr.mxu0 0.0
    %128 = vmatpush1.msra.mxu0 0.0
    %129 = vmatprep.subr.mxu0 0.0
    %130 = vmatpush1.msra.mxu0 0.0
    %131 = vmatprep.subr.mxu0 0.0
    %132 = vmatpush1.msra.mxu0 0.0
    %133 = vmatprep.subr.mxu0 0.0
    %134 = vmatpush1.msra.mxu0 0.0
    %135 = vmatprep.subr.mxu0 0.0
    %136 = vmatpush1.msra.mxu0 0.0
    %137 = vmatprep.subr.mxu0 0.0
    %138 = vmatpush1.msra.mxu0 0.0
    %139 = vmatprep.subr.mxu0 0.0
    %140 = vmatpush1.msra.mxu0 0.0
    %141 = vmatprep.subr.mxu0 0.0
    %142 = vmatpush1.msra.mxu0 0.0
    %143 = vmatprep.subr.mxu0 0.0
    %144 = vmatpush1.msra.mxu0 0.0
    %145 = vmatprep.subr.mxu0 0.0
    %146 = vmatpush1.msra.mxu0 0.0
    %147 = vmatprep.subr.mxu0 0.0
    %148 = vmatpush1.msra.mxu0 %v109
    %149 = vmatprep.subr.mxu0 0.0
    %150 = vmatpush1.msra.mxu0 %v108
    %151 = vmatprep.subr.mxu0 0.0
    %152 = vmatpush1.msra.mxu0 %v107
    %153 = vmatprep.subr.mxu0 0.0
    %154 = vmatpush2.msra.mxu0 0.0
    %155 = vmatprep.subr.mxu0 0.0
    %156 = vmatpush2.msra.mxu0 0.0
    %157 = vmatprep.subr.mxu0 0.0
    %158 = vmatpush2.msra.mxu0 0.0
    %159 = vmatprep.subr.mxu0 0.0
    %160 = vmatpush2.msra.mxu0 0.0
    %161 = vmatprep.subr.mxu0 0.0
    %162 = vmatpush2.msra.mxu0 0.0
    %163 = vmatprep.subr.mxu0 0.0
    %164 = vmatpush2.msra.mxu0 0.0
    %165 = vmatprep.subr.mxu0 0.0
    %166 = vmatpush2.msra.mxu0 0.0
    %167 = vmatprep.subr.mxu0 0.0
    %168 = vmatpush2.msra.mxu0 0.0
    %169 = vmatprep.subr.mxu0 0.0
    %170 = vmatpush2.msra.mxu0 0.0
    %171 = vmatprep.subr.mxu0 0.0
    %172 = vmatpush2.msra.mxu0 0.0
    %173 = vmatprep.subr.mxu0 0.0
    %174 = vmatpush2.msra.mxu0 0.0
    %175 = vmatprep.subr.mxu0 0.0
    %176 = vmatpush2.msra.mxu0 0.0
    %177 = vmatprep.subr.mxu0 0.0
    %178 = vmatpush2.msra.mxu0 0.0
    %179 = vmatprep.subr.mxu0 0.0
    %180 = vmatpush2.msra.mxu0 0.0
    %181 = vmatprep.subr.mxu0 0.0
    %182 = vmatpush2.msra.mxu0 0.0
    %183 = vmatprep.subr.mxu0 0.0
    %184 = vmatpush2.msra.mxu0 0.0
    %185 = vmatprep.mubr.f32.mxu0 0.0
    %186 = vmatmul.mubr.f32.gmra.mxu0 %v116
    %v187 = vpop.f32.mrf.mxu0
    %v188 = vadd.f32 %v114, %v187
    %v189 = vpop.f32.mrf.mxu0
    %190 = vmatprep.mubr.f32.mxu0 0.0
    %191 = vmatmul.mubr.f32.gmra.mxu0 %v119
    %v192 = vpop.f32.mrf.mxu0
    %v193 = vadd.f32 %v114, %v192
    %v194 = vpop.f32.mrf.mxu0
    %195 = vdwg.mxu0
    %197 = vrot.lane.b32.xlu0 %v188, 104
    %v198 = vpop.permute.xlu0 %197
    %vm199 = vcmask 48128
    %v200 = vsel %vm199, %v188, 0
    %v202 = vsel %vm199, %v198, 0
    %204 = vmatprep.subr.mxu0 0.0
    %205 = vmatpush1.xpose.msra.mxu0 0.0
    %206 = vmatprep.subr.mxu0 0.0
    %207 = vmatpush1.xpose.msra.mxu0 0.0
    %208 = vmatprep.subr.mxu0 0.0
    %209 = vmatpush1.xpose.msra.mxu0 0.0
    %210 = vmatprep.subr.mxu0 0.0
    %211 = vmatpush1.xpose.msra.mxu0 0.0
    %212 = vmatprep.subr.mxu0 0.0
    %213 = vmatpush1.xpose.msra.mxu0 0.0
    %214 = vmatprep.subr.mxu0 0.0
    %215 = vmatpush1.xpose.msra.mxu0 0.0
    %216 = vmatprep.subr.mxu0 0.0
    %217 = vmatpush1.xpose.msra.mxu0 0.0
    %218 = vmatprep.subr.mxu0 0.0
    %219 = vmatpush1.xpose.msra.mxu0 0.0
    %220 = vmatprep.subr.mxu0 0.0
    %221 = vmatpush1.xpose.msra.mxu0 0.0
    %222 = vmatprep.subr.mxu0 0.0
    %223 = vmatpush1.xpose.msra.mxu0 0.0
    %224 = vmatprep.subr.mxu0 0.0
    %225 = vmatpush1.xpose.msra.mxu0 0.0
    %226 = vmatprep.subr.mxu0 0.0
    %227 = vmatpush1.xpose.msra.mxu0 0.0
    %228 = vmatprep.subr.mxu0 0.0
    %229 = vmatpush1.xpose.msra.mxu0 0.0
    %230 = vmatprep.subr.mxu0 0.0
    %231 = vmatpush1.xpose.msra.mxu0 0.0
    %232 = vmatprep.subr.mxu0 0.0
    %233 = vmatpush1.xpose.msra.mxu0 0.0
    %234 = vmatprep.subr.mxu0 0.0
    %235 = vmatpush1.xpose.msra.mxu0 %v202
    %236 = vmatprep.subr.mxu0 0.0
    %237 = vmatpush2.xpose.msra.mxu0 0.0
    %238 = vmatprep.subr.mxu0 0.0
    %239 = vmatpush2.xpose.msra.mxu0 0.0
    %240 = vmatprep.subr.mxu0 0.0
    %241 = vmatpush2.xpose.msra.mxu0 0.0
    %242 = vmatprep.subr.mxu0 0.0
    %243 = vmatpush2.xpose.msra.mxu0 0.0
    %244 = vmatprep.subr.mxu0 0.0
    %245 = vmatpush2.xpose.msra.mxu0 0.0
    %246 = vmatprep.subr.mxu0 0.0
    %247 = vmatpush2.xpose.msra.mxu0 0.0
    %248 = vmatprep.subr.mxu0 0.0
    %249 = vmatpush2.xpose.msra.mxu0 0.0
    %250 = vmatprep.subr.mxu0 0.0
    %251 = vmatpush2.xpose.msra.mxu0 0.0
    %252 = vmatprep.subr.mxu0 0.0
    %253 = vmatpush2.xpose.msra.mxu0 0.0
    %254 = vmatprep.subr.mxu0 0.0
    %255 = vmatpush2.xpose.msra.mxu0 0.0
    %256 = vmatprep.subr.mxu0 0.0
    %257 = vmatpush2.xpose.msra.mxu0 0.0
    %258 = vmatprep.subr.mxu0 0.0
    %259 = vmatpush2.xpose.msra.mxu0 0.0
    %260 = vmatprep.subr.mxu0 0.0
    %261 = vmatpush2.xpose.msra.mxu0 0.0
    %262 = vmatprep.subr.mxu0 0.0
    %263 = vmatpush2.xpose.msra.mxu0 0.0
    %264 = vmatprep.subr.mxu0 0.0
    %265 = vmatpush2.xpose.msra.mxu0 0.0
    %266 = vmatprep.subr.mxu0 0.0
    %267 = vmatpush2.xpose.msra.mxu0 0.0
    %268 = vmatprep.mubr.f32.mxu0 0.0
    %269 = vmatmul.mubr.f32.gmra.mxu0 %v200
    %v270 = vpop.f32.mrf.mxu0
    %v271 = vadd.f32 0.0, %v270
    %v272 = vpop.f32.mrf.mxu0
    %273 = vdwg.mxu0
    %275 = vrot.lane.b32.xlu0 %v193, 104
    %v276 = vpop.permute.xlu0 %275
    %v277 = vsel %vm199, %v193, 0
    %v279 = vsel %vm199, %v276, 0
    %281 = vmatprep.subr.mxu0 0.0
    %282 = vmatpush1.xpose.msra.mxu0 0.0
    %283 = vmatprep.subr.mxu0 0.0
    %284 = vmatpush1.xpose.msra.mxu0 0.0
    %285 = vmatprep.subr.mxu0 0.0
    %286 = vmatpush1.xpose.msra.mxu0 0.0
    %287 = vmatprep.subr.mxu0 0.0
    %288 = vmatpush1.xpose.msra.mxu0 0.0
    %289 = vmatprep.subr.mxu0 0.0
    %290 = vmatpush1.xpose.msra.mxu0 0.0
    %291 = vmatprep.subr.mxu0 0.0
    %292 = vmatpush1.xpose.msra.mxu0 0.0
    %293 = vmatprep.subr.mxu0 0.0
    %294 = vmatpush1.xpose.msra.mxu0 0.0
    %295 = vmatprep.subr.mxu0 0.0
    %296 = vmatpush1.xpose.msra.mxu0 0.0
    %297 = vmatprep.subr.mxu0 0.0
    %298 = vmatpush1.xpose.msra.mxu0 0.0
    %299 = vmatprep.subr.mxu0 0.0
    %300 = vmatpush1.xpose.msra.mxu0 0.0
    %301 = vmatprep.subr.mxu0 0.0
    %302 = vmatpush1.xpose.msra.mxu0 0.0
    %303 = vmatprep.subr.mxu0 0.0
    %304 = vmatpush1.xpose.msra.mxu0 0.0
    %305 = vmatprep.subr.mxu0 0.0
    %306 = vmatpush1.xpose.msra.mxu0 0.0
    %307 = vmatprep.subr.mxu0 0.0
    %308 = vmatpush1.xpose.msra.mxu0 0.0
    %309 = vmatprep.subr.mxu0 0.0
    %310 = vmatpush1.xpose.msra.mxu0 0.0
    %311 = vmatprep.subr.mxu0 0.0
    %312 = vmatpush1.xpose.msra.mxu0 %v279
    %313 = vmatprep.subr.mxu0 0.0
    %314 = vmatpush2.xpose.msra.mxu0 0.0
    %315 = vmatprep.subr.mxu0 0.0
    %316 = vmatpush2.xpose.msra.mxu0 0.0
    %317 = vmatprep.subr.mxu0 0.0
    %318 = vmatpush2.xpose.msra.mxu0 0.0
    %319 = vmatprep.subr.mxu0 0.0
    %320 = vmatpush2.xpose.msra.mxu0 0.0
    %321 = vmatprep.subr.mxu0 0.0
    %322 = vmatpush2.xpose.msra.mxu0 0.0
    %323 = vmatprep.subr.mxu0 0.0
    %324 = vmatpush2.xpose.msra.mxu0 0.0
    %325 = vmatprep.subr.mxu0 0.0
    %326 = vmatpush2.xpose.msra.mxu0 0.0
    %327 = vmatprep.subr.mxu0 0.0
    %328 = vmatpush2.xpose.msra.mxu0 0.0
    %329 = vmatprep.subr.mxu0 0.0
    %330 = vmatpush2.xpose.msra.mxu0 0.0
    %331 = vmatprep.subr.mxu0 0.0
    %332 = vmatpush2.xpose.msra.mxu0 0.0
    %333 = vmatprep.subr.mxu0 0.0
    %334 = vmatpush2.xpose.msra.mxu0 0.0
    %335 = vmatprep.subr.mxu0 0.0
    %336 = vmatpush2.xpose.msra.mxu0 0.0
    %337 = vmatprep.subr.mxu0 0.0
    %338 = vmatpush2.xpose.msra.mxu0 0.0
    %339 = vmatprep.subr.mxu0 0.0
    %340 = vmatpush2.xpose.msra.mxu0 0.0
    %341 = vmatprep.subr.mxu0 0.0
    %342 = vmatpush2.xpose.msra.mxu0 0.0
    %343 = vmatprep.subr.mxu0 0.0
    %344 = vmatpush2.xpose.msra.mxu0 0.0
    %345 = vmatprep.mubr.f32.mxu0 0.0
    %346 = vmatmul.mubr.f32.gmra.mxu0 %v277
    %v347 = vpop.f32.mrf.mxu0
    %v348 = vadd.f32 0.0, %v347
    %v349 = vpop.f32.mrf.mxu0
    %350 = vdwg.mxu0
    %vm351 = vcmask 64512
    %v352 = vsel %vm351, %v271, -inf
    %353 = vmax.xlane.f32.xlu0 %v352
    %v354 = vpop.xlane.xlu0 %353
    %v355 = vsel %vm351, %v348, -inf
    %356 = vmax.xlane.f32.xlu0 %v355
    %v357 = vpop.xlane.xlu0 %356
    %v358 = vsub.f32 %v271, %v354
    %v359 = vsub.f32 %v348, %v357
    %v360 = vmul.f32 %v358, 1.442695
    %v361 = vpow.pop %v360
    %v362 = vmul.f32 %v359, 1.442695
    %v363 = vpow.pop %v362
    %v364 = vsel %vm351, %v361, 0.0
    %365 = vadd.xlane.f32.xlu0 %v364
    %v366 = vpop.xlane.xlu0 %365
    %v367 = vsel %vm351, %v363, 0.0
    %368 = vadd.xlane.f32.xlu0 %v367
    %v369 = vpop.xlane.xlu0 %368
    %v370 = vrcp.pop %v366
    %v371 = vmul.f32 %v361, %v370
    %v372 = vrcp.pop %v369
    %v373 = vmul.f32 %v363, %v372
    %374 = vrot.lane.b32.xlu0 %v188, 80
    %v375 = vpop.permute.xlu0 %374
    %v378 = vsel %vm351, %v371, 0
    %380 = vmatprep.subr.mxu0 0.0
    %381 = vmatpush1.msra.mxu0 0.0
    %382 = vmatprep.subr.mxu0 0.0
    %383 = vmatpush1.msra.mxu0 0.0
    %384 = vmatprep.subr.mxu0 0.0
    %385 = vmatpush1.msra.mxu0 0.0
    %386 = vmatprep.subr.mxu0 0.0
    %387 = vmatpush1.msra.mxu0 0.0
    %388 = vmatprep.subr.mxu0 0.0
    %389 = vmatpush1.msra.mxu0 0.0
    %390 = vmatprep.subr.mxu0 0.0
    %391 = vmatpush1.msra.mxu0 0.0
    %392 = vmatprep.subr.mxu0 0.0
    %393 = vmatpush1.msra.mxu0 0.0
    %394 = vmatprep.subr.mxu0 0.0
    %395 = vmatpush1.msra.mxu0 0.0
    %396 = vmatprep.subr.mxu0 0.0
    %397 = vmatpush1.msra.mxu0 0.0
    %398 = vmatprep.subr.mxu0 0.0
    %399 = vmatpush1.msra.mxu0 0.0
    %400 = vmatprep.subr.mxu0 0.0
    %401 = vmatpush1.msra.mxu0 0.0
    %402 = vmatprep.subr.mxu0 0.0
    %403 = vmatpush1.msra.mxu0 0.0
    %404 = vmatprep.subr.mxu0 0.0
    %405 = vmatpush1.msra.mxu0 0.0
    %406 = vmatprep.subr.mxu0 0.0
    %407 = vmatpush1.msra.mxu0 0.0
    %408 = vmatprep.subr.mxu0 0.0
    %409 = vmatpush1.msra.mxu0 0.0
    %410 = vmatprep.subr.mxu0 0.0
    %411 = vmatpush1.msra.mxu0 %v375
    %412 = vmatprep.subr.mxu0 0.0
    %413 = vmatpush2.msra.mxu0 0.0
    %414 = vmatprep.subr.mxu0 0.0
    %415 = vmatpush2.msra.mxu0 0.0
    %416 = vmatprep.subr.mxu0 0.0
    %417 = vmatpush2.msra.mxu0 0.0
    %418 = vmatprep.subr.mxu0 0.0
    %419 = vmatpush2.msra.mxu0 0.0
    %420 = vmatprep.subr.mxu0 0.0
    %421 = vmatpush2.msra.mxu0 0.0
    %422 = vmatprep.subr.mxu0 0.0
    %423 = vmatpush2.msra.mxu0 0.0
    %424 = vmatprep.subr.mxu0 0.0
    %425 = vmatpush2.msra.mxu0 0.0
    %426 = vmatprep.subr.mxu0 0.0
    %427 = vmatpush2.msra.mxu0 0.0
    %428 = vmatprep.subr.mxu0 0.0
    %429 = vmatpush2.msra.mxu0 0.0
    %430 = vmatprep.subr.mxu0 0.0
    %431 = vmatpush2.msra.mxu0 0.0
    %432 = vmatprep.subr.mxu0 0.0
    %433 = vmatpush2.msra.mxu0 0.0
    %434 = vmatprep.subr.mxu0 0.0
    %435 = vmatpush2.msra.mxu0 0.0
    %436 = vmatprep.subr.mxu0 0.0
    %437 = vmatpush2.msra.mxu0 0.0
    %438 = vmatprep.subr.mxu0 0.0
    %439 = vmatpush2.msra.mxu0 0.0
    %440 = vmatprep.subr.mxu0 0.0
    %441 = vmatpush2.msra.mxu0 0.0
    %442 = vmatprep.subr.mxu0 0.0
    %443 = vmatpush2.msra.mxu0 0.0
    %444 = vmatprep.mubr.f32.mxu0 0.0
    %445 = vmatmul.mubr.f32.gmra.mxu0 %v378
    %v446 = vpop.f32.mrf.mxu0
    %v447 = vadd.f32 0.0, %v446
    %v448 = vpop.f32.mrf.mxu0
    %449 = vdwg.mxu0
    %450 = vrot.lane.b32.xlu0 %v193, 80
    %v451 = vpop.permute.xlu0 %450
    %v454 = vsel %vm351, %v373, 0
    %456 = vmatprep.subr.mxu0 0.0
    %457 = vmatpush1.msra.mxu0 0.0
    %458 = vmatprep.subr.mxu0 0.0
    %459 = vmatpush1.msra.mxu0 0.0
    %460 = vmatprep.subr.mxu0 0.0
    %461 = vmatpush1.msra.mxu0 0.0
    %462 = vmatprep.subr.mxu0 0.0
    %463 = vmatpush1.msra.mxu0 0.0
    %464 = vmatprep.subr.mxu0 0.0
    %465 = vmatpush1.msra.mxu0 0.0
    %466 = vmatprep.subr.mxu0 0.0
    %467 = vmatpush1.msra.mxu0 0.0
    %468 = vmatprep.subr.mxu0 0.0
    %469 = vmatpush1.msra.mxu0 0.0
    %470 = vmatprep.subr.mxu0 0.0
    %471 = vmatpush1.msra.mxu0 0.0
    %472 = vmatprep.subr.mxu0 0.0
    %473 = vmatpush1.msra.mxu0 0.0
    %474 = vmatprep.subr.mxu0 0.0
    %475 = vmatpush1.msra.mxu0 0.0
    %476 = vmatprep.subr.mxu0 0.0
    %477 = vmatpush1.msra.mxu0 0.0
    %478 = vmatprep.subr.mxu0 0.0
    %479 = vmatpush1.msra.mxu0 0.0
    %480 = vmatprep.subr.mxu0 0.0
    %481 = vmatpush1.msra.mxu0 0.0
    %482 = vmatprep.subr.mxu0 0.0
    %483 = vmatpush1.msra.mxu0 0.0
    %484 = vmatprep.subr.mxu0 0.0
    %485 = vmatpush1.msra.mxu0 0.0
    %486 = vmatprep.subr.mxu0 0.0
    %487 = vmatpush1.msra.mxu0 %v451
    %488 = vmatprep.subr.mxu0 0.0
    %489 = vmatpush2.msra.mxu0 0.0
    %490 = vmatprep.subr.mxu0 0.0
    %491 = vmatpush2.msra.mxu0 0.0
    %492 = vmatprep.subr.mxu0 0.0
    %493 = vmatpush2.msra.mxu0 0.0
    %494 = vmatprep.subr.mxu0 0.0
    %495 = vmatpush2.msra.mxu0 0.0
    %496 = vmatprep.subr.mxu0 0.0
    %497 = vmatpush2.msra.mxu0 0.0
    %498 = vmatprep.subr.mxu0 0.0
    %499 = vmatpush2.msra.mxu0 0.0
    %500 = vmatprep.subr.mxu0 0.0
    %501 = vmatpush2.msra.mxu0 0.0
    %502 = vmatprep.subr.mxu0 0.0
    %503 = vmatpush2.msra.mxu0 0.0
    %504 = vmatprep.subr.mxu0 0.0
    %505 = vmatpush2.msra.mxu0 0.0
    %506 = vmatprep.subr.mxu0 0.0
    %507 = vmatpush2.msra.mxu0 0.0
    %508 = vmatprep.subr.mxu0 0.0
    %509 = vmatpush2.msra.mxu0 0.0
    %510 = vmatprep.subr.mxu0 0.0
    %511 = vmatpush2.msra.mxu0 0.0
    %512 = vmatprep.subr.mxu0 0.0
    %513 = vmatpush2.msra.mxu0 0.0
    %514 = vmatprep.subr.mxu0 0.0
    %515 = vmatpush2.msra.mxu0 0.0
    %516 = vmatprep.subr.mxu0 0.0
    %517 = vmatpush2.msra.mxu0 0.0
    %518 = vmatprep.subr.mxu0 0.0
    %519 = vmatpush2.msra.mxu0 0.0
    %520 = vmatprep.mubr.f32.mxu0 0.0
    %521 = vmatmul.mubr.f32.gmra.mxu0 %v454
    %v522 = vpop.f32.mrf.mxu0
    %v523 = vadd.f32 0.0, %v522
    %v524 = vpop.f32.mrf.mxu0
    %525 = vdwg.mxu0
    %526 = vrot.lane.b32.xlu0 %v188, 122
    %v527 = vpop.permute.xlu0 %526
    %528 = vrot.lane.b32.xlu0 %v188, 98
    %v529 = vpop.permute.xlu0 %528
    %v530 = vsel %vm199, %v527, 0
    %v532 = vsel %vm199, %v529, 0
    %534 = vmatprep.subr.mxu0 0.0
    %535 = vmatpush1.xpose.msra.mxu0 0.0
    %536 = vmatprep.subr.mxu0 0.0
    %537 = vmatpush1.xpose.msra.mxu0 0.0
    %538 = vmatprep.subr.mxu0 0.0
    %539 = vmatpush1.xpose.msra.mxu0 0.0
    %540 = vmatprep.subr.mxu0 0.0
    %541 = vmatpush1.xpose.msra.mxu0 0.0
    %542 = vmatprep.subr.mxu0 0.0
    %543 = vmatpush1.xpose.msra.mxu0 0.0
    %544 = vmatprep.subr.mxu0 0.0
    %545 = vmatpush1.xpose.msra.mxu0 0.0
    %546 = vmatprep.subr.mxu0 0.0
    %547 = vmatpush1.xpose.msra.mxu0 0.0
    %548 = vmatprep.subr.mxu0 0.0
    %549 = vmatpush1.xpose.msra.mxu0 0.0
    %550 = vmatprep.subr.mxu0 0.0
    %551 = vmatpush1.xpose.msra.mxu0 0.0
    %552 = vmatprep.subr.mxu0 0.0
    %553 = vmatpush1.xpose.msra.mxu0 0.0
    %554 = vmatprep.subr.mxu0 0.0
    %555 = vmatpush1.xpose.msra.mxu0 0.0
    %556 = vmatprep.subr.mxu0 0.0
    %557 = vmatpush1.xpose.msra.mxu0 0.0
    %558 = vmatprep.subr.mxu0 0.0
    %559 = vmatpush1.xpose.msra.mxu0 0.0
    %560 = vmatprep.subr.mxu0 0.0
    %561 = vmatpush1.xpose.msra.mxu0 0.0
    %562 = vmatprep.subr.mxu0 0.0
    %563 = vmatpush1.xpose.msra.mxu0 0.0
    %564 = vmatprep.subr.mxu0 0.0
    %565 = vmatpush1.xpose.msra.mxu0 %v532
    %566 = vmatprep.subr.mxu0 0.0
    %567 = vmatpush2.xpose.msra.mxu0 0.0
    %568 = vmatprep.subr.mxu0 0.0
    %569 = vmatpush2.xpose.msra.mxu0 0.0
    %570 = vmatprep.subr.mxu0 0.0
    %571 = vmatpush2.xpose.msra.mxu0 0.0
    %572 = vmatprep.subr.mxu0 0.0
    %573 = vmatpush2.xpose.msra.mxu0 0.0
    %574 = vmatprep.subr.mxu0 0.0
    %575 = vmatpush2.xpose.msra.mxu0 0.0
    %576 = vmatprep.subr.mxu0 0.0
    %577 = vmatpush2.xpose.msra.mxu0 0.0
    %578 = vmatprep.subr.mxu0 0.0
    %579 = vmatpush2.xpose.msra.mxu0 0.0
    %580 = vmatprep.subr.mxu0 0.0
    %581 = vmatpush2.xpose.msra.mxu0 0.0
    %582 = vmatprep.subr.mxu0 0.0
    %583 = vmatpush2.xpose.msra.mxu0 0.0
    %584 = vmatprep.subr.mxu0 0.0
    %585 = vmatpush2.xpose.msra.mxu0 0.0
    %586 = vmatprep.subr.mxu0 0.0
    %587 = vmatpush2.xpose.msra.mxu0 0.0
    %588 = vmatprep.subr.mxu0 0.0
    %589 = vmatpush2.xpose.msra.mxu0 0.0
    %590 = vmatprep.subr.mxu0 0.0
    %591 = vmatpush2.xpose.msra.mxu0 0.0
    %592 = vmatprep.subr.mxu0 0.0
    %593 = vmatpush2.xpose.msra.mxu0 0.0
    %594 = vmatprep.subr.mxu0 0.0
    %595 = vmatpush2.xpose.msra.mxu0 0.0
    %596 = vmatprep.subr.mxu0 0.0
    %597 = vmatpush2.xpose.msra.mxu0 0.0
    %598 = vmatprep.mubr.f32.mxu0 0.0
    %599 = vmatmul.mubr.f32.gmra.mxu0 %v530
    %v600 = vpop.f32.mrf.mxu0
    %v601 = vadd.f32 0.0, %v600
    %v602 = vpop.f32.mrf.mxu0
    %603 = vdwg.mxu0
    %604 = vrot.lane.b32.xlu0 %v193, 122
    %v605 = vpop.permute.xlu0 %604
    %606 = vrot.lane.b32.xlu0 %v193, 98
    %v607 = vpop.permute.xlu0 %606
    %v608 = vsel %vm199, %v605, 0
    %v610 = vsel %vm199, %v607, 0
    %612 = vmatprep.subr.mxu0 0.0
    %613 = vmatpush1.xpose.msra.mxu0 0.0
    %614 = vmatprep.subr.mxu0 0.0
    %615 = vmatpush1.xpose.msra.mxu0 0.0
    %616 = vmatprep.subr.mxu0 0.0
    %617 = vmatpush1.xpose.msra.mxu0 0.0
    %618 = vmatprep.subr.mxu0 0.0
    %619 = vmatpush1.xpose.msra.mxu0 0.0
    %620 = vmatprep.subr.mxu0 0.0
    %621 = vmatpush1.xpose.msra.mxu0 0.0
    %622 = vmatprep.subr.mxu0 0.0
    %623 = vmatpush1.xpose.msra.mxu0 0.0
    %624 = vmatprep.subr.mxu0 0.0
    %625 = vmatpush1.xpose.msra.mxu0 0.0
    %626 = vmatprep.subr.mxu0 0.0
    %627 = vmatpush1.xpose.msra.mxu0 0.0
    %628 = vmatprep.subr.mxu0 0.0
    %629 = vmatpush1.xpose.msra.mxu0 0.0
    %630 = vmatprep.subr.mxu0 0.0
    %631 = vmatpush1.xpose.msra.mxu0 0.0
    %632 = vmatprep.subr.mxu0 0.0
    %633 = vmatpush1.xpose.msra.mxu0 0.0
    %634 = vmatprep.subr.mxu0 0.0
    %635 = vmatpush1.xpose.msra.mxu0 0.0
    %636 = vmatprep.subr.mxu0 0.0
    %637 = vmatpush1.xpose.msra.mxu0 0.0
    %638 = vmatprep.subr.mxu0 0.0
    %639 = vmatpush1.xpose.msra.mxu0 0.0
    %640 = vmatprep.subr.mxu0 0.0
    %641 = vmatpush1.xpose.msra.mxu0 0.0
    %642 = vmatprep.subr.mxu0 0.0
    %643 = vmatpush1.xpose.msra.mxu0 %v610
    %644 = vmatprep.subr.mxu0 0.0
    %645 = vmatpush2.xpose.msra.mxu0 0.0
    %646 = vmatprep.subr.mxu0 0.0
    %647 = vmatpush2.xpose.msra.mxu0 0.0
    %648 = vmatprep.subr.mxu0 0.0
    %649 = vmatpush2.xpose.msra.mxu0 0.0
    %650 = vmatprep.subr.mxu0 0.0
    %651 = vmatpush2.xpose.msra.mxu0 0.0
    %652 = vmatprep.subr.mxu0 0.0
    %653 = vmatpush2.xpose.msra.mxu0 0.0
    %654 = vmatprep.subr.mxu0 0.0
    %655 = vmatpush2.xpose.msra.mxu0 0.0
    %656 = vmatprep.subr.mxu0 0.0
    %657 = vmatpush2.xpose.msra.mxu0 0.0
    %658 = vmatprep.subr.mxu0 0.0
    %659 = vmatpush2.xpose.msra.mxu0 0.0
    %660 = vmatprep.subr.mxu0 0.0
    %661 = vmatpush2.xpose.msra.mxu0 0.0
    %662 = vmatprep.subr.mxu0 0.0
    %663 = vmatpush2.xpose.msra.mxu0 0.0
    %664 = vmatprep.subr.mxu0 0.0
    %665 = vmatpush2.xpose.msra.mxu0 0.0
    %666 = vmatprep.subr.mxu0 0.0
    %667 = vmatpush2.xpose.msra.mxu0 0.0
    %668 = vmatprep.subr.mxu0 0.0
    %669 = vmatpush2.xpose.msra.mxu0 0.0
    %670 = vmatprep.subr.mxu0 0.0
    %671 = vmatpush2.xpose.msra.mxu0 0.0
    %672 = vmatprep.subr.mxu0 0.0
    %673 = vmatpush2.xpose.msra.mxu0 0.0
    %674 = vmatprep.subr.mxu0 0.0
    %675 = vmatpush2.xpose.msra.mxu0 0.0
    %676 = vmatprep.mubr.f32.mxu0 0.0
    %677 = vmatmul.mubr.f32.gmra.mxu0 %v608
    %v678 = vpop.f32.mrf.mxu0
    %v679 = vadd.f32 0.0, %v678
    %v680 = vpop.f32.mrf.mxu0
    %681 = vdwg.mxu0
    %v682 = vsel %vm351, %v601, -inf
    %683 = vmax.xlane.f32.xlu0 %v682
    %v684 = vpop.xlane.xlu0 %683
    %v685 = vsel %vm351, %v679, -inf
    %686 = vmax.xlane.f32.xlu0 %v685
    %v687 = vpop.xlane.xlu0 %686
    %v688 = vsub.f32 %v601, %v684
    %v689 = vsub.f32 %v679, %v687
    %v690 = vmul.f32 %v688, 1.442695
    %v691 = vpow.pop %v690
    %v692 = vmul.f32 %v689, 1.442695
    %v693 = vpow.pop %v692
    %v694 = vsel %vm351, %v691, 0.0
    %695 = vadd.xlane.f32.xlu0 %v694
    %v696 = vpop.xlane.xlu0 %695
    %v697 = vsel %vm351, %v693, 0.0
    %698 = vadd.xlane.f32.xlu0 %v697
    %v699 = vpop.xlane.xlu0 %698
    %v700 = vrcp.pop %v696
    %v701 = vmul.f32 %v691, %v700
    %v702 = vrcp.pop %v699
    %v703 = vmul.f32 %v693, %v702
    %704 = vrot.lane.b32.xlu0 %v188, 74
    %v705 = vpop.permute.xlu0 %704
    %v708 = vsel %vm351, %v701, 0
    %710 = vmatprep.subr.mxu0 0.0
    %711 = vmatpush1.msra.mxu0 0.0
    %712 = vmatprep.subr.mxu0 0.0
    %713 = vmatpush1.msra.mxu0 0.0
    %714 = vmatprep.subr.mxu0 0.0
    %715 = vmatpush1.msra.mxu0 0.0
    %716 = vmatprep.subr.mxu0 0.0
    %717 = vmatpush1.msra.mxu0 0.0
    %718 = vmatprep.subr.mxu0 0.0
    %719 = vmatpush1.msra.mxu0 0.0
    %720 = vmatprep.subr.mxu0 0.0
    %721 = vmatpush1.msra.mxu0 0.0
    %722 = vmatprep.subr.mxu0 0.0
    %723 = vmatpush1.msra.mxu0 0.0
    %724 = vmatprep.subr.mxu0 0.0
    %725 = vmatpush1.msra.mxu0 0.0
    %726 = vmatprep.subr.mxu0 0.0
    %727 = vmatpush1.msra.mxu0 0.0
    %728 = vmatprep.subr.mxu0 0.0
    %729 = vmatpush1.msra.mxu0 0.0
    %730 = vmatprep.subr.mxu0 0.0
    %731 = vmatpush1.msra.mxu0 0.0
    %732 = vmatprep.subr.mxu0 0.0
    %733 = vmatpush1.msra.mxu0 0.0
    %734 = vmatprep.subr.mxu0 0.0
    %735 = vmatpush1.msra.mxu0 0.0
    %736 = vmatprep.subr.mxu0 0.0
    %737 = vmatpush1.msra.mxu0 0.0
    %738 = vmatprep.subr.mxu0 0.0
    %739 = vmatpush1.msra.mxu0 0.0
    %740 = vmatprep.subr.mxu0 0.0
    %741 = vmatpush1.msra.mxu0 %v705
    %742 = vmatprep.subr.mxu0 0.0
    %743 = vmatpush2.msra.mxu0 0.0
    %744 = vmatprep.subr.mxu0 0.0
    %745 = vmatpush2.msra.mxu0 0.0
    %746 = vmatprep.subr.mxu0 0.0
    %747 = vmatpush2.msra.mxu0 0.0
    %748 = vmatprep.subr.mxu0 0.0
    %749 = vmatpush2.msra.mxu0 0.0
    %750 = vmatprep.subr.mxu0 0.0
    %751 = vmatpush2.msra.mxu0 0.0
    %752 = vmatprep.subr.mxu0 0.0
    %753 = vmatpush2.msra.mxu0 0.0
    %754 = vmatprep.subr.mxu0 0.0
    %755 = vmatpush2.msra.mxu0 0.0
    %756 = vmatprep.subr.mxu0 0.0
    %757 = vmatpush2.msra.mxu0 0.0
    %758 = vmatprep.subr.mxu0 0.0
    %759 = vmatpush2.msra.mxu0 0.0
    %760 = vmatprep.subr.mxu0 0.0
    %761 = vmatpush2.msra.mxu0 0.0
    %762 = vmatprep.subr.mxu0 0.0
    %763 = vmatpush2.msra.mxu0 0.0
    %764 = vmatprep.subr.mxu0 0.0
    %765 = vmatpush2.msra.mxu0 0.0
    %766 = vmatprep.subr.mxu0 0.0
    %767 = vmatpush2.msra.mxu0 0.0
    %768 = vmatprep.subr.mxu0 0.0
    %769 = vmatpush2.msra.mxu0 0.0
    %770 = vmatprep.subr.mxu0 0.0
    %771 = vmatpush2.msra.mxu0 0.0
    %772 = vmatprep.subr.mxu0 0.0
    %773 = vmatpush2.msra.mxu0 0.0
    %774 = vmatprep.mubr.f32.mxu0 0.0
    %775 = vmatmul.mubr.f32.gmra.mxu0 %v708
    %v776 = vpop.f32.mrf.mxu0
    %v777 = vadd.f32 0.0, %v776
    %v778 = vpop.f32.mrf.mxu0
    %779 = vdwg.mxu0
    %780 = vrot.lane.b32.xlu0 %v193, 74
    %v781 = vpop.permute.xlu0 %780
    %v784 = vsel %vm351, %v703, 0
    %786 = vmatprep.subr.mxu0 0.0
    %787 = vmatpush1.msra.mxu0 0.0
    %788 = vmatprep.subr.mxu0 0.0
    %789 = vmatpush1.msra.mxu0 0.0
    %790 = vmatprep.subr.mxu0 0.0
    %791 = vmatpush1.msra.mxu0 0.0
    %792 = vmatprep.subr.mxu0 0.0
    %793 = vmatpush1.msra.mxu0 0.0
    %794 = vmatprep.subr.mxu0 0.0
    %795 = vmatpush1.msra.mxu0 0.0
    %796 = vmatprep.subr.mxu0 0.0
    %797 = vmatpush1.msra.mxu0 0.0
    %798 = vmatprep.subr.mxu0 0.0
    %799 = vmatpush1.msra.mxu0 0.0
    %800 = vmatprep.subr.mxu0 0.0
    %801 = vmatpush1.msra.mxu0 0.0
    %802 = vmatprep.subr.mxu0 0.0
    %803 = vmatpush1.msra.mxu0 0.0
    %804 = vmatprep.subr.mxu0 0.0
    %805 = vmatpush1.msra.mxu0 0.0
    %806 = vmatprep.subr.mxu0 0.0
    %807 = vmatpush1.msra.mxu0 0.0
    %808 = vmatprep.subr.mxu0 0.0
    %809 = vmatpush1.msra.mxu0 0.0
    %810 = vmatprep.subr.mxu0 0.0
    %811 = vmatpush1.msra.mxu0 0.0
    %812 = vmatprep.subr.mxu0 0.0
    %813 = vmatpush1.msra.mxu0 0.0
    %814 = vmatprep.subr.mxu0 0.0
    %815 = vmatpush1.msra.mxu0 0.0
    %816 = vmatprep.subr.mxu0 0.0
    %817 = vmatpush1.msra.mxu0 %v781
    %818 = vmatprep.subr.mxu0 0.0
    %819 = vmatpush2.msra.mxu0 0.0
    %820 = vmatprep.subr.mxu0 0.0
    %821 = vmatpush2.msra.mxu0 0.0
    %822 = vmatprep.subr.mxu0 0.0
    %823 = vmatpush2.msra.mxu0 0.0
    %824 = vmatprep.subr.mxu0 0.0
    %825 = vmatpush2.msra.mxu0 0.0
    %826 = vmatprep.subr.mxu0 0.0
    %827 = vmatpush2.msra.mxu0 0.0
    %828 = vmatprep.subr.mxu0 0.0
    %829 = vmatpush2.msra.mxu0 0.0
    %830 = vmatprep.subr.mxu0 0.0
    %831 = vmatpush2.msra.mxu0 0.0
    %832 = vmatprep.subr.mxu0 0.0
    %833 = vmatpush2.msra.mxu0 0.0
    %834 = vmatprep.subr.mxu0 0.0
    %835 = vmatpush2.msra.mxu0 0.0
    %836 = vmatprep.subr.mxu0 0.0
    %837 = vmatpush2.msra.mxu0 0.0
    %838 = vmatprep.subr.mxu0 0.0
    %839 = vmatpush2.msra.mxu0 0.0
    %840 = vmatprep.subr.mxu0 0.0
    %841 = vmatpush2.msra.mxu0 0.0
    %842 = vmatprep.subr.mxu0 0.0
    %843 = vmatpush2.msra.mxu0 0.0
    %844 = vmatprep.subr.mxu0 0.0
    %845 = vmatpush2.msra.mxu0 0.0
    %846 = vmatprep.subr.mxu0 0.0
    %847 = vmatpush2.msra.mxu0 0.0
    %848 = vmatprep.subr.mxu0 0.0
    %849 = vmatpush2.msra.mxu0 0.0
    %850 = vmatprep.mubr.f32.mxu0 0.0
    %851 = vmatmul.mubr.f32.gmra.mxu0 %v784
    %v852 = vpop.f32.mrf.mxu0
    %v853 = vadd.f32 0.0, %v852
    %v854 = vpop.f32.mrf.mxu0
    %855 = vdwg.mxu0
    %856 = vrot.lane.b32.xlu0 %v188, 116
    %v857 = vpop.permute.xlu0 %856
    %858 = vrot.lane.b32.xlu0 %v188, 92
    %v859 = vpop.permute.xlu0 %858
    %v860 = vsel %vm199, %v857, 0
    %v862 = vsel %vm199, %v859, 0
    %864 = vmatprep.subr.mxu0 0.0
    %865 = vmatpush1.xpose.msra.mxu0 0.0
    %866 = vmatprep.subr.mxu0 0.0
    %867 = vmatpush1.xpose.msra.mxu0 0.0
    %868 = vmatprep.subr.mxu0 0.0
    %869 = vmatpush1.xpose.msra.mxu0 0.0
    %870 = vmatprep.subr.mxu0 0.0
    %871 = vmatpush1.xpose.msra.mxu0 0.0
    %872 = vmatprep.subr.mxu0 0.0
    %873 = vmatpush1.xpose.msra.mxu0 0.0
    %874 = vmatprep.subr.mxu0 0.0
    %875 = vmatpush1.xpose.msra.mxu0 0.0
    %876 = vmatprep.subr.mxu0 0.0
    %877 = vmatpush1.xpose.msra.mxu0 0.0
    %878 = vmatprep.subr.mxu0 0.0
    %879 = vmatpush1.xpose.msra.mxu0 0.0
    %880 = vmatprep.subr.mxu0 0.0
    %881 = vmatpush1.xpose.msra.mxu0 0.0
    %882 = vmatprep.subr.mxu0 0.0
    %883 = vmatpush1.xpose.msra.mxu0 0.0
    %884 = vmatprep.subr.mxu0 0.0
    %885 = vmatpush1.xpose.msra.mxu0 0.0
    %886 = vmatprep.subr.mxu0 0.0
    %887 = vmatpush1.xpose.msra.mxu0 0.0
    %888 = vmatprep.subr.mxu0 0.0
    %889 = vmatpush1.xpose.msra.mxu0 0.0
    %890 = vmatprep.subr.mxu0 0.0
    %891 = vmatpush1.xpose.msra.mxu0 0.0
    %892 = vmatprep.subr.mxu0 0.0
    %893 = vmatpush1.xpose.msra.mxu0 0.0
    %894 = vmatprep.subr.mxu0 0.0
    %895 = vmatpush1.xpose.msra.mxu0 %v862
    %896 = vmatprep.subr.mxu0 0.0
    %897 = vmatpush2.xpose.msra.mxu0 0.0
    %898 = vmatprep.subr.mxu0 0.0
    %899 = vmatpush2.xpose.msra.mxu0 0.0
    %900 = vmatprep.subr.mxu0 0.0
    %901 = vmatpush2.xpose.msra.mxu0 0.0
    %902 = vmatprep.subr.mxu0 0.0
    %903 = vmatpush2.xpose.msra.mxu0 0.0
    %904 = vmatprep.subr.mxu0 0.0
    %905 = vmatpush2.xpose.msra.mxu0 0.0
    %906 = vmatprep.subr.mxu0 0.0
    %907 = vmatpush2.xpose.msra.mxu0 0.0
    %908 = vmatprep.subr.mxu0 0.0
    %909 = vmatpush2.xpose.msra.mxu0 0.0
    %910 = vmatprep.subr.mxu0 0.0
    %911 = vmatpush2.xpose.msra.mxu0 0.0
    %912 = vmatprep.subr.mxu0 0.0
    %913 = vmatpush2.xpose.msra.mxu0 0.0
    %914 = vmatprep.subr.mxu0 0.0
    %915 = vmatpush2.xpose.msra.mxu0 0.0
    %916 = vmatprep.subr.mxu0 0.0
    %917 = vmatpush2.xpose.msra.mxu0 0.0
    %918 = vmatprep.subr.mxu0 0.0
    %919 = vmatpush2.xpose.msra.mxu0 0.0
    %920 = vmatprep.subr.mxu0 0.0
    %921 = vmatpush2.xpose.msra.mxu0 0.0
    %922 = vmatprep.subr.mxu0 0.0
    %923 = vmatpush2.xpose.msra.mxu0 0.0
    %924 = vmatprep.subr.mxu0 0.0
    %925 = vmatpush2.xpose.msra.mxu0 0.0
    %926 = vmatprep.subr.mxu0 0.0
    %927 = vmatpush2.xpose.msra.mxu0 0.0
    %928 = vmatprep.mubr.f32.mxu0 0.0
    %929 = vmatmul.mubr.f32.gmra.mxu0 %v860
    %v930 = vpop.f32.mrf.mxu0
    %v931 = vadd.f32 0.0, %v930
    %v932 = vpop.f32.mrf.mxu0
    %933 = vdwg.mxu0
    %934 = vrot.lane.b32.xlu0 %v193, 116
    %v935 = vpop.permute.xlu0 %934
    %936 = vrot.lane.b32.xlu0 %v193, 92
    %v937 = vpop.permute.xlu0 %936
    %v938 = vsel %vm199, %v935, 0
    %v940 = vsel %vm199, %v937, 0
    %942 = vmatprep.subr.mxu0 0.0
    %943 = vmatpush1.xpose.msra.mxu0 0.0
    %944 = vmatprep.subr.mxu0 0.0
    %945 = vmatpush1.xpose.msra.mxu0 0.0
    %946 = vmatprep.subr.mxu0 0.0
    %947 = vmatpush1.xpose.msra.mxu0 0.0
    %948 = vmatprep.subr.mxu0 0.0
    %949 = vmatpush1.xpose.msra.mxu0 0.0
    %950 = vmatprep.subr.mxu0 0.0
    %951 = vmatpush1.xpose.msra.mxu0 0.0
    %952 = vmatprep.subr.mxu0 0.0
    %953 = vmatpush1.xpose.msra.mxu0 0.0
    %954 = vmatprep.subr.mxu0 0.0
    %955 = vmatpush1.xpose.msra.mxu0 0.0
    %956 = vmatprep.subr.mxu0 0.0
    %957 = vmatpush1.xpose.msra.mxu0 0.0
    %958 = vmatprep.subr.mxu0 0.0
    %959 = vmatpush1.xpose.msra.mxu0 0.0
    %960 = vmatprep.subr.mxu0 0.0
    %961 = vmatpush1.xpose.msra.mxu0 0.0
    %962 = vmatprep.subr.mxu0 0.0
    %963 = vmatpush1.xpose.msra.mxu0 0.0
    %964 = vmatprep.subr.mxu0 0.0
    %965 = vmatpush1.xpose.msra.mxu0 0.0
    %966 = vmatprep.subr.mxu0 0.0
    %967 = vmatpush1.xpose.msra.mxu0 0.0
    %968 = vmatprep.subr.mxu0 0.0
    %969 = vmatpush1.xpose.msra.mxu0 0.0
    %970 = vmatprep.subr.mxu0 0.0
    %971 = vmatpush1.xpose.msra.mxu0 0.0
    %972 = vmatprep.subr.mxu0 0.0
    %973 = vmatpush1.xpose.msra.mxu0 %v940
    %974 = vmatprep.subr.mxu0 0.0
    %975 = vmatpush2.xpose.msra.mxu0 0.0
    %976 = vmatprep.subr.mxu0 0.0
    %977 = vmatpush2.xpose.msra.mxu0 0.0
    %978 = vmatprep.subr.mxu0 0.0
    %979 = vmatpush2.xpose.msra.mxu0 0.0
    %980 = vmatprep.subr.mxu0 0.0
    %981 = vmatpush2.xpose.msra.mxu0 0.0
    %982 = vmatprep.subr.mxu0 0.0
    %983 = vmatpush2.xpose.msra.mxu0 0.0
    %984 = vmatprep.subr.mxu0 0.0
    %985 = vmatpush2.xpose.msra.mxu0 0.0
    %986 = vmatprep.subr.mxu0 0.0
    %987 = vmatpush2.xpose.msra.mxu0 0.0
    %988 = vmatprep.subr.mxu0 0.0
    %989 = vmatpush2.xpose.msra.mxu0 0.0
    %990 = vmatprep.subr.mxu0 0.0
    %991 = vmatpush2.xpose.msra.mxu0 0.0
    %992 = vmatprep.subr.mxu0 0.0
    %993 = vmatpush2.xpose.msra.mxu0 0.0
    %994 = vmatprep.subr.mxu0 0.0
    %995 = vmatpush2.xpose.msra.mxu0 0.0
    %996 = vmatprep.subr.mxu0 0.0
    %997 = vmatpush2.xpose.msra.mxu0 0.0
    %998 = vmatprep.subr.mxu0 0.0
    %999 = vmatpush2.xpose.msra.mxu0 0.0
    %1000 = vmatprep.subr.mxu0 0.0
    %1001 = vmatpush2.xpose.msra.mxu0 0.0
    %1002 = vmatprep.subr.mxu0 0.0
    %1003 = vmatpush2.xpose.msra.mxu0 0.0
    %1004 = vmatprep.subr.mxu0 0.0
    %1005 = vmatpush2.xpose.msra.mxu0 0.0
    %1006 = vmatprep.mubr.f32.mxu0 0.0
    %1007 = vmatmul.mubr.f32.gmra.mxu0 %v938
    %v1008 = vpop.f32.mrf.mxu0
    %v1009 = vadd.f32 0.0, %v1008
    %v1010 = vpop.f32.mrf.mxu0
    %1011 = vdwg.mxu0
    %v1012 = vsel %vm351, %v931, -inf
    %1013 = vmax.xlane.f32.xlu0 %v1012
    %v1014 = vpop.xlane.xlu0 %1013
    %v1015 = vsel %vm351, %v1009, -inf
    %1016 = vmax.xlane.f32.xlu0 %v1015
    %v1017 = vpop.xlane.xlu0 %1016
    %v1018 = vsub.f32 %v931, %v1014
    %v1019 = vsub.f32 %v1009, %v1017
    %v1020 = vmul.f32 %v1018, 1.442695
    %v1021 = vpow.pop %v1020
    %v1022 = vmul.f32 %v1019, 1.442695
    %v1023 = vpow.pop %v1022
    %v1024 = vsel %vm351, %v1021, 0.0
    %1025 = vadd.xlane.f32.xlu0 %v1024
    %v1026 = vpop.xlane.xlu0 %1025
    %v1027 = vsel %vm351, %v1023, 0.0
    %1028 = vadd.xlane.f32.xlu0 %v1027
    %v1029 = vpop.xlane.xlu0 %1028
    %v1030 = vrcp.pop %v1026
    %v1031 = vmul.f32 %v1021, %v1030
    %v1032 = vrcp.pop %v1029
    %v1033 = vmul.f32 %v1023, %v1032
    %1034 = vrot.lane.b32.xlu0 %v188, 68
    %v1035 = vpop.permute.xlu0 %1034
    %v1038 = vsel %vm351, %v1031, 0
    %1040 = vmatprep.subr.mxu0 0.0
    %1041 = vmatpush1.msra.mxu0 0.0
    %1042 = vmatprep.subr.mxu0 0.0
    %1043 = vmatpush1.msra.mxu0 0.0
    %1044 = vmatprep.subr.mxu0 0.0
    %1045 = vmatpush1.msra.mxu0 0.0
    %1046 = vmatprep.subr.mxu0 0.0
    %1047 = vmatpush1.msra.mxu0 0.0
    %1048 = vmatprep.subr.mxu0 0.0
    %1049 = vmatpush1.msra.mxu0 0.0
    %1050 = vmatprep.subr.mxu0 0.0
    %1051 = vmatpush1.msra.mxu0 0.0
    %1052 = vmatprep.subr.mxu0 0.0
    %1053 = vmatpush1.msra.mxu0 0.0
    %1054 = vmatprep.subr.mxu0 0.0
    %1055 = vmatpush1.msra.mxu0 0.0
    %1056 = vmatprep.subr.mxu0 0.0
    %1057 = vmatpush1.msra.mxu0 0.0
    %1058 = vmatprep.subr.mxu0 0.0
    %1059 = vmatpush1.msra.mxu0 0.0
    %1060 = vmatprep.subr.mxu0 0.0
    %1061 = vmatpush1.msra.mxu0 0.0
    %1062 = vmatprep.subr.mxu0 0.0
    %1063 = vmatpush1.msra.mxu0 0.0
    %1064 = vmatprep.subr.mxu0 0.0
    %1065 = vmatpush1.msra.mxu0 0.0
    %1066 = vmatprep.subr.mxu0 0.0
    %1067 = vmatpush1.msra.mxu0 0.0
    %1068 = vmatprep.subr.mxu0 0.0
    %1069 = vmatpush1.msra.mxu0 0.0
    %1070 = vmatprep.subr.mxu0 0.0
    %1071 = vmatpush1.msra.mxu0 %v1035
    %1072 = vmatprep.subr.mxu0 0.0
    %1073 = vmatpush2.msra.mxu0 0.0
    %1074 = vmatprep.subr.mxu0 0.0
    %1075 = vmatpush2.msra.mxu0 0.0
    %1076 = vmatprep.subr.mxu0 0.0
    %1077 = vmatpush2.msra.mxu0 0.0
    %1078 = vmatprep.subr.mxu0 0.0
    %1079 = vmatpush2.msra.mxu0 0.0
    %1080 = vmatprep.subr.mxu0 0.0
    %1081 = vmatpush2.msra.mxu0 0.0
    %1082 = vmatprep.subr.mxu0 0.0
    %1083 = vmatpush2.msra.mxu0 0.0
    %1084 = vmatprep.subr.mxu0 0.0
    %1085 = vmatpush2.msra.mxu0 0.0
    %1086 = vmatprep.subr.mxu0 0.0
    %1087 = vmatpush2.msra.mxu0 0.0
    %1088 = vmatprep.subr.mxu0 0.0
    %1089 = vmatpush2.msra.mxu0 0.0
    %1090 = vmatprep.subr.mxu0 0.0
    %1091 = vmatpush2.msra.mxu0 0.0
    %1092 = vmatprep.subr.mxu0 0.0
    %1093 = vmatpush2.msra.mxu0 0.0
    %1094 = vmatprep.subr.mxu0 0.0
    %1095 = vmatpush2.msra.mxu0 0.0
    %1096 = vmatprep.subr.mxu0 0.0
    %1097 = vmatpush2.msra.mxu0 0.0
    %1098 = vmatprep.subr.mxu0 0.0
    %1099 = vmatpush2.msra.mxu0 0.0
    %1100 = vmatprep.subr.mxu0 0.0
    %1101 = vmatpush2.msra.mxu0 0.0
    %1102 = vmatprep.subr.mxu0 0.0
    %1103 = vmatpush2.msra.mxu0 0.0
    %1104 = vmatprep.mubr.f32.mxu0 0.0
    %1105 = vmatmul.mubr.f32.gmra.mxu0 %v1038
    %v1106 = vpop.f32.mrf.mxu0
    %v1107 = vadd.f32 0.0, %v1106
    %v1108 = vpop.f32.mrf.mxu0
    %1109 = vdwg.mxu0
    %1110 = vrot.lane.b32.xlu0 %v193, 68
    %v1111 = vpop.permute.xlu0 %1110
    %v1114 = vsel %vm351, %v1033, 0
    %1116 = vmatprep.subr.mxu0 0.0
    %1117 = vmatpush1.msra.mxu0 0.0
    %1118 = vmatprep.subr.mxu0 0.0
    %1119 = vmatpush1.msra.mxu0 0.0
    %1120 = vmatprep.subr.mxu0 0.0
    %1121 = vmatpush1.msra.mxu0 0.0
    %1122 = vmatprep.subr.mxu0 0.0
    %1123 = vmatpush1.msra.mxu0 0.0
    %1124 = vmatprep.subr.mxu0 0.0
    %1125 = vmatpush1.msra.mxu0 0.0
    %1126 = vmatprep.subr.mxu0 0.0
    %1127 = vmatpush1.msra.mxu0 0.0
    %1128 = vmatprep.subr.mxu0 0.0
    %1129 = vmatpush1.msra.mxu0 0.0
    %1130 = vmatprep.subr.mxu0 0.0
    %1131 = vmatpush1.msra.mxu0 0.0
    %1132 = vmatprep.subr.mxu0 0.0
    %1133 = vmatpush1.msra.mxu0 0.0
    %1134 = vmatprep.subr.mxu0 0.0
    %1135 = vmatpush1.msra.mxu0 0.0
    %1136 = vmatprep.subr.mxu0 0.0
    %1137 = vmatpush1.msra.mxu0 0.0
    %1138 = vmatprep.subr.mxu0 0.0
    %1139 = vmatpush1.msra.mxu0 0.0
    %1140 = vmatprep.subr.mxu0 0.0
    %1141 = vmatpush1.msra.mxu0 0.0
    %1142 = vmatprep.subr.mxu0 0.0
    %1143 = vmatpush1.msra.mxu0 0.0
    %1144 = vmatprep.subr.mxu0 0.0
    %1145 = vmatpush1.msra.mxu0 0.0
    %1146 = vmatprep.subr.mxu0 0.0
    %1147 = vmatpush1.msra.mxu0 %v1111
    %1148 = vmatprep.subr.mxu0 0.0
    %1149 = vmatpush2.msra.mxu0 0.0
    %1150 = vmatprep.subr.mxu0 0.0
    %1151 = vmatpush2.msra.mxu0 0.0
    %1152 = vmatprep.subr.mxu0 0.0
    %1153 = vmatpush2.msra.mxu0 0.0
    %1154 = vmatprep.subr.mxu0 0.0
    %1155 = vmatpush2.msra.mxu0 0.0
    %1156 = vmatprep.subr.mxu0 0.0
    %1157 = vmatpush2.msra.mxu0 0.0
    %1158 = vmatprep.subr.mxu0 0.0
    %1159 = vmatpush2.msra.mxu0 0.0
    %1160 = vmatprep.subr.mxu0 0.0
    %1161 = vmatpush2.msra.mxu0 0.0
    %1162 = vmatprep.subr.mxu0 0.0
    %1163 = vmatpush2.msra.mxu0 0.0
    %1164 = vmatprep.subr.mxu0 0.0
    %1165 = vmatpush2.msra.mxu0 0.0
    %1166 = vmatprep.subr.mxu0 0.0
    %1167 = vmatpush2.msra.mxu0 0.0
    %1168 = vmatprep.subr.mxu0 0.0
    %1169 = vmatpush2.msra.mxu0 0.0
    %1170 = vmatprep.subr.mxu0 0.0
    %1171 = vmatpush2.msra.mxu0 0.0
    %1172 = vmatprep.subr.mxu0 0.0
    %1173 = vmatpush2.msra.mxu0 0.0
    %1174 = vmatprep.subr.mxu0 0.0
    %1175 = vmatpush2.msra.mxu0 0.0
    %1176 = vmatprep.subr.mxu0 0.0
    %1177 = vmatpush2.msra.mxu0 0.0
    %1178 = vmatprep.subr.mxu0 0.0
    %1179 = vmatpush2.msra.mxu0 0.0
    %1180 = vmatprep.mubr.f32.mxu0 0.0
    %1181 = vmatmul.mubr.f32.gmra.mxu0 %v1114
    %v1182 = vpop.f32.mrf.mxu0
    %v1183 = vadd.f32 0.0, %v1182
    %v1184 = vpop.f32.mrf.mxu0
    %1185 = vdwg.mxu0
    %1186 = vrot.lane.b32.xlu0 %v188, 110
    %v1187 = vpop.permute.xlu0 %1186
    %1188 = vrot.lane.b32.xlu0 %v188, 86
    %v1189 = vpop.permute.xlu0 %1188
    %v1190 = vsel %vm199, %v1187, 0
    %v1192 = vsel %vm199, %v1189, 0
    %1194 = vmatprep.subr.mxu0 0.0
    %1195 = vmatpush1.xpose.msra.mxu0 0.0
    %1196 = vmatprep.subr.mxu0 0.0
    %1197 = vmatpush1.xpose.msra.mxu0 0.0
    %1198 = vmatprep.subr.mxu0 0.0
    %1199 = vmatpush1.xpose.msra.mxu0 0.0
    %1200 = vmatprep.subr.mxu0 0.0
    %1201 = vmatpush1.xpose.msra.mxu0 0.0
    %1202 = vmatprep.subr.mxu0 0.0
    %1203 = vmatpush1.xpose.msra.mxu0 0.0
    %1204 = vmatprep.subr.mxu0 0.0
    %1205 = vmatpush1.xpose.msra.mxu0 0.0
    %1206 = vmatprep.subr.mxu0 0.0
    %1207 = vmatpush1.xpose.msra.mxu0 0.0
    %1208 = vmatprep.subr.mxu0 0.0
    %1209 = vmatpush1.xpose.msra.mxu0 0.0
    %1210 = vmatprep.subr.mxu0 0.0
    %1211 = vmatpush1.xpose.msra.mxu0 0.0
    %1212 = vmatprep.subr.mxu0 0.0
    %1213 = vmatpush1.xpose.msra.mxu0 0.0
    %1214 = vmatprep.subr.mxu0 0.0
    %1215 = vmatpush1.xpose.msra.mxu0 0.0
    %1216 = vmatprep.subr.mxu0 0.0
    %1217 = vmatpush1.xpose.msra.mxu0 0.0
    %1218 = vmatprep.subr.mxu0 0.0
    %1219 = vmatpush1.xpose.msra.mxu0 0.0
    %1220 = vmatprep.subr.mxu0 0.0
    %1221 = vmatpush1.xpose.msra.mxu0 0.0
    %1222 = vmatprep.subr.mxu0 0.0
    %1223 = vmatpush1.xpose.msra.mxu0 0.0
    %1224 = vmatprep.subr.mxu0 0.0
    %1225 = vmatpush1.xpose.msra.mxu0 %v1192
    %1226 = vmatprep.subr.mxu0 0.0
    %1227 = vmatpush2.xpose.msra.mxu0 0.0
    %1228 = vmatprep.subr.mxu0 0.0
    %1229 = vmatpush2.xpose.msra.mxu0 0.0
    %1230 = vmatprep.subr.mxu0 0.0
    %1231 = vmatpush2.xpose.msra.mxu0 0.0
    %1232 = vmatprep.subr.mxu0 0.0
    %1233 = vmatpush2.xpose.msra.mxu0 0.0
    %1234 = vmatprep.subr.mxu0 0.0
    %1235 = vmatpush2.xpose.msra.mxu0 0.0
    %1236 = vmatprep.subr.mxu0 0.0
    %1237 = vmatpush2.xpose.msra.mxu0 0.0
    %1238 = vmatprep.subr.mxu0 0.0
    %1239 = vmatpush2.xpose.msra.mxu0 0.0
    %1240 = vmatprep.subr.mxu0 0.0
    %1241 = vmatpush2.xpose.msra.mxu0 0.0
    %1242 = vmatprep.subr.mxu0 0.0
    %1243 = vmatpush2.xpose.msra.mxu0 0.0
    %1244 = vmatprep.subr.mxu0 0.0
    %1245 = vmatpush2.xpose.msra.mxu0 0.0
    %1246 = vmatprep.subr.mxu0 0.0
    %1247 = vmatpush2.xpose.msra.mxu0 0.0
    %1248 = vmatprep.subr.mxu0 0.0
    %1249 = vmatpush2.xpose.msra.mxu0 0.0
    %1250 = vmatprep.subr.mxu0 0.0
    %1251 = vmatpush2.xpose.msra.mxu0 0.0
    %1252 = vmatprep.subr.mxu0 0.0
    %1253 = vmatpush2.xpose.msra.mxu0 0.0
    %1254 = vmatprep.subr.mxu0 0.0
    %1255 = vmatpush2.xpose.msra.mxu0 0.0
    %1256 = vmatprep.subr.mxu0 0.0
    %1257 = vmatpush2.xpose.msra.mxu0 0.0
    %1258 = vmatprep.mubr.f32.mxu0 0.0
    %1259 = vmatmul.mubr.f32.gmra.mxu0 %v1190
    %v1260 = vpop.f32.mrf.mxu0
    %v1261 = vadd.f32 0.0, %v1260
    %v1262 = vpop.f32.mrf.mxu0
    %1263 = vdwg.mxu0
    %1264 = vrot.lane.b32.xlu0 %v193, 110
    %v1265 = vpop.permute.xlu0 %1264
    %1266 = vrot.lane.b32.xlu0 %v193, 86
    %v1267 = vpop.permute.xlu0 %1266
    %v1268 = vsel %vm199, %v1265, 0
    %v1270 = vsel %vm199, %v1267, 0
    %1272 = vmatprep.subr.mxu0 0.0
    %1273 = vmatpush1.xpose.msra.mxu0 0.0
    %1274 = vmatprep.subr.mxu0 0.0
    %1275 = vmatpush1.xpose.msra.mxu0 0.0
    %1276 = vmatprep.subr.mxu0 0.0
    %1277 = vmatpush1.xpose.msra.mxu0 0.0
    %1278 = vmatprep.subr.mxu0 0.0
    %1279 = vmatpush1.xpose.msra.mxu0 0.0
    %1280 = vmatprep.subr.mxu0 0.0
    %1281 = vmatpush1.xpose.msra.mxu0 0.0
    %1282 = vmatprep.subr.mxu0 0.0
    %1283 = vmatpush1.xpose.msra.mxu0 0.0
    %1284 = vmatprep.subr.mxu0 0.0
    %1285 = vmatpush1.xpose.msra.mxu0 0.0
    %1286 = vmatprep.subr.mxu0 0.0
    %1287 = vmatpush1.xpose.msra.mxu0 0.0
    %1288 = vmatprep.subr.mxu0 0.0
    %1289 = vmatpush1.xpose.msra.mxu0 0.0
    %1290 = vmatprep.subr.mxu0 0.0
    %1291 = vmatpush1.xpose.msra.mxu0 0.0
    %1292 = vmatprep.subr.mxu0 0.0
    %1293 = vmatpush1.xpose.msra.mxu0 0.0
    %1294 = vmatprep.subr.mxu0 0.0
    %1295 = vmatpush1.xpose.msra.mxu0 0.0
    %1296 = vmatprep.subr.mxu0 0.0
    %1297 = vmatpush1.xpose.msra.mxu0 0.0
    %1298 = vmatprep.subr.mxu0 0.0
    %1299 = vmatpush1.xpose.msra.mxu0 0.0
    %1300 = vmatprep.subr.mxu0 0.0
    %1301 = vmatpush1.xpose.msra.mxu0 0.0
    %1302 = vmatprep.subr.mxu0 0.0
    %1303 = vmatpush1.xpose.msra.mxu0 %v1270
    %1304 = vmatprep.subr.mxu0 0.0
    %1305 = vmatpush2.xpose.msra.mxu0 0.0
    %1306 = vmatprep.subr.mxu0 0.0
    %1307 = vmatpush2.xpose.msra.mxu0 0.0
    %1308 = vmatprep.subr.mxu0 0.0
    %1309 = vmatpush2.xpose.msra.mxu0 0.0
    %1310 = vmatprep.subr.mxu0 0.0
    %1311 = vmatpush2.xpose.msra.mxu0 0.0
    %1312 = vmatprep.subr.mxu0 0.0
    %1313 = vmatpush2.xpose.msra.mxu0 0.0
    %1314 = vmatprep.subr.mxu0 0.0
    %1315 = vmatpush2.xpose.msra.mxu0 0.0
    %1316 = vmatprep.subr.mxu0 0.0
    %1317 = vmatpush2.xpose.msra.mxu0 0.0
    %1318 = vmatprep.subr.mxu0 0.0
    %1319 = vmatpush2.xpose.msra.mxu0 0.0
    %1320 = vmatprep.subr.mxu0 0.0
    %1321 = vmatpush2.xpose.msra.mxu0 0.0
    %1322 = vmatprep.subr.mxu0 0.0
    %1323 = vmatpush2.xpose.msra.mxu0 0.0
    %1324 = vmatprep.subr.mxu0 0.0
    %1325 = vmatpush2.xpose.msra.mxu0 0.0
    %1326 = vmatprep.subr.mxu0 0.0
    %1327 = vmatpush2.xpose.msra.mxu0 0.0
    %1328 = vmatprep.subr.mxu0 0.0
    %1329 = vmatpush2.xpose.msra.mxu0 0.0
    %1330 = vmatprep.subr.mxu0 0.0
    %1331 = vmatpush2.xpose.msra.mxu0 0.0
    %1332 = vmatprep.subr.mxu0 0.0
    %1333 = vmatpush2.xpose.msra.mxu0 0.0
    %1334 = vmatprep.subr.mxu0 0.0
    %1335 = vmatpush2.xpose.msra.mxu0 0.0
    %1336 = vmatprep.mubr.f32.mxu0 0.0
    %1337 = vmatmul.mubr.f32.gmra.mxu0 %v1268
    %v1338 = vpop.f32.mrf.mxu0
    %v1339 = vadd.f32 0.0, %v1338
    %v1340 = vpop.f32.mrf.mxu0
    %1341 = vdwg.mxu0
    %v1342 = vsel %vm351, %v1261, -inf
    %1343 = vmax.xlane.f32.xlu0 %v1342
    %v1344 = vpop.xlane.xlu0 %1343
    %v1345 = vsel %vm351, %v1339, -inf
    %1346 = vmax.xlane.f32.xlu0 %v1345
    %v1347 = vpop.xlane.xlu0 %1346
    %v1348 = vsub.f32 %v1261, %v1344
    %v1349 = vsub.f32 %v1339, %v1347
    %v1350 = vmul.f32 %v1348, 1.442695
    %v1351 = vpow.pop %v1350
    %v1352 = vmul.f32 %v1349, 1.442695
    %v1353 = vpow.pop %v1352
    %v1354 = vsel %vm351, %v1351, 0.0
    %1355 = vadd.xlane.f32.xlu0 %v1354
    %v1356 = vpop.xlane.xlu0 %1355
    %v1357 = vsel %vm351, %v1353, 0.0
    %1358 = vadd.xlane.f32.xlu0 %v1357
    %v1359 = vpop.xlane.xlu0 %1358
    %v1360 = vrcp.pop %v1356
    %v1361 = vmul.f32 %v1351, %v1360
    %v1362 = vrcp.pop %v1359
    %v1363 = vmul.f32 %v1353, %v1362
    %1364 = vrot.lane.b32.xlu0 %v188, 62
    %v1365 = vpop.permute.xlu0 %1364
    %v1368 = vsel %vm351, %v1361, 0
    %1370 = vmatprep.subr.mxu0 0.0
    %1371 = vmatpush1.msra.mxu0 0.0
    %1372 = vmatprep.subr.mxu0 0.0
    %1373 = vmatpush1.msra.mxu0 0.0
    %1374 = vmatprep.subr.mxu0 0.0
    %1375 = vmatpush1.msra.mxu0 0.0
    %1376 = vmatprep.subr.mxu0 0.0
    %1377 = vmatpush1.msra.mxu0 0.0
    %1378 = vmatprep.subr.mxu0 0.0
    %1379 = vmatpush1.msra.mxu0 0.0
    %1380 = vmatprep.subr.mxu0 0.0
    %1381 = vmatpush1.msra.mxu0 0.0
    %1382 = vmatprep.subr.mxu0 0.0
    %1383 = vmatpush1.msra.mxu0 0.0
    %1384 = vmatprep.subr.mxu0 0.0
    %1385 = vmatpush1.msra.mxu0 0.0
    %1386 = vmatprep.subr.mxu0 0.0
    %1387 = vmatpush1.msra.mxu0 0.0
    %1388 = vmatprep.subr.mxu0 0.0
    %1389 = vmatpush1.msra.mxu0 0.0
    %1390 = vmatprep.subr.mxu0 0.0
    %1391 = vmatpush1.msra.mxu0 0.0
    %1392 = vmatprep.subr.mxu0 0.0
    %1393 = vmatpush1.msra.mxu0 0.0
    %1394 = vmatprep.subr.mxu0 0.0
    %1395 = vmatpush1.msra.mxu0 0.0
    %1396 = vmatprep.subr.mxu0 0.0
    %1397 = vmatpush1.msra.mxu0 0.0
    %1398 = vmatprep.subr.mxu0 0.0
    %1399 = vmatpush1.msra.mxu0 0.0
    %1400 = vmatprep.subr.mxu0 0.0
    %1401 = vmatpush1.msra.mxu0 %v1365
    %1402 = vmatprep.subr.mxu0 0.0
    %1403 = vmatpush2.msra.mxu0 0.0
    %1404 = vmatprep.subr.mxu0 0.0
    %1405 = vmatpush2.msra.mxu0 0.0
    %1406 = vmatprep.subr.mxu0 0.0
    %1407 = vmatpush2.msra.mxu0 0.0
    %1408 = vmatprep.subr.mxu0 0.0
    %1409 = vmatpush2.msra.mxu0 0.0
    %1410 = vmatprep.subr.mxu0 0.0
    %1411 = vmatpush2.msra.mxu0 0.0
    %1412 = vmatprep.subr.mxu0 0.0
    %1413 = vmatpush2.msra.mxu0 0.0
    %1414 = vmatprep.subr.mxu0 0.0
    %1415 = vmatpush2.msra.mxu0 0.0
    %1416 = vmatprep.subr.mxu0 0.0
    %1417 = vmatpush2.msra.mxu0 0.0
    %1418 = vmatprep.subr.mxu0 0.0
    %1419 = vmatpush2.msra.mxu0 0.0
    %1420 = vmatprep.subr.mxu0 0.0
    %1421 = vmatpush2.msra.mxu0 0.0
    %1422 = vmatprep.subr.mxu0 0.0
    %1423 = vmatpush2.msra.mxu0 0.0
    %1424 = vmatprep.subr.mxu0 0.0
    %1425 = vmatpush2.msra.mxu0 0.0
    %1426 = vmatprep.subr.mxu0 0.0
    %1427 = vmatpush2.msra.mxu0 0.0
    %1428 = vmatprep.subr.mxu0 0.0
    %1429 = vmatpush2.msra.mxu0 0.0
    %1430 = vmatprep.subr.mxu0 0.0
    %1431 = vmatpush2.msra.mxu0 0.0
    %1432 = vmatprep.subr.mxu0 0.0
    %1433 = vmatpush2.msra.mxu0 0.0
    %1434 = vmatprep.mubr.f32.mxu0 0.0
    %1435 = vmatmul.mubr.f32.gmra.mxu0 %v1368
    %v1436 = vpop.f32.mrf.mxu0
    %v1437 = vadd.f32 0.0, %v1436
    %v1438 = vpop.f32.mrf.mxu0
    %1439 = vdwg.mxu0
    %1440 = vrot.lane.b32.xlu0 %v193, 62
    %v1441 = vpop.permute.xlu0 %1440
    %v1444 = vsel %vm351, %v1363, 0
    %1446 = vmatprep.subr.mxu0 0.0
    %1447 = vmatpush1.msra.mxu0 0.0
    %1448 = vmatprep.subr.mxu0 0.0
    %1449 = vmatpush1.msra.mxu0 0.0
    %1450 = vmatprep.subr.mxu0 0.0
    %1451 = vmatpush1.msra.mxu0 0.0
    %1452 = vmatprep.subr.mxu0 0.0
    %1453 = vmatpush1.msra.mxu0 0.0
    %1454 = vmatprep.subr.mxu0 0.0
    %1455 = vmatpush1.msra.mxu0 0.0
    %1456 = vmatprep.subr.mxu0 0.0
    %1457 = vmatpush1.msra.mxu0 0.0
    %1458 = vmatprep.subr.mxu0 0.0
    %1459 = vmatpush1.msra.mxu0 0.0
    %1460 = vmatprep.subr.mxu0 0.0
    %1461 = vmatpush1.msra.mxu0 0.0
    %1462 = vmatprep.subr.mxu0 0.0
    %1463 = vmatpush1.msra.mxu0 0.0
    %1464 = vmatprep.subr.mxu0 0.0
    %1465 = vmatpush1.msra.mxu0 0.0
    %1466 = vmatprep.subr.mxu0 0.0
    %1467 = vmatpush1.msra.mxu0 0.0
    %1468 = vmatprep.subr.mxu0 0.0
    %1469 = vmatpush1.msra.mxu0 0.0
    %1470 = vmatprep.subr.mxu0 0.0
    %1471 = vmatpush1.msra.mxu0 0.0
    %1472 = vmatprep.subr.mxu0 0.0
    %1473 = vmatpush1.msra.mxu0 0.0
    %1474 = vmatprep.subr.mxu0 0.0
    %1475 = vmatpush1.msra.mxu0 0.0
    %1476 = vmatprep.subr.mxu0 0.0
    %1477 = vmatpush1.msra.mxu0 %v1441
    %1478 = vmatprep.subr.mxu0 0.0
    %1479 = vmatpush2.msra.mxu0 0.0
    %1480 = vmatprep.subr.mxu0 0.0
    %1481 = vmatpush2.msra.mxu0 0.0
    %1482 = vmatprep.subr.mxu0 0.0
    %1483 = vmatpush2.msra.mxu0 0.0
    %1484 = vmatprep.subr.mxu0 0.0
    %1485 = vmatpush2.msra.mxu0 0.0
    %1486 = vmatprep.subr.mxu0 0.0
    %1487 = vmatpush2.msra.mxu0 0.0
    %1488 = vmatprep.subr.mxu0 0.0
    %1489 = vmatpush2.msra.mxu0 0.0
    %1490 = vmatprep.subr.mxu0 0.0
    %1491 = vmatpush2.msra.mxu0 0.0
    %1492 = vmatprep.subr.mxu0 0.0
    %1493 = vmatpush2.msra.mxu0 0.0
    %1494 = vmatprep.subr.mxu0 0.0
    %1495 = vmatpush2.msra.mxu0 0.0
    %1496 = vmatprep.subr.mxu0 0.0
    %1497 = vmatpush2.msra.mxu0 0.0
    %1498 = vmatprep.subr.mxu0 0.0
    %1499 = vmatpush2.msra.mxu0 0.0
    %1500 = vmatprep.subr.mxu0 0.0
    %1501 = vmatpush2.msra.mxu0 0.0
    %1502 = vmatprep.subr.mxu0 0.0
    %1503 = vmatpush2.msra.mxu0 0.0
    %1504 = vmatprep.subr.mxu0 0.0
    %1505 = vmatpush2.msra.mxu0 0.0
    %1506 = vmatprep.subr.mxu0 0.0
    %1507 = vmatpush2.msra.mxu0 0.0
    %1508 = vmatprep.subr.mxu0 0.0
    %1509 = vmatpush2.msra.mxu0 0.0
    %1510 = vmatprep.mubr.f32.mxu0 0.0
    %1511 = vmatmul.mubr.f32.gmra.mxu0 %v1444
    %v1512 = vpop.f32.mrf.mxu0
    %v1513 = vadd.f32 0.0, %v1512
    %v1514 = vpop.f32.mrf.mxu0
    %1515 = vdwg.mxu0
    %1518 = vrot.lane.b32.xlu0 %v777, 6
    %v1519 = vpop.permute.xlu0 %1518
    %1520 = vrot.lane.b32.xlu0 %v853, 6
    %v1521 = vpop.permute.xlu0 %1520
    %1526 = vrot.lane.b32.xlu0 %v1107, 12
    %v1527 = vpop.permute.xlu0 %1526
    %1528 = vrot.lane.b32.xlu0 %v1183, 12
    %v1529 = vpop.permute.xlu0 %1528
    %1534 = vrot.lane.b32.xlu0 %v1437, 18
    %v1535 = vpop.permute.xlu0 %1534
    %1536 = vrot.lane.b32.xlu0 %v1513, 18
    %v1537 = vpop.permute.xlu0 %1536
    %v1540 = vsel %vm199, %v447, %v1519
    %v1541 = vsel %vm199, %v523, %v1521
    %vm1542 = vcmask 97280
    %v1543 = vsel %vm1542, %v1540, %v1527
    %v1544 = vsel %vm1542, %v1541, %v1529
    %vm1545 = vcmask 146432
    %v1546 = vsel %vm1545, %v1543, %v1535
    %v1547 = vsel %vm1545, %v1544, %v1537
    %v1548 = vld [vmem:[#allocation6 + $0x38] sm:$0xff]
    %v1549 = vld [vmem:[#allocation6 + $0x40] sm:$0xff]
    %v1550 = vld [vmem:[#allocation6 + $0x48] sm:$0xff]
    %v1552 = vsel %vm67, %v1546, 0
    %v1555 = vsel %vm67, %v1547, 0
    %1557 = vmatprep.subr.mxu0 0.0
    %1558 = vmatpush1.msra.mxu0 0.0
    %1559 = vmatprep.subr.mxu0 0.0
    %1560 = vmatpush1.msra.mxu0 0.0
    %1561 = vmatprep.subr.mxu0 0.0
    %1562 = vmatpush1.msra.mxu0 0.0
    %1563 = vmatprep.subr.mxu0 0.0
    %1564 = vmatpush1.msra.mxu0 0.0
    %1565 = vmatprep.subr.mxu0 0.0
    %1566 = vmatpush1.msra.mxu0 0.0
    %1567 = vmatprep.subr.mxu0 0.0
    %1568 = vmatpush1.msra.mxu0 0.0
    %1569 = vmatprep.subr.mxu0 0.0
    %1570 = vmatpush1.msra.mxu0 0.0
    %1571 = vmatprep.subr.mxu0 0.0
    %1572 = vmatpush1.msra.mxu0 0.0
    %1573 = vmatprep.subr.mxu0 0.0
    %1574 = vmatpush1.msra.mxu0 0.0
    %1575 = vmatprep.subr.mxu0 0.0
    %1576 = vmatpush1.msra.mxu0 0.0
    %1577 = vmatprep.subr.mxu0 0.0
    %1578 = vmatpush1.msra.mxu0 0.0
    %1579 = vmatprep.subr.mxu0 0.0
    %1580 = vmatpush1.msra.mxu0 0.0
    %1581 = vmatprep.subr.mxu0 0.0
    %1582 = vmatpush1.msra.mxu0 0.0
    %1583 = vmatprep.subr.mxu0 0.0
    %1584 = vmatpush1.msra.mxu0 %v1550
    %1585 = vmatprep.subr.mxu0 0.0
    %1586 = vmatpush1.msra.mxu0 %v1549
    %1587 = vmatprep.subr.mxu0 0.0
    %1588 = vmatpush1.msra.mxu0 %v1548
    %1589 = vmatprep.subr.mxu0 0.0
    %1590 = vmatpush2.msra.mxu0 0.0
    %1591 = vmatprep.subr.mxu0 0.0
    %1592 = vmatpush2.msra.mxu0 0.0
    %1593 = vmatprep.subr.mxu0 0.0
    %1594 = vmatpush2.msra.mxu0 0.0
    %1595 = vmatprep.subr.mxu0 0.0
    %1596 = vmatpush2.msra.mxu0 0.0
    %1597 = vmatprep.subr.mxu0 0.0
    %1598 = vmatpush2.msra.mxu0 0.0
    %1599 = vmatprep.subr.mxu0 0.0
    %1600 = vmatpush2.msra.mxu0 0.0
    %1601 = vmatprep.subr.mxu0 0.0
    %1602 = vmatpush2.msra.mxu0 0.0
    %1603 = vmatprep.subr.mxu0 0.0
    %1604 = vmatpush2.msra.mxu0 0.0
    %1605 = vmatprep.subr.mxu0 0.0
    %1606 = vmatpush2.msra.mxu0 0.0
    %1607 = vmatprep.subr.mxu0 0.0
    %1608 = vmatpush2.msra.mxu0 0.0
    %1609 = vmatprep.subr.mxu0 0.0
    %1610 = vmatpush2.msra.mxu0 0.0
    %1611 = vmatprep.subr.mxu0 0.0
    %1612 = vmatpush2.msra.mxu0 0.0
    %1613 = vmatprep.subr.mxu0 0.0
    %1614 = vmatpush2.msra.mxu0 0.0
    %1615 = vmatprep.subr.mxu0 0.0
    %1616 = vmatpush2.msra.mxu0 0.0
    %1617 = vmatprep.subr.mxu0 0.0
    %1618 = vmatpush2.msra.mxu0 0.0
    %1619 = vmatprep.subr.mxu0 0.0
    %1620 = vmatpush2.msra.mxu0 0.0
    %1621 = vmatprep.mubr.f32.mxu0 0.0
    %1622 = vmatmul.mubr.f32.gmra.mxu0 %v1552
    %v1623 = vpop.f32.mrf.mxu0
    %v1624 = vadd.f32 0.0, %v1623
    %v1625 = vpop.f32.mrf.mxu0
    %1626 = vmatprep.mubr.f32.mxu0 0.0
    %1627 = vmatmul.mubr.f32.gmra.mxu0 %v1555
    %v1628 = vpop.f32.mrf.mxu0
    %v1629 = vadd.f32 0.0, %v1628
    %v1630 = vpop.f32.mrf.mxu0
    %1631 = vdwg.mxu0
    %v1632 = vadd.f32 %v63, %v1624
    %v1633 = vadd.f32 %v64, %v1629
    %v1634 = vld [vmem:[#allocation6 + $0x50] sm:$0x1]
    %v1635 = vlaneseq
    %v1636 = vshrl.u32 %v1635, 7
    %v1637 = vsub.s32 0, %v1636
    %v1638 = vrot.slane %v1634, %v1637
    %v1639 = vadd.f32 %v1632, %v1638
    %v1640 = vadd.f32 %v1633, %v1638
    %v1641 = vld [vmem:[#allocation6 + $0x58] sm:$0x1]
    %v1642 = vld [vmem:[#allocation6 + $0x60] sm:$0x1]
    %v1643 = vsel %vm67, %v1639, 0.0
    %1644 = vadd.xlane.f32.xlu0 %v1643
    %v1645 = vpop.xlane.xlu0 %1644
    %v1646 = vsel %vm67, %v1640, 0.0
    %1647 = vadd.xlane.f32.xlu0 %v1646
    %v1648 = vpop.xlane.xlu0 %1647
    %v1649 = vmul.f32 %v1645, %v74
    %v1650 = vmul.f32 %v1648, %v74
    %v1651 = vsub.f32 %v1639, %v1649
    %v1652 = vsub.f32 %v1640, %v1650
    %v1653 = vmul.f32 %v1651, %v1651
    %v1654 = vmul.f32 %v1652, %v1652
    %v1655 = vsel %vm67, %v1653, 0.0
    %1656 = vadd.xlane.f32.xlu0 %v1655
    %v1657 = vpop.xlane.xlu0 %1656
    %v1658 = vsel %vm67, %v1654, 0.0
    %1659 = vadd.xlane.f32.xlu0 %v1658
    %v1660 = vpop.xlane.xlu0 %1659
    %v1661 = vmul.f32 %v1657, %v74
    %v1662 = vmul.f32 %v1660, %v74
    %v1663 = vadd.f32 %v1661, 1e-05
    %v1664 = vadd.f32 %v1662, 1e-05
    %v1665 = vrsqrt.pop %v1663
    %v1666 = vrsqrt.pop %v1664
    %v1667 = vmul.f32 %v1651, %v1665
    %v1668 = vmul.f32 %v1652, %v1666
    %v1669 = vlaneseq
    %v1670 = vshrl.u32 %v1669, 7
    %v1671 = vsub.s32 0, %v1670
    %v1672 = vrot.slane %v1641, %v1671
    %v1673 = vmul.f32 %v1667, %v1672
    %v1674 = vmul.f32 %v1668, %v1672
    %v1675 = vlaneseq
    %v1676 = vshrl.u32 %v1675, 7
    %v1677 = vsub.s32 0, %v1676
    %v1678 = vrot.slane %v1642, %v1677
    %v1679 = vadd.f32 %v1673, %v1678
    %v1680 = vadd.f32 %v1674, %v1678
    %v1681 = vld [vmem:[#allocation6 + $0x68] sm:$0xff]
    %v1682 = vld [vmem:[#allocation6 + $0x70] sm:$0xff]
    %v1683 = vld [vmem:[#allocation6 + $0x78] sm:$0xff]
    %v1684 = vld [vmem:[#allocation6 + $0x80] sm:$0x1]
    %v1685 = vlaneseq
    %v1686 = vshrl.u32 %v1685, 7
    %v1687 = vsub.s32 0, %v1686
    %v1688 = vrot.slane %v1684, %v1687
    %v1690 = vsel %vm67, %v1679, 0
    %v1693 = vsel %vm67, %v1680, 0
    %1695 = vmatprep.subr.mxu0 0.0
    %1696 = vmatpush1.msra.mxu0 0.0
    %1697 = vmatprep.subr.mxu0 0.0
    %1698 = vmatpush1.msra.mxu0 0.0
    %1699 = vmatprep.subr.mxu0 0.0
    %1700 = vmatpush1.msra.mxu0 0.0
    %1701 = vmatprep.subr.mxu0 0.0
    %1702 = vmatpush1.msra.mxu0 0.0
    %1703 = vmatprep.subr.mxu0 0.0
    %1704 = vmatpush1.msra.mxu0 0.0
    %1705 = vmatprep.subr.mxu0 0.0
    %1706 = vmatpush1.msra.mxu0 0.0
    %1707 = vmatprep.subr.mxu0 0.0
    %1708 = vmatpush1.msra.mxu0 0.0
    %1709 = vmatprep.subr.mxu0 0.0
    %1710 = vmatpush1.msra.mxu0 0.0
    %1711 = vmatprep.subr.mxu0 0.0
    %1712 = vmatpush1.msra.mxu0 0.0
    %1713 = vmatprep.subr.mxu0 0.0
    %1714 = vmatpush1.msra.mxu0 0.0
    %1715 = vmatprep.subr.mxu0 0.0
    %1716 = vmatpush1.msra.mxu0 0.0
    %1717 = vmatprep.subr.mxu0 0.0
    %1718 = vmatpush1.msra.mxu0 0.0
    %1719 = vmatprep.subr.mxu0 0.0
    %1720 = vmatpush1.msra.mxu0 0.0
    %1721 = vmatprep.subr.mxu0 0.0
    %1722 = vmatpush1.msra.mxu0 %v1683
    %1723 = vmatprep.subr.mxu0 0.0
    %1724 = vmatpush1.msra.mxu0 %v1682
    %1725 = vmatprep.subr.mxu0 0.0
    %1726 = vmatpush1.msra.mxu0 %v1681
    %1727 = vmatprep.subr.mxu0 0.0
    %1728 = vmatpush2.msra.mxu0 0.0
    %1729 = vmatprep.subr.mxu0 0.0
    %1730 = vmatpush2.msra.mxu0 0.0
    %1731 = vmatprep.subr.mxu0 0.0
    %1732 = vmatpush2.msra.mxu0 0.0
    %1733 = vmatprep.subr.mxu0 0.0
    %1734 = vmatpush2.msra.mxu0 0.0
    %1735 = vmatprep.subr.mxu0 0.0
    %1736 = vmatpush2.msra.mxu0 0.0
    %1737 = vmatprep.subr.mxu0 0.0
    %1738 = vmatpush2.msra.mxu0 0.0
    %1739 = vmatprep.subr.mxu0 0.0
    %1740 = vmatpush2.msra.mxu0 0.0
    %1741 = vmatprep.subr.mxu0 0.0
    %1742 = vmatpush2.msra.mxu0 0.0
    %1743 = vmatprep.subr.mxu0 0.0
    %1744 = vmatpush2.msra.mxu0 0.0
    %1745 = vmatprep.subr.mxu0 0.0
    %1746 = vmatpush2.msra.mxu0 0.0
    %1747 = vmatprep.subr.mxu0 0.0
    %1748 = vmatpush2.msra.mxu0 0.0
    %1749 = vmatprep.subr.mxu0 0.0
    %1750 = vmatpush2.msra.mxu0 0.0
    %1751 = vmatprep.subr.mxu0 0.0
    %1752 = vmatpush2.msra.mxu0 0.0
    %1753 = vmatprep.subr.mxu0 0.0
    %1754 = vmatpush2.msra.mxu0 0.0
    %1755 = vmatprep.subr.mxu0 0.0
    %1756 = vmatpush2.msra.mxu0 0.0
    %1757 = vmatprep.subr.mxu0 0.0
    %1758 = vmatpush2.msra.mxu0 0.0
    %1759 = vmatprep.mubr.f32.mxu0 0.0
    %1760 = vmatmul.mubr.f32.gmra.mxu0 %v1690
    %v1761 = vpop.f32.mrf.mxu0
    %v1762 = vadd.f32 %v1688, %v1761
    %v1763 = vpop.f32.mrf.mxu0
    %1764 = vmatprep.mubr.f32.mxu0 0.0
    %1765 = vmatmul.mubr.f32.gmra.mxu0 %v1693
    %v1766 = vpop.f32.mrf.mxu0
    %v1767 = vadd.f32 %v1688, %v1766
    %v1768 = vpop.f32.mrf.mxu0
    %1769 = vdwg.mxu0
    %v1770 = vmax.f32 %v1762, 0.0
    %v1771 = vmax.f32 %v1767, 0.0
    %v1772 = vld [vmem:[#allocation6 + $0x88] sm:$0xff]
    %v1773 = vld [vmem:[#allocation6 + $0x90] sm:$0xff]
    %v1774 = vld [vmem:[#allocation6 + $0x98] sm:$0xff]
    %v1775 = vld [vmem:[#allocation6 + $0xa0] sm:$0xff]
    %v1776 = vld [vmem:[#allocation6 + $0xa8] sm:$0xff]
    %v1777 = vld [vmem:[#allocation6 + $0xb0] sm:$0xff]
    %v1778 = vld [vmem:[#allocation6 + $0xb8] sm:$0xff]
    %v1779 = vld [vmem:[#allocation6 + $0xc0] sm:$0xff]
    %v1780 = vld [vmem:[#allocation6 + $0xc8] sm:$0xff]
    %v1781 = vld [vmem:[#allocation6 + $0xd0] sm:$0xff]
    %v1782 = vld [vmem:[#allocation6 + $0xd8] sm:$0xff]
    %v1783 = vld [vmem:[#allocation6 + $0xe0] sm:$0xff]
    %vm1784 = vcmask 785408
    %v1786 = vsel %vm1784, %v1770, 0
    %v1789 = vsel %vm1784, %v1771, 0
    %1791 = vmatprep.subr.mxu0 0.0
    %1792 = vmatpush1.msra.mxu0 0.0
    %1793 = vmatprep.subr.mxu0 0.0
    %1794 = vmatpush1.msra.mxu0 0.0
    %1795 = vmatprep.subr.mxu0 0.0
    %1796 = vmatpush1.msra.mxu0 0.0
    %1797 = vmatprep.subr.mxu0 0.0
    %1798 = vmatpush1.msra.mxu0 0.0
    %1799 = vmatprep.subr.mxu0 0.0
    %1800 = vmatpush1.msra.mxu0 %v1783
    %1801 = vmatprep.subr.mxu0 0.0
    %1802 = vmatpush1.msra.mxu0 %v1782
    %1803 = vmatprep.subr.mxu0 0.0
    %1804 = vmatpush1.msra.mxu0 %v1781
    %1805 = vmatprep.subr.mxu0 0.0
    %1806 = vmatpush1.msra.mxu0 %v1780
    %1807 = vmatprep.subr.mxu0 0.0
    %1808 = vmatpush1.msra.mxu0 %v1779
    %1809 = vmatprep.subr.mxu0 0.0
    %1810 = vmatpush1.msra.mxu0 %v1778
    %1811 = vmatprep.subr.mxu0 0.0
    %1812 = vmatpush1.msra.mxu0 %v1777
    %1813 = vmatprep.subr.mxu0 0.0
    %1814 = vmatpush1.msra.mxu0 %v1776
    %1815 = vmatprep.subr.mxu0 0.0
    %1816 = vmatpush1.msra.mxu0 %v1775
    %1817 = vmatprep.subr.mxu0 0.0
    %1818 = vmatpush1.msra.mxu0 %v1774
    %1819 = vmatprep.subr.mxu0 0.0
    %1820 = vmatpush1.msra.mxu0 %v1773
    %1821 = vmatprep.subr.mxu0 0.0
    %1822 = vmatpush1.msra.mxu0 %v1772
    %1823 = vmatprep.subr.mxu0 0.0
    %1824 = vmatpush2.msra.mxu0 0.0
    %1825 = vmatprep.subr.mxu0 0.0
    %1826 = vmatpush2.msra.mxu0 0.0
    %1827 = vmatprep.subr.mxu0 0.0
    %1828 = vmatpush2.msra.mxu0 0.0
    %1829 = vmatprep.subr.mxu0 0.0
    %1830 = vmatpush2.msra.mxu0 0.0
    %1831 = vmatprep.subr.mxu0 0.0
    %1832 = vmatpush2.msra.mxu0 0.0
    %1833 = vmatprep.subr.mxu0 0.0
    %1834 = vmatpush2.msra.mxu0 0.0
    %1835 = vmatprep.subr.mxu0 0.0
    %1836 = vmatpush2.msra.mxu0 0.0
    %1837 = vmatprep.subr.mxu0 0.0
    %1838 = vmatpush2.msra.mxu0 0.0
    %1839 = vmatprep.subr.mxu0 0.0
    %1840 = vmatpush2.msra.mxu0 0.0
    %1841 = vmatprep.subr.mxu0 0.0
    %1842 = vmatpush2.msra.mxu0 0.0
    %1843 = vmatprep.subr.mxu0 0.0
    %1844 = vmatpush2.msra.mxu0 0.0
    %1845 = vmatprep.subr.mxu0 0.0
    %1846 = vmatpush2.msra.mxu0 0.0
    %1847 = vmatprep.subr.mxu0 0.0
    %1848 = vmatpush2.msra.mxu0 0.0
    %1849 = vmatprep.subr.mxu0 0.0
    %1850 = vmatpush2.msra.mxu0 0.0
    %1851 = vmatprep.subr.mxu0 0.0
    %1852 = vmatpush2.msra.mxu0 0.0
    %1853 = vmatprep.subr.mxu0 0.0
    %1854 = vmatpush2.msra.mxu0 0.0
    %1855 = vmatprep.mubr.f32.mxu0 0.0
    %1856 = vmatmul.mubr.f32.gmra.mxu0 %v1786
    %v1857 = vpop.f32.mrf.mxu0
    %v1858 = vadd.f32 0.0, %v1857
    %v1859 = vpop.f32.mrf.mxu0
    %1860 = vmatprep.mubr.f32.mxu0 0.0
    %1861 = vmatmul.mubr.f32.gmra.mxu0 %v1789
    %v1862 = vpop.f32.mrf.mxu0
    %v1863 = vadd.f32 0.0, %v1862
    %v1864 = vpop.f32.mrf.mxu0
    %1865 = vdwg.mxu0
    %v1866 = vadd.f32 %v1639, %v1858
    %v1867 = vadd.f32 %v1640, %v1863
    %v1868 = vld [vmem:[#allocation6 + $0xe8] sm:$0x1]
    %v1869 = vlaneseq
    %v1870 = vshrl.u32 %v1869, 7
    %v1871 = vsub.s32 0, %v1870
    %v1872 = vrot.slane %v1868, %v1871
    %v1873 = vadd.f32 %v1866, %v1872
    %v1874 = vadd.f32 %v1867, %v1872
    %v1875 = vld [vmem:[#allocation6 + $0xf0] sm:$0x1]
    %v1876 = vld [vmem:[#allocation6 + $0xf8] sm:$0x1]
    %v1877 = vsel %vm67, %v1873, 0.0
    %1878 = vadd.xlane.f32.xlu0 %v1877
    %v1879 = vpop.xlane.xlu0 %1878
    %v1880 = vsel %vm67, %v1874, 0.0
    %1881 = vadd.xlane.f32.xlu0 %v1880
    %v1882 = vpop.xlane.xlu0 %1881
    %v1883 = vmul.f32 %v1879, %v74
    %v1884 = vmul.f32 %v1882, %v74
    %v1885 = vsub.f32 %v1873, %v1883
    %v1886 = vsub.f32 %v1874, %v1884
    %v1887 = vmul.f32 %v1885, %v1885
    %v1888 = vmul.f32 %v1886, %v1886
    %v1889 = vsel %vm67, %v1887, 0.0
    %1890 = vadd.xlane.f32.xlu0 %v1889
    %v1891 = vpop.xlane.xlu0 %1890
    %v1892 = vsel %vm67, %v1888, 0.0
    %1893 = vadd.xlane.f32.xlu0 %v1892
    %v1894 = vpop.xlane.xlu0 %1893
    %v1895 = vmul.f32 %v1891, %v74
    %v1896 = vmul.f32 %v1894, %v74
    %v1897 = vadd.f32 %v1895, 1e-05
    %v1898 = vadd.f32 %v1896, 1e-05
    %v1899 = vrsqrt.pop %v1897
    %v1900 = vrsqrt.pop %v1898
    %v1901 = vmul.f32 %v1885, %v1899
    %v1902 = vmul.f32 %v1886, %v1900
    %v1903 = vlaneseq
    %v1904 = vshrl.u32 %v1903, 7
    %v1905 = vsub.s32 0, %v1904
    %v1906 = vrot.slane %v1875, %v1905
    %v1907 = vmul.f32 %v1901, %v1906
    %v1908 = vmul.f32 %v1902, %v1906
    %v1909 = vlaneseq
    %v1910 = vshrl.u32 %v1909, 7
    %v1911 = vsub.s32 0, %v1910
    %v1912 = vrot.slane %v1876, %v1911
    %v1913 = vadd.f32 %v1907, %v1912
    %v1914 = vadd.f32 %v1908, %v1912
    %v1915 = vsel %vm67, %v1913, 0.0
    %v1916 = vrot.slane %v1915, 4
    %v1917 = vadd.f32 %v1915, %v1916
    %v1918 = vrot.slane %v1917, 2
    %v1919 = vadd.f32 %v1917, %v1918
    %v1920 = vrot.slane %v1919, 1
    %v1921 = vadd.f32 %v1919, %v1920
    %v1922 = vsel %vm67, %v1914, 0.0
    %v1923 = vrot.slane %v1922, 4
    %v1924 = vadd.f32 %v1922, %v1923
    %v1925 = vrot.slane %v1924, 2
    %v1926 = vadd.f32 %v1924, %v1925
    %v1927 = vrot.slane %v1926, 1
    %v1928 = vadd.f32 %v1926, %v1927
    %v1929 = vrcp.pop 8.0
    %v1930 = vmul.f32 %v1921, %v1929
    %v1931 = vmul.f32 %v1928, %v1929
    %v1932 = vld [vmem:[#allocation6 + $0x1c8] sm:$0xff]
    %v1933 = vld [vmem:[#allocation6 + $0x1d0] sm:$0xff]
    %v1934 = vld [vmem:[#allocation6 + $0x1d8] sm:$0xff]
    %v1935 = vld [vmem:[#allocation6 + $0x1e0] sm:$0x1]
    %v1936 = vlaneseq
    %v1937 = vshrl.u32 %v1936, 7
    %v1938 = vsub.s32 0, %v1937
    %v1939 = vrot.slane %v1935, %v1938
    %vm1942 = vcmask 1041409
    %v1943 = vsel %vm1942, %v1931, %v1930
    %v1944 = vsel %vm67, %v1943, 0
    %1946 = vmatprep.subr.mxu0 0.0
    %1947 = vmatpush1.msra.mxu0 0.0
    %1948 = vmatprep.subr.mxu0 0.0
    %1949 = vmatpush1.msra.mxu0 0.0
    %1950 = vmatprep.subr.mxu0 0.0
    %1951 = vmatpush1.msra.mxu0 0.0
    %1952 = vmatprep.subr.mxu0 0.0
    %1953 = vmatpush1.msra.mxu0 0.0
    %1954 = vmatprep.subr.mxu0 0.0
    %1955 = vmatpush1.msra.mxu0 0.0
    %1956 = vmatprep.subr.mxu0 0.0
    %1957 = vmatpush1.msra.mxu0 0.0
    %1958 = vmatprep.subr.mxu0 0.0
    %1959 = vmatpush1.msra.mxu0 0.0
    %1960 = vmatprep.subr.mxu0 0.0
    %1961 = vmatpush1.msra.mxu0 0.0
    %1962 = vmatprep.subr.mxu0 0.0
    %1963 = vmatpush1.msra.mxu0 0.0
    %1964 = vmatprep.subr.mxu0 0.0
    %1965 = vmatpush1.msra.mxu0 0.0
    %1966 = vmatprep.subr.mxu0 0.0
    %1967 = vmatpush1.msra.mxu0 0.0
    %1968 = vmatprep.subr.mxu0 0.0
    %1969 = vmatpush1.msra.mxu0 0.0
    %1970 = vmatprep.subr.mxu0 0.0
    %1971 = vmatpush1.msra.mxu0 0.0
    %1972 = vmatprep.subr.mxu0 0.0
    %1973 = vmatpush1.msra.mxu0 %v1934
    %1974 = vmatprep.subr.mxu0 0.0
    %1975 = vmatpush1.msra.mxu0 %v1933
    %1976 = vmatprep.subr.mxu0 0.0
    %1977 = vmatpush1.msra.mxu0 %v1932
    %1978 = vmatprep.subr.mxu0 0.0
    %1979 = vmatpush2.msra.mxu0 0.0
    %1980 = vmatprep.subr.mxu0 0.0
    %1981 = vmatpush2.msra.mxu0 0.0
    %1982 = vmatprep.subr.mxu0 0.0
    %1983 = vmatpush2.msra.mxu0 0.0
    %1984 = vmatprep.subr.mxu0 0.0
    %1985 = vmatpush2.msra.mxu0 0.0
    %1986 = vmatprep.subr.mxu0 0.0
    %1987 = vmatpush2.msra.mxu0 0.0
    %1988 = vmatprep.subr.mxu0 0.0
    %1989 = vmatpush2.msra.mxu0 0.0
    %1990 = vmatprep.subr.mxu0 0.0
    %1991 = vmatpush2.msra.mxu0 0.0
    %1992 = vmatprep.subr.mxu0 0.0
    %1993 = vmatpush2.msra.mxu0 0.0
    %1994 = vmatprep.subr.mxu0 0.0
    %1995 = vmatpush2.msra.mxu0 0.0
    %1996 = vmatprep.subr.mxu0 0.0
    %1997 = vmatpush2.msra.mxu0 0.0
    %1998 = vmatprep.subr.mxu0 0.0
    %1999 = vmatpush2.msra.mxu0 0.0
    %2000 = vmatprep.subr.mxu0 0.0
    %2001 = vmatpush2.msra.mxu0 0.0
    %2002 = vmatprep.subr.mxu0 0.0
    %2003 = vmatpush2.msra.mxu0 0.0
    %2004 = vmatprep.subr.mxu0 0.0
    %2005 = vmatpush2.msra.mxu0 0.0
    %2006 = vmatprep.subr.mxu0 0.0
    %2007 = vmatpush2.msra.mxu0 0.0
    %2008 = vmatprep.subr.mxu0 0.0
    %2009 = vmatpush2.msra.mxu0 0.0
    %2010 = vmatprep.mubr.f32.mxu0 0.0
    %2011 = vmatmul.mubr.f32.gmra.mxu0 %v1944
    %v2012 = vpop.f32.mrf.mxu0
    %v2013 = vadd.f32 %v1939, %v2012
    %v2014 = vpop.f32.mrf.mxu0
    %2015 = vdwg.mxu0
    %v2016 = vld [vmem:[#allocation4] sm:$0xff]
    %v2017 = vld [vmem:[#allocation4 + $0x8] sm:$0xff]
    %v2018 = vld [vmem:[#allocation6 + $0x100] sm:$0xff]
    %v2019 = vmul.f32 %v2016, 4.0
    %v2020 = vmul.f32 %v2017, 4.0
    %v2021 = vadd.f32 %v2019, %v2018
    %v2022 = vadd.f32 %v2020, %v2018
    %v2023 = vld [vmem:[#allocation6 + $0x108] sm:$0x1]
    %v2024 = vld [vmem:[#allocation6 + $0x110] sm:$0x1]
    %vm2025 = vcmask 130048
    %v2026 = vsel %vm2025, %v2021, 0.0
    %2027 = vadd.xlane.f32.xlu0 %v2026
    %v2028 = vpop.xlane.xlu0 %2027
    %v2029 = vsel %vm2025, %v2022, 0.0
    %2030 = vadd.xlane.f32.xlu0 %v2029
    %v2031 = vpop.xlane.xlu0 %2030
    %v2032 = vrcp.pop 16.0
    %v2033 = vmul.f32 %v2028, %v2032
    %v2034 = vmul.f32 %v2031, %v2032
    %v2035 = vsub.f32 %v2021, %v2033
    %v2036 = vsub.f32 %v2022, %v2034
    %v2037 = vmul.f32 %v2035, %v2035
    %v2038 = vmul.f32 %v2036, %v2036
    %v2039 = vsel %vm2025, %v2037, 0.0
    %2040 = vadd.xlane.f32.xlu0 %v2039
    %v2041 = vpop.xlane.xlu0 %2040
    %v2042 = vsel %vm2025, %v2038, 0.0
    %2043 = vadd.xlane.f32.xlu0 %v2042
    %v2044 = vpop.xlane.xlu0 %2043
    %v2045 = vmul.f32 %v2041, %v2032
    %v2046 = vmul.f32 %v2044, %v2032
    %v2047 = vadd.f32 %v2045, 1e-05
    %v2048 = vadd.f32 %v2046, 1e-05
    %v2049 = vrsqrt.pop %v2047
    %v2050 = vrsqrt.pop %v2048
    %v2051 = vmul.f32 %v2035, %v2049
    %v2052 = vmul.f32 %v2036, %v2050
    %v2053 = vlaneseq
    %v2054 = vshrl.u32 %v2053, 7
    %v2055 = vsub.s32 0, %v2054
    %v2056 = vrot.slane %v2023, %v2055
    %v2057 = vmul.f32 %v2051, %v2056
    %v2058 = vmul.f32 %v2052, %v2056
    %v2059 = vlaneseq
    %v2060 = vshrl.u32 %v2059, 7
    %v2061 = vsub.s32 0, %v2060
    %v2062 = vrot.slane %v2024, %v2061
    %v2063 = vadd.f32 %v2057, %v2062
    %v2064 = vadd.f32 %v2058, %v2062
    %v2065 = vld [vmem:[#allocation6 + $0x118] sm:$0xff]
    %v2066 = vld [vmem:[#allocation6 + $0x120] sm:$0xff]
    %v2067 = vld [vmem:[#allocation6 + $0x128] sm:$0x1]
    %v2068 = vlaneseq
    %v2069 = vshrl.u32 %v2068, 7
    %v2070 = vsub.s32 0, %v2069
    %v2071 = vrot.slane %v2067, %v2070
    %v2073 = vsel %vm2025, %v2063, 0
    %v2076 = vsel %vm2025, %v2064, 0
    %2078 = vmatprep.subr.mxu0 0.0
    %2079 = vmatpush1.msra.mxu0 0.0
    %2080 = vmatprep.subr.mxu0 0.0
    %2081 = vmatpush1.msra.mxu0 0.0
    %2082 = vmatprep.subr.mxu0 0.0
    %2083 = vmatpush1.msra.mxu0 0.0
    %2084 = vmatprep.subr.mxu0 0.0
    %2085 = vmatpush1.msra.mxu0 0.0
    %2086 = vmatprep.subr.mxu0 0.0
    %2087 = vmatpush1.msra.mxu0 0.0
    %2088 = vmatprep.subr.mxu0 0.0
    %2089 = vmatpush1.msra.mxu0 0.0
    %2090 = vmatprep.subr.mxu0 0.0
    %2091 = vmatpush1.msra.mxu0 0.0
    %2092 = vmatprep.subr.mxu0 0.0
    %2093 = vmatpush1.msra.mxu0 0.0
    %2094 = vmatprep.subr.mxu0 0.0
    %2095 = vmatpush1.msra.mxu0 0.0
    %2096 = vmatprep.subr.mxu0 0.0
    %2097 = vmatpush1.msra.mxu0 0.0
    %2098 = vmatprep.subr.mxu0 0.0
    %2099 = vmatpush1.msra.mxu0 0.0
    %2100 = vmatprep.subr.mxu0 0.0
    %2101 = vmatpush1.msra.mxu0 0.0
    %2102 = vmatprep.subr.mxu0 0.0
    %2103 = vmatpush1.msra.mxu0 0.0
    %2104 = vmatprep.subr.mxu0 0.0
    %2105 = vmatpush1.msra.mxu0 0.0
    %2106 = vmatprep.subr.mxu0 0.0
    %2107 = vmatpush1.msra.mxu0 %v2066
    %2108 = vmatprep.subr.mxu0 0.0
    %2109 = vmatpush1.msra.mxu0 %v2065
    %2110 = vmatprep.subr.mxu0 0.0
    %2111 = vmatpush2.msra.mxu0 0.0
    %2112 = vmatprep.subr.mxu0 0.0
    %2113 = vmatpush2.msra.mxu0 0.0
    %2114 = vmatprep.subr.mxu0 0.0
    %2115 = vmatpush2.msra.mxu0 0.0
    %2116 = vmatprep.subr.mxu0 0.0
    %2117 = vmatpush2.msra.mxu0 0.0
    %2118 = vmatprep.subr.mxu0 0.0
    %2119 = vmatpush2.msra.mxu0 0.0
    %2120 = vmatprep.subr.mxu0 0.0
    %2121 = vmatpush2.msra.mxu0 0.0
    %2122 = vmatprep.subr.mxu0 0.0
    %2123 = vmatpush2.msra.mxu0 0.0
    %2124 = vmatprep.subr.mxu0 0.0
    %2125 = vmatpush2.msra.mxu0 0.0
    %2126 = vmatprep.subr.mxu0 0.0
    %2127 = vmatpush2.msra.mxu0 0.0
    %2128 = vmatprep.subr.mxu0 0.0
    %2129 = vmatpush2.msra.mxu0 0.0
    %2130 = vmatprep.subr.mxu0 0.0
    %2131 = vmatpush2.msra.mxu0 0.0
    %2132 = vmatprep.subr.mxu0 0.0
    %2133 = vmatpush2.msra.mxu0 0.0
    %2134 = vmatprep.subr.mxu0 0.0
    %2135 = vmatpush2.msra.mxu0 0.0
    %2136 = vmatprep.subr.mxu0 0.0
    %2137 = vmatpush2.msra.mxu0 0.0
    %2138 = vmatprep.subr.mxu0 0.0
    %2139 = vmatpush2.msra.mxu0 0.0
    %2140 = vmatprep.subr.mxu0 0.0
    %2141 = vmatpush2.msra.mxu0 0.0
    %2142 = vmatprep.mubr.f32.mxu0 0.0
    %2143 = vmatmul.mubr.f32.gmra.mxu0 %v2073
    %v2144 = vpop.f32.mrf.mxu0
    %v2145 = vadd.f32 %v2071, %v2144
    %v2146 = vpop.f32.mrf.mxu0
    %2147 = vmatprep.mubr.f32.mxu0 0.0
    %2148 = vmatmul.mubr.f32.gmra.mxu0 %v2076
    %v2149 = vpop.f32.mrf.mxu0
    %v2150 = vadd.f32 %v2071, %v2149
    %v2151 = vpop.f32.mrf.mxu0
    %2152 = vdwg.mxu0
    %2154 = vrot.lane.b32.xlu0 %v2145, 112
    %v2155 = vpop.permute.xlu0 %2154
    %vm2156 = vcmask 31744
    %v2157 = vsel %vm2156, %v2145, 0
    %v2159 = vsel %vm2156, %v2155, 0
    %2161 = vmatprep.subr.mxu0 0.0
    %2162 = vmatpush1.xpose.msra.mxu0 0.0
    %2163 = vmatprep.subr.mxu0 0.0
    %2164 = vmatpush1.xpose.msra.mxu0 0.0
    %2165 = vmatprep.subr.mxu0 0.0
    %2166 = vmatpush1.xpose.msra.mxu0 0.0
    %2167 = vmatprep.subr.mxu0 0.0
    %2168 = vmatpush1.xpose.msra.mxu0 0.0
    %2169 = vmatprep.subr.mxu0 0.0
    %2170 = vmatpush1.xpose.msra.mxu0 0.0
    %2171 = vmatprep.subr.mxu0 0.0
    %2172 = vmatpush1.xpose.msra.mxu0 0.0
    %2173 = vmatprep.subr.mxu0 0.0
    %2174 = vmatpush1.xpose.msra.mxu0 0.0
    %2175 = vmatprep.subr.mxu0 0.0
    %2176 = vmatpush1.xpose.msra.mxu0 0.0
    %2177 = vmatprep.subr.mxu0 0.0
    %2178 = vmatpush1.xpose.msra.mxu0 0.0
    %2179 = vmatprep.subr.mxu0 0.0
    %2180 = vmatpush1.xpose.msra.mxu0 0.0
    %2181 = vmatprep.subr.mxu0 0.0
    %2182 = vmatpush1.xpose.msra.mxu0 0.0
    %2183 = vmatprep.subr.mxu0 0.0
    %2184 = vmatpush1.xpose.msra.mxu0 0.0
    %2185 = vmatprep.subr.mxu0 0.0
    %2186 = vmatpush1.xpose.msra.mxu0 0.0
    %2187 = vmatprep.subr.mxu0 0.0
    %2188 = vmatpush1.xpose.msra.mxu0 0.0
    %2189 = vmatprep.subr.mxu0 0.0
    %2190 = vmatpush1.xpose.msra.mxu0 0.0
    %2191 = vmatprep.subr.mxu0 0.0
    %2192 = vmatpush1.xpose.msra.mxu0 %v2159
    %2193 = vmatprep.subr.mxu0 0.0
    %2194 = vmatpush2.xpose.msra.mxu0 0.0
    %2195 = vmatprep.subr.mxu0 0.0
    %2196 = vmatpush2.xpose.msra.mxu0 0.0
    %2197 = vmatprep.subr.mxu0 0.0
    %2198 = vmatpush2.xpose.msra.mxu0 0.0
    %2199 = vmatprep.subr.mxu0 0.0
    %2200 = vmatpush2.xpose.msra.mxu0 0.0
    %2201 = vmatprep.subr.mxu0 0.0
    %2202 = vmatpush2.xpose.msra.mxu0 0.0
    %2203 = vmatprep.subr.mxu0 0.0
    %2204 = vmatpush2.xpose.msra.mxu0 0.0
    %2205 = vmatprep.subr.mxu0 0.0
    %2206 = vmatpush2.xpose.msra.mxu0 0.0
    %2207 = vmatprep.subr.mxu0 0.0
    %2208 = vmatpush2.xpose.msra.mxu0 0.0
    %2209 = vmatprep.subr.mxu0 0.0
    %2210 = vmatpush2.xpose.msra.mxu0 0.0
    %2211 = vmatprep.subr.mxu0 0.0
    %2212 = vmatpush2.xpose.msra.mxu0 0.0
    %2213 = vmatprep.subr.mxu0 0.0
    %2214 = vmatpush2.xpose.msra.mxu0 0.0
    %2215 = vmatprep.subr.mxu0 0.0
    %2216 = vmatpush2.xpose.msra.mxu0 0.0
    %2217 = vmatprep.subr.mxu0 0.0
    %2218 = vmatpush2.xpose.msra.mxu0 0.0
    %2219 = vmatprep.subr.mxu0 0.0
    %2220 = vmatpush2.xpose.msra.mxu0 0.0
    %2221 = vmatprep.subr.mxu0 0.0
    %2222 = vmatpush2.xpose.msra.mxu0 0.0
    %2223 = vmatprep.subr.mxu0 0.0
    %2224 = vmatpush2.xpose.msra.mxu0 0.0
    %2225 = vmatprep.mubr.f32.mxu0 0.0
    %2226 = vmatmul.mubr.f32.gmra.mxu0 %v2157
    %v2227 = vpop.f32.mrf.mxu0
    %v2228 = vadd.f32 0.0, %v2227
    %v2229 = vpop.f32.mrf.mxu0
    %2230 = vdwg.mxu0
    %2232 = vrot.lane.b32.xlu0 %v2150, 112
    %v2233 = vpop.permute.xlu0 %2232
    %v2234 = vsel %vm2156, %v2150, 0
    %v2236 = vsel %vm2156, %v2233, 0
    %2238 = vmatprep.subr.mxu0 0.0
    %2239 = vmatpush1.xpose.msra.mxu0 0.0
    %2240 = vmatprep.subr.mxu0 0.0
    %2241 = vmatpush1.xpose.msra.mxu0 0.0
    %2242 = vmatprep.subr.mxu0 0.0
    %2243 = vmatpush1.xpose.msra.mxu0 0.0
    %2244 = vmatprep.subr.mxu0 0.0
    %2245 = vmatpush1.xpose.msra.mxu0 0.0
    %2246 = vmatprep.subr.mxu0 0.0
    %2247 = vmatpush1.xpose.msra.mxu0 0.0
    %2248 = vmatprep.subr.mxu0 0.0
    %2249 = vmatpush1.xpose.msra.mxu0 0.0
    %2250 = vmatprep.subr.mxu0 0.0
    %2251 = vmatpush1.xpose.msra.mxu0 0.0
    %2252 = vmatprep.subr.mxu0 0.0
    %2253 = vmatpush1.xpose.msra.mxu0 0.0
    %2254 = vmatprep.subr.mxu0 0.0
    %2255 = vmatpush1.xpose.msra.mxu0 0.0
    %2256 = vmatprep.subr.mxu0 0.0
    %2257 = vmatpush1.xpose.msra.mxu0 0.0
    %2258 = vmatprep.subr.mxu0 0.0
    %2259 = vmatpush1.xpose.msra.mxu0 0.0
    %2260 = vmatprep.subr.mxu0 0.0
    %2261 = vmatpush1.xpose.msra.mxu0 0.0
    %2262 = vmatprep.subr.mxu0 0.0
    %2263 = vmatpush1.xpose.msra.mxu0 0.0
    %2264 = vmatprep.subr.mxu0 0.0
    %2265 = vmatpush1.xpose.msra.mxu0 0.0
    %2266 = vmatprep.subr.mxu0 0.0
    %2267 = vmatpush1.xpose.msra.mxu0 0.0
    %2268 = vmatprep.subr.mxu0 0.0
    %2269 = vmatpush1.xpose.msra.mxu0 %v2236
    %2270 = vmatprep.subr.mxu0 0.0
    %2271 = vmatpush2.xpose.msra.mxu0 0.0
    %2272 = vmatprep.subr.mxu0 0.0
    %2273 = vmatpush2.xpose.msra.mxu0 0.0
    %2274 = vmatprep.subr.mxu0 0.0
    %2275 = vmatpush2.xpose.msra.mxu0 0.0
    %2276 = vmatprep.subr.mxu0 0.0
    %2277 = vmatpush2.xpose.msra.mxu0 0.0
    %2278 = vmatprep.subr.mxu0 0.0
    %2279 = vmatpush2.xpose.msra.mxu0 0.0
    %2280 = vmatprep.subr.mxu0 0.0
    %2281 = vmatpush2.xpose.msra.mxu0 0.0
    %2282 = vmatprep.subr.mxu0 0.0
    %2283 = vmatpush2.xpose.msra.mxu0 0.0
    %2284 = vmatprep.subr.mxu0 0.0
    %2285 = vmatpush2.xpose.msra.mxu0 0.0
    %2286 = vmatprep.subr.mxu0 0.0
    %2287 = vmatpush2.xpose.msra.mxu0 0.0
    %2288 = vmatprep.subr.mxu0 0.0
    %2289 = vmatpush2.xpose.msra.mxu0 0.0
    %2290 = vmatprep.subr.mxu0 0.0
    %2291 = vmatpush2.xpose.msra.mxu0 0.0
    %2292 = vmatprep.subr.mxu0 0.0
    %2293 = vmatpush2.xpose.msra.mxu0 0.0
    %2294 = vmatprep.subr.mxu0 0.0
    %2295 = vmatpush2.xpose.msra.mxu0 0.0
    %2296 = vmatprep.subr.mxu0 0.0
    %2297 = vmatpush2.xpose.msra.mxu0 0.0
    %2298 = vmatprep.subr.mxu0 0.0
    %2299 = vmatpush2.xpose.msra.mxu0 0.0
    %2300 = vmatprep.subr.mxu0 0.0
    %2301 = vmatpush2.xpose.msra.mxu0 0.0
    %2302 = vmatprep.mubr.f32.mxu0 0.0
    %2303 = vmatmul.mubr.f32.gmra.mxu0 %v2234
    %v2304 = vpop.f32.mrf.mxu0
    %v2305 = vadd.f32 0.0, %v2304
    %v2306 = vpop.f32.mrf.mxu0
    %2307 = vdwg.mxu0
    %v2308 = vsel %vm351, %v2228, -inf
    %2309 = vmax.xlane.f32.xlu0 %v2308
    %v2310 = vpop.xlane.xlu0 %2309
    %v2311 = vsel %vm351, %v2305, -inf
    %2312 = vmax.xlane.f32.xlu0 %v2311
    %v2313 = vpop.xlane.xlu0 %2312
    %v2314 = vsub.f32 %v2228, %v2310
    %v2315 = vsub.f32 %v2305, %v2313
    %v2316 = vmul.f32 %v2314, 1.442695
    %v2317 = vpow.pop %v2316
    %v2318 = vmul.f32 %v2315, 1.442695
    %v2319 = vpow.pop %v2318
    %v2320 = vsel %vm351, %v2317, 0.0
    %2321 = vadd.xlane.f32.xlu0 %v2320
    %v2322 = vpop.xlane.xlu0 %2321
    %v2323 = vsel %vm351, %v2319, 0.0
    %2324 = vadd.xlane.f32.xlu0 %v2323
    %v2325 = vpop.xlane.xlu0 %2324
    %v2326 = vrcp.pop %v2322
    %v2327 = vmul.f32 %v2317, %v2326
    %v2328 = vrcp.pop %v2325
    %v2329 = vmul.f32 %v2319, %v2328
    %2330 = vrot.lane.b32.xlu0 %v2145, 96
    %v2331 = vpop.permute.xlu0 %2330
    %v2334 = vsel %vm351, %v2327, 0
    %2336 = vmatprep.subr.mxu0 0.0
    %2337 = vmatpush1.msra.mxu0 0.0
    %2338 = vmatprep.subr.mxu0 0.0
    %2339 = vmatpush1.msra.mxu0 0.0
    %2340 = vmatprep.subr.mxu0 0.0
    %2341 = vmatpush1.msra.mxu0 0.0
    %2342 = vmatprep.subr.mxu0 0.0
    %2343 = vmatpush1.msra.mxu0 0.0
    %2344 = vmatprep.subr.mxu0 0.0
    %2345 = vmatpush1.msra.mxu0 0.0
    %2346 = vmatprep.subr.mxu0 0.0
    %2347 = vmatpush1.msra.mxu0 0.0
    %2348 = vmatprep.subr.mxu0 0.0
    %2349 = vmatpush1.msra.mxu0 0.0
    %2350 = vmatprep.subr.mxu0 0.0
    %2351 = vmatpush1.msra.mxu0 0.0
    %2352 = vmatprep.subr.mxu0 0.0
    %2353 = vmatpush1.msra.mxu0 0.0
    %2354 = vmatprep.subr.mxu0 0.0
    %2355 = vmatpush1.msra.mxu0 0.0
    %2356 = vmatprep.subr.mxu0 0.0
    %2357 = vmatpush1.msra.mxu0 0.0
    %2358 = vmatprep.subr.mxu0 0.0
    %2359 = vmatpush1.msra.mxu0 0.0
    %2360 = vmatprep.subr.mxu0 0.0
    %2361 = vmatpush1.msra.mxu0 0.0
    %2362 = vmatprep.subr.mxu0 0.0
    %2363 = vmatpush1.msra.mxu0 0.0
    %2364 = vmatprep.subr.mxu0 0.0
    %2365 = vmatpush1.msra.mxu0 0.0
    %2366 = vmatprep.subr.mxu0 0.0
    %2367 = vmatpush1.msra.mxu0 %v2331
    %2368 = vmatprep.subr.mxu0 0.0
    %2369 = vmatpush2.msra.mxu0 0.0
    %2370 = vmatprep.subr.mxu0 0.0
    %2371 = vmatpush2.msra.mxu0 0.0
    %2372 = vmatprep.subr.mxu0 0.0
    %2373 = vmatpush2.msra.mxu0 0.0
    %2374 = vmatprep.subr.mxu0 0.0
    %2375 = vmatpush2.msra.mxu0 0.0
    %2376 = vmatprep.subr.mxu0 0.0
    %2377 = vmatpush2.msra.mxu0 0.0
    %2378 = vmatprep.subr.mxu0 0.0
    %2379 = vmatpush2.msra.mxu0 0.0
    %2380 = vmatprep.subr.mxu0 0.0
    %2381 = vmatpush2.msra.mxu0 0.0
    %2382 = vmatprep.subr.mxu0 0.0
    %2383 = vmatpush2.msra.mxu0 0.0
    %2384 = vmatprep.subr.mxu0 0.0
    %2385 = vmatpush2.msra.mxu0 0.0
    %2386 = vmatprep.subr.mxu0 0.0
    %2387 = vmatpush2.msra.mxu0 0.0
    %2388 = vmatprep.subr.mxu0 0.0
    %2389 = vmatpush2.msra.mxu0 0.0
    %2390 = vmatprep.subr.mxu0 0.0
    %2391 = vmatpush2.msra.mxu0 0.0
    %2392 = vmatprep.subr.mxu0 0.0
    %2393 = vmatpush2.msra.mxu0 0.0
    %2394 = vmatprep.subr.mxu0 0.0
    %2395 = vmatpush2.msra.mxu0 0.0
    %2396 = vmatprep.subr.mxu0 0.0
    %2397 = vmatpush2.msra.mxu0 0.0
    %2398 = vmatprep.subr.mxu0 0.0
    %2399 = vmatpush2.msra.mxu0 0.0
    %2400 = vmatprep.mubr.f32.mxu0 0.0
    %2401 = vmatmul.mubr.f32.gmra.mxu0 %v2334
    %v2402 = vpop.f32.mrf.mxu0
    %v2403 = vadd.f32 0.0, %v2402
    %v2404 = vpop.f32.mrf.mxu0
    %2405 = vdwg.mxu0
    %2406 = vrot.lane.b32.xlu0 %v2150, 96
    %v2407 = vpop.permute.xlu0 %2406
    %v2410 = vsel %vm351, %v2329, 0
    %2412 = vmatprep.subr.mxu0 0.0
    %2413 = vmatpush1.msra.mxu0 0.0
    %2414 = vmatprep.subr.mxu0 0.0
    %2415 = vmatpush1.msra.mxu0 0.0
    %2416 = vmatprep.subr.mxu0 0.0
    %2417 = vmatpush1.msra.mxu0 0.0
    %2418 = vmatprep.subr.mxu0 0.0
    %2419 = vmatpush1.msra.mxu0 0.0
    %2420 = vmatprep.subr.mxu0 0.0
    %2421 = vmatpush1.msra.mxu0 0.0
    %2422 = vmatprep.subr.mxu0 0.0
    %2423 = vmatpush1.msra.mxu0 0.0
    %2424 = vmatprep.subr.mxu0 0.0
    %2425 = vmatpush1.msra.mxu0 0.0
    %2426 = vmatprep.subr.mxu0 0.0
    %2427 = vmatpush1.msra.mxu0 0.0
    %2428 = vmatprep.subr.mxu0 0.0
    %2429 = vmatpush1.msra.mxu0 0.0
    %2430 = vmatprep.subr.mxu0 0.0
    %2431 = vmatpush1.msra.mxu0 0.0
    %2432 = vmatprep.subr.mxu0 0.0
    %2433 = vmatpush1.msra.mxu0 0.0
    %2434 = vmatprep.subr.mxu0 0.0
    %2435 = vmatpush1.msra.mxu0 0.0
    %2436 = vmatprep.subr.mxu0 0.0
    %2437 = vmatpush1.msra.mxu0 0.0
    %2438 = vmatprep.subr.mxu0 0.0
    %2439 = vmatpush1.msra.mxu0 0.0
    %2440 = vmatprep.subr.mxu0 0.0
    %2441 = vmatpush1.msra.mxu0 0.0
    %2442 = vmatprep.subr.mxu0 0.0
    %2443 = vmatpush1.msra.mxu0 %v2407
    %2444 = vmatprep.subr.mxu0 0.0
    %2445 = vmatpush2.msra.mxu0 0.0
    %2446 = vmatprep.subr.mxu0 0.0
    %2447 = vmatpush2.msra.mxu0 0.0
    %2448 = vmatprep.subr.mxu0 0.0
    %2449 = vmatpush2.msra.mxu0 0.0
    %2450 = vmatprep.subr.mxu0 0.0
    %2451 = vmatpush2.msra.mxu0 0.0
    %2452 = vmatprep.subr.mxu0 0.0
    %2453 = vmatpush2.msra.mxu0 0.0
    %2454 = vmatprep.subr.mxu0 0.0
    %2455 = vmatpush2.msra.mxu0 0.0
    %2456 = vmatprep.subr.mxu0 0.0
    %2457 = vmatpush2.msra.mxu0 0.0
    %2458 = vmatprep.subr.mxu0 0.0
    %2459 = vmatpush2.msra.mxu0 0.0
    %2460 = vmatprep.subr.mxu0 0.0
    %2461 = vmatpush2.msra.mxu0 0.0
    %2462 = vmatprep.subr.mxu0 0.0
    %2463 = vmatpush2.msra.mxu0 0.0
    %2464 = vmatprep.subr.mxu0 0.0
    %2465 = vmatpush2.msra.mxu0 0.0
    %2466 = vmatprep.subr.mxu0 0.0
    %2467 = vmatpush2.msra.mxu0 0.0
    %2468 = vmatprep.subr.mxu0 0.0
    %2469 = vmatpush2.msra.mxu0 0.0
    %2470 = vmatprep.subr.mxu0 0.0
    %2471 = vmatpush2.msra.mxu0 0.0
    %2472 = vmatprep.subr.mxu0 0.0
    %2473 = vmatpush2.msra.mxu0 0.0
    %2474 = vmatprep.subr.mxu0 0.0
    %2475 = vmatpush2.msra.mxu0 0.0
    %2476 = vmatprep.mubr.f32.mxu0 0.0
    %2477 = vmatmul.mubr.f32.gmra.mxu0 %v2410
    %v2478 = vpop.f32.mrf.mxu0
    %v2479 = vadd.f32 0.0, %v2478
    %v2480 = vpop.f32.mrf.mxu0
    %2481 = vdwg.mxu0
    %2482 = vrot.lane.b32.xlu0 %v2145, 124
    %v2483 = vpop.permute.xlu0 %2482
    %2484 = vrot.lane.b32.xlu0 %v2145, 108
    %v2485 = vpop.permute.xlu0 %2484
    %v2486 = vsel %vm2156, %v2483, 0
    %v2488 = vsel %vm2156, %v2485, 0
    %2490 = vmatprep.subr.mxu0 0.0
    %2491 = vmatpush1.xpose.msra.mxu0 0.0
    %2492 = vmatprep.subr.mxu0 0.0
    %2493 = vmatpush1.xpose.msra.mxu0 0.0
    %2494 = vmatprep.subr.mxu0 0.0
    %2495 = vmatpush1.xpose.msra.mxu0 0.0
    %2496 = vmatprep.subr.mxu0 0.0
    %2497 = vmatpush1.xpose.msra.mxu0 0.0
    %2498 = vmatprep.subr.mxu0 0.0
    %2499 = vmatpush1.xpose.msra.mxu0 0.0
    %2500 = vmatprep.subr.mxu0 0.0
    %2501 = vmatpush1.xpose.msra.mxu0 0.0
    %2502 = vmatprep.subr.mxu0 0.0
    %2503 = vmatpush1.xpose.msra.mxu0 0.0
    %2504 = vmatprep.subr.mxu0 0.0
    %2505 = vmatpush1.xpose.msra.mxu0 0.0
    %2506 = vmatprep.subr.mxu0 0.0
    %2507 = vmatpush1.xpose.msra.mxu0 0.0
    %2508 = vmatprep.subr.mxu0 0.0
    %2509 = vmatpush1.xpose.msra.mxu0 0.0
    %2510 = vmatprep.subr.mxu0 0.0
    %2511 = vmatpush1.xpose.msra.mxu0 0.0
    %2512 = vmatprep.subr.mxu0 0.0
    %2513 = vmatpush1.xpose.msra.mxu0 0.0
    %2514 = vmatprep.subr.mxu0 0.0
    %2515 = vmatpush1.xpose.msra.mxu0 0.0
    %2516 = vmatprep.subr.mxu0 0.0
    %2517 = vmatpush1.xpose.msra.mxu0 0.0
    %2518 = vmatprep.subr.mxu0 0.0
    %2519 = vmatpush1.xpose.msra.mxu0 0.0
    %2520 = vmatprep.subr.mxu0 0.0
    %2521 = vmatpush1.xpose.msra.mxu0 %v2488
    %2522 = vmatprep.subr.mxu0 0.0
    %2523 = vmatpush2.xpose.msra.mxu0 0.0
    %2524 = vmatprep.subr.mxu0 0.0
    %2525 = vmatpush2.xpose.msra.mxu0 0.0
    %2526 = vmatprep.subr.mxu0 0.0
    %2527 = vmatpush2.xpose.msra.mxu0 0.0
    %2528 = vmatprep.subr.mxu0 0.0
    %2529 = vmatpush2.xpose.msra.mxu0 0.0
    %2530 = vmatprep.subr.mxu0 0.0
    %2531 = vmatpush2.xpose.msra.mxu0 0.0
    %2532 = vmatprep.subr.mxu0 0.0
    %2533 = vmatpush2.xpose.msra.mxu0 0.0
    %2534 = vmatprep.subr.mxu0 0.0
    %2535 = vmatpush2.xpose.msra.mxu0 0.0
    %2536 = vmatprep.subr.mxu0 0.0
    %2537 = vmatpush2.xpose.msra.mxu0 0.0
    %2538 = vmatprep.subr.mxu0 0.0
    %2539 = vmatpush2.xpose.msra.mxu0 0.0
    %2540 = vmatprep.subr.mxu0 0.0
    %2541 = vmatpush2.xpose.msra.mxu0 0.0
    %2542 = vmatprep.subr.mxu0 0.0
    %2543 = vmatpush2.xpose.msra.mxu0 0.0
    %2544 = vmatprep.subr.mxu0 0.0
    %2545 = vmatpush2.xpose.msra.mxu0 0.0
    %2546 = vmatprep.subr.mxu0 0.0
    %2547 = vmatpush2.xpose.msra.mxu0 0.0
    %2548 = vmatprep.subr.mxu0 0.0
    %2549 = vmatpush2.xpose.msra.mxu0 0.0
    %2550 = vmatprep.subr.mxu0 0.0
    %2551 = vmatpush2.xpose.msra.mxu0 0.0
    %2552 = vmatprep.subr.mxu0 0.0
    %2553 = vmatpush2.xpose.msra.mxu0 0.0
    %2554 = vmatprep.mubr.f32.mxu0 0.0
    %2555 = vmatmul.mubr.f32.gmra.mxu0 %v2486
    %v2556 = vpop.f32.mrf.mxu0
    %v2557 = vadd.f32 0.0, %v2556
    %v2558 = vpop.f32.mrf.mxu0
    %2559 = vdwg.mxu0
    %2560 = vrot.lane.b32.xlu0 %v2150, 124
    %v2561 = vpop.permute.xlu0 %2560
    %2562 = vrot.lane.b32.xlu0 %v2150, 108
    %v2563 = vpop.permute.xlu0 %2562
    %v2564 = vsel %vm2156, %v2561, 0
    %v2566 = vsel %vm2156, %v2563, 0
    %2568 = vmatprep.subr.mxu0 0.0
    %2569 = vmatpush1.xpose.msra.mxu0 0.0
    %2570 = vmatprep.subr.mxu0 0.0
    %2571 = vmatpush1.xpose.msra.mxu0 0.0
    %2572 = vmatprep.subr.mxu0 0.0
    %2573 = vmatpush1.xpose.msra.mxu0 0.0
    %2574 = vmatprep.subr.mxu0 0.0
    %2575 = vmatpush1.xpose.msra.mxu0 0.0
    %2576 = vmatprep.subr.mxu0 0.0
    %2577 = vmatpush1.xpose.msra.mxu0 0.0
    %2578 = vmatprep.subr.mxu0 0.0
    %2579 = vmatpush1.xpose.msra.mxu0 0.0
    %2580 = vmatprep.subr.mxu0 0.0
    %2581 = vmatpush1.xpose.msra.mxu0 0.0
    %2582 = vmatprep.subr.mxu0 0.0
    %2583 = vmatpush1.xpose.msra.mxu0 0.0
    %2584 = vmatprep.subr.mxu0 0.0
    %2585 = vmatpush1.xpose.msra.mxu0 0.0
    %2586 = vmatprep.subr.mxu0 0.0
    %2587 = vmatpush1.xpose.msra.mxu0 0.0
    %2588 = vmatprep.subr.mxu0 0.0
    %2589 = vmatpush1.xpose.msra.mxu0 0.0
    %2590 = vmatprep.subr.mxu0 0.0
    %2591 = vmatpush1.xpose.msra.mxu0 0.0
    %2592 = vmatprep.subr.mxu0 0.0
    %2593 = vmatpush1.xpose.msra.mxu0 0.0
    %2594 = vmatprep.subr.mxu0 0.0
    %2595 = vmatpush1.xpose.msra.mxu0 0.0
    %2596 = vmatprep.subr.mxu0 0.0
    %2597 = vmatpush1.xpose.msra.mxu0 0.0
    %2598 = vmatprep.subr.mxu0 0.0
    %2599 = vmatpush1.xpose.msra.mxu0 %v2566
    %2600 = vmatprep.subr.mxu0 0.0
    %2601 = vmatpush2.xpose.msra.mxu0 0.0
    %2602 = vmatprep.subr.mxu0 0.0
    %2603 = vmatpush2.xpose.msra.mxu0 0.0
    %2604 = vmatprep.subr.mxu0 0.0
    %2605 = vmatpush2.xpose.msra.mxu0 0.0
    %2606 = vmatprep.subr.mxu0 0.0
    %2607 = vmatpush2.xpose.msra.mxu0 0.0
    %2608 = vmatprep.subr.mxu0 0.0
    %2609 = vmatpush2.xpose.msra.mxu0 0.0
    %2610 = vmatprep.subr.mxu0 0.0
    %2611 = vmatpush2.xpose.msra.mxu0 0.0
    %2612 = vmatprep.subr.mxu0 0.0
    %2613 = vmatpush2.xpose.msra.mxu0 0.0
    %2614 = vmatprep.subr.mxu0 0.0
    %2615 = vmatpush2.xpose.msra.mxu0 0.0
    %2616 = vmatprep.subr.mxu0 0.0
    %2617 = vmatpush2.xpose.msra.mxu0 0.0
    %2618 = vmatprep.subr.mxu0 0.0
    %2619 = vmatpush2.xpose.msra.mxu0 0.0
    %2620 = vmatprep.subr.mxu0 0.0
    %2621 = vmatpush2.xpose.msra.mxu0 0.0
    %2622 = vmatprep.subr.mxu0 0.0
    %2623 = vmatpush2.xpose.msra.mxu0 0.0
    %2624 = vmatprep.subr.mxu0 0.0
    %2625 = vmatpush2.xpose.msra.mxu0 0.0
    %2626 = vmatprep.subr.mxu0 0.0
    %2627 = vmatpush2.xpose.msra.mxu0 0.0
    %2628 = vmatprep.subr.mxu0 0.0
    %2629 = vmatpush2.xpose.msra.mxu0 0.0
    %2630 = vmatprep.subr.mxu0 0.0
    %2631 = vmatpush2.xpose.msra.mxu0 0.0
    %2632 = vmatprep.mubr.f32.mxu0 0.0
    %2633 = vmatmul.mubr.f32.gmra.mxu0 %v2564
    %v2634 = vpop.f32.mrf.mxu0
    %v2635 = vadd.f32 0.0, %v2634
    %v2636 = vpop.f32.mrf.mxu0
    %2637 = vdwg.mxu0
    %v2638 = vsel %vm351, %v2557, -inf
    %2639 = vmax.xlane.f32.xlu0 %v2638
    %v2640 = vpop.xlane.xlu0 %2639
    %v2641 = vsel %vm351, %v2635, -inf
    %2642 = vmax.xlane.f32.xlu0 %v2641
    %v2643 = vpop.xlane.xlu0 %2642
    %v2644 = vsub.f32 %v2557, %v2640
    %v2645 = vsub.f32 %v2635, %v2643
    %v2646 = vmul.f32 %v2644, 1.442695
    %v2647 = vpow.pop %v2646
    %v2648 = vmul.f32 %v2645, 1.442695
    %v2649 = vpow.pop %v2648
    %v2650 = vsel %vm351, %v2647, 0.0
    %2651 = vadd.xlane.f32.xlu0 %v2650
    %v2652 = vpop.xlane.xlu0 %2651
    %v2653 = vsel %vm351, %v2649, 0.0
    %2654 = vadd.xlane.f32.xlu0 %v2653
    %v2655 = vpop.xlane.xlu0 %2654
    %v2656 = vrcp.pop %v2652
    %v2657 = vmul.f32 %v2647, %v2656
    %v2658 = vrcp.pop %v2655
    %v2659 = vmul.f32 %v2649, %v2658
    %2660 = vrot.lane.b32.xlu0 %v2145, 92
    %v2661 = vpop.permute.xlu0 %2660
    %v2664 = vsel %vm351, %v2657, 0
    %2666 = vmatprep.subr.mxu0 0.0
    %2667 = vmatpush1.msra.mxu0 0.0
    %2668 = vmatprep.subr.mxu0 0.0
    %2669 = vmatpush1.msra.mxu0 0.0
    %2670 = vmatprep.subr.mxu0 0.0
    %2671 = vmatpush1.msra.mxu0 0.0
    %2672 = vmatprep.subr.mxu0 0.0
    %2673 = vmatpush1.msra.mxu0 0.0
    %2674 = vmatprep.subr.mxu0 0.0
    %2675 = vmatpush1.msra.mxu0 0.0
    %2676 = vmatprep.subr.mxu0 0.0
    %2677 = vmatpush1.msra.mxu0 0.0
    %2678 = vmatprep.subr.mxu0 0.0
    %2679 = vmatpush1.msra.mxu0 0.0
    %2680 = vmatprep.subr.mxu0 0.0
    %2681 = vmatpush1.msra.mxu0 0.0
    %2682 = vmatprep.subr.mxu0 0.0
    %2683 = vmatpush1.msra.mxu0 0.0
    %2684 = vmatprep.subr.mxu0 0.0
    %2685 = vmatpush1.msra.mxu0 0.0
    %2686 = vmatprep.subr.mxu0 0.0
    %2687 = vmatpush1.msra.mxu0 0.0
    %2688 = vmatprep.subr.mxu0 0.0
    %2689 = vmatpush1.msra.mxu0 0.0
    %2690 = vmatprep.subr.mxu0 0.0
    %2691 = vmatpush1.msra.mxu0 0.0
    %2692 = vmatprep.subr.mxu0 0.0
    %2693 = vmatpush1.msra.mxu0 0.0
    %2694 = vmatprep.subr.mxu0 0.0
    %2695 = vmatpush1.msra.mxu0 0.0
    %2696 = vmatprep.subr.mxu0 0.0
    %2697 = vmatpush1.msra.mxu0 %v2661
    %2698 = vmatprep.subr.mxu0 0.0
    %2699 = vmatpush2.msra.mxu0 0.0
    %2700 = vmatprep.subr.mxu0 0.0
    %2701 = vmatpush2.msra.mxu0 0.0
    %2702 = vmatprep.subr.mxu0 0.0
    %2703 = vmatpush2.msra.mxu0 0.0
    %2704 = vmatprep.subr.mxu0 0.0
    %2705 = vmatpush2.msra.mxu0 0.0
    %2706 = vmatprep.subr.mxu0 0.0
    %2707 = vmatpush2.msra.mxu0 0.0
    %2708 = vmatprep.subr.mxu0 0.0
    %2709 = vmatpush2.msra.mxu0 0.0
    %2710 = vmatprep.subr.mxu0 0.0
    %2711 = vmatpush2.msra.mxu0 0.0
    %2712 = vmatprep.subr.mxu0 0.0
    %2713 = vmatpush2.msra.mxu0 0.0
    %2714 = vmatprep.subr.mxu0 0.0
    %2715 = vmatpush2.msra.mxu0 0.0
    %2716 = vmatprep.subr.mxu0 0.0
    %2717 = vmatpush2.msra.mxu0 0.0
    %2718 = vmatprep.subr.mxu0 0.0
    %2719 = vmatpush2.msra.mxu0 0.0
    %2720 = vmatprep.subr.mxu0 0.0
    %2721 = vmatpush2.msra.mxu0 0.0
    %2722 = vmatprep.subr.mxu0 0.0
    %2723 = vmatpush2.msra.mxu0 0.0
    %2724 = vmatprep.subr.mxu0 0.0
    %2725 = vmatpush2.msra.mxu0 0.0
    %2726 = vmatprep.subr.mxu0 0.0
    %2727 = vmatpush2.msra.mxu0 0.0
    %2728 = vmatprep.subr.mxu0 0.0
    %2729 = vmatpush2.msra.mxu0 0.0
    %2730 = vmatprep.mubr.f32.mxu0 0.0
    %2731 = vmatmul.mubr.f32.gmra.mxu0 %v2664
    %v2732 = vpop.f32.mrf.mxu0
    %v2733 = vadd.f32 0.0, %v2732
    %v2734 = vpop.f32.mrf.mxu0
    %2735 = vdwg.mxu0
    %2736 = vrot.lane.b32.xlu0 %v2150, 92
    %v2737 = vpop.permute.xlu0 %2736
    %v2740 = vsel %vm351, %v2659, 0
    %2742 = vmatprep.subr.mxu0 0.0
    %2743 = vmatpush1.msra.mxu0 0.0
    %2744 = vmatprep.subr.mxu0 0.0
    %2745 = vmatpush1.msra.mxu0 0.0
    %2746 = vmatprep.subr.mxu0 0.0
    %2747 = vmatpush1.msra.mxu0 0.0
    %2748 = vmatprep.subr.mxu0 0.0
    %2749 = vmatpush1.msra.mxu0 0.0
    %2750 = vmatprep.subr.mxu0 0.0
    %2751 = vmatpush1.msra.mxu0 0.0
    %2752 = vmatprep.subr.mxu0 0.0
    %2753 = vmatpush1.msra.mxu0 0.0
    %2754 = vmatprep.subr.mxu0 0.0
    %2755 = vmatpush1.msra.mxu0 0.0
    %2756 = vmatprep.subr.mxu0 0.0
    %2757 = vmatpush1.msra.mxu0 0.0
    %2758 = vmatprep.subr.mxu0 0.0
    %2759 = vmatpush1.msra.mxu0 0.0
    %2760 = vmatprep.subr.mxu0 0.0
    %2761 = vmatpush1.msra.mxu0 0.0
    %2762 = vmatprep.subr.mxu0 0.0
    %2763 = vmatpush1.msra.mxu0 0.0
    %2764 = vmatprep.subr.mxu0 0.0
    %2765 = vmatpush1.msra.mxu0 0.0
    %2766 = vmatprep.subr.mxu0 0.0
    %2767 = vmatpush1.msra.mxu0 0.0
    %2768 = vmatprep.subr.mxu0 0.0
    %2769 = vmatpush1.msra.mxu0 0.0
    %2770 = vmatprep.subr.mxu0 0.0
    %2771 = vmatpush1.msra.mxu0 0.0
    %2772 = vmatprep.subr.mxu0 0.0
    %2773 = vmatpush1.msra.mxu0 %v2737
    %2774 = vmatprep.subr.mxu0 0.0
    %2775 = vmatpush2.msra.mxu0 0.0
    %2776 = vmatprep.subr.mxu0 0.0
    %2777 = vmatpush2.msra.mxu0 0.0
    %2778 = vmatprep.subr.mxu0 0.0
    %2779 = vmatpush2.msra.mxu0 0.0
    %2780 = vmatprep.subr.mxu0 0.0
    %2781 = vmatpush2.msra.mxu0 0.0
    %2782 = vmatprep.subr.mxu0 0.0
    %2783 = vmatpush2.msra.mxu0 0.0
    %2784 = vmatprep.subr.mxu0 0.0
    %2785 = vmatpush2.msra.mxu0 0.0
    %2786 = vmatprep.subr.mxu0 0.0
    %2787 = vmatpush2.msra.mxu0 0.0
    %2788 = vmatprep.subr.mxu0 0.0
    %2789 = vmatpush2.msra.mxu0 0.0
    %2790 = vmatprep.subr.mxu0 0.0
    %2791 = vmatpush2.msra.mxu0 0.0
    %2792 = vmatprep.subr.mxu0 0.0
    %2793 = vmatpush2.msra.mxu0 0.0
    %2794 = vmatprep.subr.mxu0 0.0
    %2795 = vmatpush2.msra.mxu0 0.0
    %2796 = vmatprep.subr.mxu0 0.0
    %2797 = vmatpush2.msra.mxu0 0.0
    %2798 = vmatprep.subr.mxu0 0.0
    %2799 = vmatpush2.msra.mxu0 0.0
    %2800 = vmatprep.subr.mxu0 0.0
    %2801 = vmatpush2.msra.mxu0 0.0
    %2802 = vmatprep.subr.mxu0 0.0
    %2803 = vmatpush2.msra.mxu0 0.0
    %2804 = vmatprep.subr.mxu0 0.0
    %2805 = vmatpush2.msra.mxu0 0.0
    %2806 = vmatprep.mubr.f32.mxu0 0.0
    %2807 = vmatmul.mubr.f32.gmra.mxu0 %v2740
    %v2808 = vpop.f32.mrf.mxu0
    %v2809 = vadd.f32 0.0, %v2808
    %v2810 = vpop.f32.mrf.mxu0
    %2811 = vdwg.mxu0
    %2812 = vrot.lane.b32.xlu0 %v2145, 120
    %v2813 = vpop.permute.xlu0 %2812
    %2814 = vrot.lane.b32.xlu0 %v2145, 104
    %v2815 = vpop.permute.xlu0 %2814
    %v2816 = vsel %vm2156, %v2813, 0
    %v2818 = vsel %vm2156, %v2815, 0
    %2820 = vmatprep.subr.mxu0 0.0
    %2821 = vmatpush1.xpose.msra.mxu0 0.0
    %2822 = vmatprep.subr.mxu0 0.0
    %2823 = vmatpush1.xpose.msra.mxu0 0.0
    %2824 = vmatprep.subr.mxu0 0.0
    %2825 = vmatpush1.xpose.msra.mxu0 0.0
    %2826 = vmatprep.subr.mxu0 0.0
    %2827 = vmatpush1.xpose.msra.mxu0 0.0
    %2828 = vmatprep.subr.mxu0 0.0
    %2829 = vmatpush1.xpose.msra.mxu0 0.0
    %2830 = vmatprep.subr.mxu0 0.0
    %2831 = vmatpush1.xpose.msra.mxu0 0.0
    %2832 = vmatprep.subr.mxu0 0.0
    %2833 = vmatpush1.xpose.msra.mxu0 0.0
    %2834 = vmatprep.subr.mxu0 0.0
    %2835 = vmatpush1.xpose.msra.mxu0 0.0
    %2836 = vmatprep.subr.mxu0 0.0
    %2837 = vmatpush1.xpose.msra.mxu0 0.0
    %2838 = vmatprep.subr.mxu0 0.0
    %2839 = vmatpush1.xpose.msra.mxu0 0.0
    %2840 = vmatprep.subr.mxu0 0.0
    %2841 = vmatpush1.xpose.msra.mxu0 0.0
    %2842 = vmatprep.subr.mxu0 0.0
    %2843 = vmatpush1.xpose.msra.mxu0 0.0
    %2844 = vmatprep.subr.mxu0 0.0
    %2845 = vmatpush1.xpose.msra.mxu0 0.0
    %2846 = vmatprep.subr.mxu0 0.0
    %2847 = vmatpush1.xpose.msra.mxu0 0.0
    %2848 = vmatprep.subr.mxu0 0.0
    %2849 = vmatpush1.xpose.msra.mxu0 0.0
    %2850 = vmatprep.subr.mxu0 0.0
    %2851 = vmatpush1.xpose.msra.mxu0 %v2818
    %2852 = vmatprep.subr.mxu0 0.0
    %2853 = vmatpush2.xpose.msra.mxu0 0.0
    %2854 = vmatprep.subr.mxu0 0.0
    %2855 = vmatpush2.xpose.msra.mxu0 0.0
    %2856 = vmatprep.subr.mxu0 0.0
    %2857 = vmatpush2.xpose.msra.mxu0 0.0
    %2858 = vmatprep.subr.mxu0 0.0
    %2859 = vmatpush2.xpose.msra.mxu0 0.0
    %2860 = vmatprep.subr.mxu0 0.0
    %2861 = vmatpush2.xpose.msra.mxu0 0.0
    %2862 = vmatprep.subr.mxu0 0.0
    %2863 = vmatpush2.xpose.msra.mxu0 0.0
    %2864 = vmatprep.subr.mxu0 0.0
    %2865 = vmatpush2.xpose.msra.mxu0 0.0
    %2866 = vmatprep.subr.mxu0 0.0
    %2867 = vmatpush2.xpose.msra.mxu0 0.0
    %2868 = vmatprep.subr.mxu0 0.0
    %2869 = vmatpush2.xpose.msra.mxu0 0.0
    %2870 = vmatprep.subr.mxu0 0.0
    %2871 = vmatpush2.xpose.msra.mxu0 0.0
    %2872 = vmatprep.subr.mxu0 0.0
    %2873 = vmatpush2.xpose.msra.mxu0 0.0
    %2874 = vmatprep.subr.mxu0 0.0
    %2875 = vmatpush2.xpose.msra.mxu0 0.0
    %2876 = vmatprep.subr.mxu0 0.0
    %2877 = vmatpush2.xpose.msra.mxu0 0.0
    %2878 = vmatprep.subr.mxu0 0.0
    %2879 = vmatpush2.xpose.msra.mxu0 0.0
    %2880 = vmatprep.subr.mxu0 0.0
    %2881 = vmatpush2.xpose.msra.mxu0 0.0
    %2882 = vmatprep.subr.mxu0 0.0
    %2883 = vmatpush2.xpose.msra.mxu0 0.0
    %2884 = vmatprep.mubr.f32.mxu0 0.0
    %2885 = vmatmul.mubr.f32.gmra.mxu0 %v2816
    %v2886 = vpop.f32.mrf.mxu0
    %v2887 = vadd.f32 0.0, %v2886
    %v2888 = vpop.f32.mrf.mxu0
    %2889 = vdwg.mxu0
    %2890 = vrot.lane.b32.xlu0 %v2150, 120
    %v2891 = vpop.permute.xlu0 %2890
    %2892 = vrot.lane.b32.xlu0 %v2150, 104
    %v2893 = vpop.permute.xlu0 %2892
    %v2894 = vsel %vm2156, %v2891, 0
    %v2896 = vsel %vm2156, %v2893, 0
    %2898 = vmatprep.subr.mxu0 0.0
    %2899 = vmatpush1.xpose.msra.mxu0 0.0
    %2900 = vmatprep.subr.mxu0 0.0
    %2901 = vmatpush1.xpose.msra.mxu0 0.0
    %2902 = vmatprep.subr.mxu0 0.0
    %2903 = vmatpush1.xpose.msra.mxu0 0.0
    %2904 = vmatprep.subr.mxu0 0.0
    %2905 = vmatpush1.xpose.msra.mxu0 0.0
    %2906 = vmatprep.subr.mxu0 0.0
    %2907 = vmatpush1.xpose.msra.mxu0 0.0
    %2908 = vmatprep.subr.mxu0 0.0
    %2909 = vmatpush1.xpose.msra.mxu0 0.0
    %2910 = vmatprep.subr.mxu0 0.0
    %2911 = vmatpush1.xpose.msra.mxu0 0.0
    %2912 = vmatprep.subr.mxu0 0.0
    %2913 = vmatpush1.xpose.msra.mxu0 0.0
    %2914 = vmatprep.subr.mxu0 0.0
    %2915 = vmatpush1.xpose.msra.mxu0 0.0
    %2916 = vmatprep.subr.mxu0 0.0
    %2917 = vmatpush1.xpose.msra.mxu0 0.0
    %2918 = vmatprep.subr.mxu0 0.0
    %2919 = vmatpush1.xpose.msra.mxu0 0.0
    %2920 = vmatprep.subr.mxu0 0.0
    %2921 = vmatpush1.xpose.msra.mxu0 0.0
    %2922 = vmatprep.subr.mxu0 0.0
    %2923 = vmatpush1.xpose.msra.mxu0 0.0
    %2924 = vmatprep.subr.mxu0 0.0
    %2925 = vmatpush1.xpose.msra.mxu0 0.0
    %2926 = vmatprep.subr.mxu0 0.0
    %2927 = vmatpush1.xpose.msra.mxu0 0.0
    %2928 = vmatprep.subr.mxu0 0.0
    %2929 = vmatpush1.xpose.msra.mxu0 %v2896
    %2930 = vmatprep.subr.mxu0 0.0
    %2931 = vmatpush2.xpose.msra.mxu0 0.0
    %2932 = vmatprep.subr.mxu0 0.0
    %2933 = vmatpush2.xpose.msra.mxu0 0.0
    %2934 = vmatprep.subr.mxu0 0.0
    %2935 = vmatpush2.xpose.msra.mxu0 0.0
    %2936 = vmatprep.subr.mxu0 0.0
    %2937 = vmatpush2.xpose.msra.mxu0 0.0
    %2938 = vmatprep.subr.mxu0 0.0
    %2939 = vmatpush2.xpose.msra.mxu0 0.0
    %2940 = vmatprep.subr.mxu0 0.0
    %2941 = vmatpush2.xpose.msra.mxu0 0.0
    %2942 = vmatprep.subr.mxu0 0.0
    %2943 = vmatpush2.xpose.msra.mxu0 0.0
    %2944 = vmatprep.subr.mxu0 0.0
    %2945 = vmatpush2.xpose.msra.mxu0 0.0
    %2946 = vmatprep.subr.mxu0 0.0
    %2947 = vmatpush2.xpose.msra.mxu0 0.0
    %2948 = vmatprep.subr.mxu0 0.0
    %2949 = vmatpush2.xpose.msra.mxu0 0.0
    %2950 = vmatprep.subr.mxu0 0.0
    %2951 = vmatpush2.xpose.msra.mxu0 0.0
    %2952 = vmatprep.subr.mxu0 0.0
    %2953 = vmatpush2.xpose.msra.mxu0 0.0
    %2954 = vmatprep.subr.mxu0 0.0
    %2955 = vmatpush2.xpose.msra.mxu0 0.0
    %2956 = vmatprep.subr.mxu0 0.0
    %2957 = vmatpush2.xpose.msra.mxu0 0.0
    %2958 = vmatprep.subr.mxu0 0.0
    %2959 = vmatpush2.xpose.msra.mxu0 0.0
    %2960 = vmatprep.subr.mxu0 0.0
    %2961 = vmatpush2.xpose.msra.mxu0 0.0
    %2962 = vmatprep.mubr.f32.mxu0 0.0
    %2963 = vmatmul.mubr.f32.gmra.mxu0 %v2894
    %v2964 = vpop.f32.mrf.mxu0
    %v2965 = vadd.f32 0.0, %v2964
    %v2966 = vpop.f32.mrf.mxu0
    %2967 = vdwg.mxu0
    %v2968 = vsel %vm351, %v2887, -inf
    %2969 = vmax.xlane.f32.xlu0 %v2968
    %v2970 = vpop.xlane.xlu0 %2969
    %v2971 = vsel %vm351, %v2965, -inf
    %2972 = vmax.xlane.f32.xlu0 %v2971
    %v2973 = vpop.xlane.xlu0 %2972
    %v2974 = vsub.f32 %v2887, %v2970
    %v2975 = vsub.f32 %v2965, %v2973
    %v2976 = vmul.f32 %v2974, 1.442695
    %v2977 = vpow.pop %v2976
    %v2978 = vmul.f32 %v2975, 1.442695
    %v2979 = vpow.pop %v2978
    %v2980 = vsel %vm351, %v2977, 0.0
    %2981 = vadd.xlane.f32.xlu0 %v2980
    %v2982 = vpop.xlane.xlu0 %2981
    %v2983 = vsel %vm351, %v2979, 0.0
    %2984 = vadd.xlane.f32.xlu0 %v2983
    %v2985 = vpop.xlane.xlu0 %2984
    %v2986 = vrcp.pop %v2982
    %v2987 = vmul.f32 %v2977, %v2986
    %v2988 = vrcp.pop %v2985
    %v2989 = vmul.f32 %v2979, %v2988
    %2990 = vrot.lane.b32.xlu0 %v2145, 88
    %v2991 = vpop.permute.xlu0 %2990
    %v2994 = vsel %vm351, %v2987, 0
    %2996 = vmatprep.subr.mxu0 0.0
    %2997 = vmatpush1.msra.mxu0 0.0
    %2998 = vmatprep.subr.mxu0 0.0
    %2999 = vmatpush1.msra.mxu0 0.0
    %3000 = vmatprep.subr.mxu0 0.0
    %3001 = vmatpush1.msra.mxu0 0.0
    %3002 = vmatprep.subr.mxu0 0.0
    %3003 = vmatpush1.msra.mxu0 0.0
    %3004 = vmatprep.subr.mxu0 0.0
    %3005 = vmatpush1.msra.mxu0 0.0
    %3006 = vmatprep.subr.mxu0 0.0
    %3007 = vmatpush1.msra.mxu0 0.0
    %3008 = vmatprep.subr.mxu0 0.0
    %3009 = vmatpush1.msra.mxu0 0.0
    %3010 = vmatprep.subr.mxu0 0.0
    %3011 = vmatpush1.msra.mxu0 0.0
    %3012 = vmatprep.subr.mxu0 0.0
    %3013 = vmatpush1.msra.mxu0 0.0
    %3014 = vmatprep.subr.mxu0 0.0
    %3015 = vmatpush1.msra.mxu0 0.0
    %3016 = vmatprep.subr.mxu0 0.0
    %3017 = vmatpush1.msra.mxu0 0.0
    %3018 = vmatprep.subr.mxu0 0.0
    %3019 = vmatpush1.msra.mxu0 0.0
    %3020 = vmatprep.subr.mxu0 0.0
    %3021 = vmatpush1.msra.mxu0 0.0
    %3022 = vmatprep.subr.mxu0 0.0
    %3023 = vmatpush1.msra.mxu0 0.0
    %3024 = vmatprep.subr.mxu0 0.0
    %3025 = vmatpush1.msra.mxu0 0.0
    %3026 = vmatprep.subr.mxu0 0.0
    %3027 = vmatpush1.msra.mxu0 %v2991
    %3028 = vmatprep.subr.mxu0 0.0
    %3029 = vmatpush2.msra.mxu0 0.0
    %3030 = vmatprep.subr.mxu0 0.0
    %3031 = vmatpush2.msra.mxu0 0.0
    %3032 = vmatprep.subr.mxu0 0.0
    %3033 = vmatpush2.msra.mxu0 0.0
    %3034 = vmatprep.subr.mxu0 0.0
    %3035 = vmatpush2.msra.mxu0 0.0
    %3036 = vmatprep.subr.mxu0 0.0
    %3037 = vmatpush2.msra.mxu0 0.0
    %3038 = vmatprep.subr.mxu0 0.0
    %3039 = vmatpush2.msra.mxu0 0.0
    %3040 = vmatprep.subr.mxu0 0.0
    %3041 = vmatpush2.msra.mxu0 0.0
    %3042 = vmatprep.subr.mxu0 0.0
    %3043 = vmatpush2.msra.mxu0 0.0
    %3044 = vmatprep.subr.mxu0 0.0
    %3045 = vmatpush2.msra.mxu0 0.0
    %3046 = vmatprep.subr.mxu0 0.0
    %3047 = vmatpush2.msra.mxu0 0.0
    %3048 = vmatprep.subr.mxu0 0.0
    %3049 = vmatpush2.msra.mxu0 0.0
    %3050 = vmatprep.subr.mxu0 0.0
    %3051 = vmatpush2.msra.mxu0 0.0
    %3052 = vmatprep.subr.mxu0 0.0
    %3053 = vmatpush2.msra.mxu0 0.0
    %3054 = vmatprep.subr.mxu0 0.0
    %3055 = vmatpush2.msra.mxu0 0.0
    %3056 = vmatprep.subr.mxu0 0.0
    %3057 = vmatpush2.msra.mxu0 0.0
    %3058 = vmatprep.subr.mxu0 0.0
    %3059 = vmatpush2.msra.mxu0 0.0
    %3060 = vmatprep.mubr.f32.mxu0 0.0
    %3061 = vmatmul.mubr.f32.gmra.mxu0 %v2994
    %v3062 = vpop.f32.mrf.mxu0
    %v3063 = vadd.f32 0.0, %v3062
    %v3064 = vpop.f32.mrf.mxu0
    %3065 = vdwg.mxu0
    %3066 = vrot.lane.b32.xlu0 %v2150, 88
    %v3067 = vpop.permute.xlu0 %3066
    %v3070 = vsel %vm351, %v2989, 0
    %3072 = vmatprep.subr.mxu0 0.0
    %3073 = vmatpush1.msra.mxu0 0.0
    %3074 = vmatprep.subr.mxu0 0.0
    %3075 = vmatpush1.msra.mxu0 0.0
    %3076 = vmatprep.subr.mxu0 0.0
    %3077 = vmatpush1.msra.mxu0 0.0
    %3078 = vmatprep.subr.mxu0 0.0
    %3079 = vmatpush1.msra.mxu0 0.0
    %3080 = vmatprep.subr.mxu0 0.0
    %3081 = vmatpush1.msra.mxu0 0.0
    %3082 = vmatprep.subr.mxu0 0.0
    %3083 = vmatpush1.msra.mxu0 0.0
    %3084 = vmatprep.subr.mxu0 0.0
    %3085 = vmatpush1.msra.mxu0 0.0
    %3086 = vmatprep.subr.mxu0 0.0
    %3087 = vmatpush1.msra.mxu0 0.0
    %3088 = vmatprep.subr.mxu0 0.0
    %3089 = vmatpush1.msra.mxu0 0.0
    %3090 = vmatprep.subr.mxu0 0.0
    %3091 = vmatpush1.msra.mxu0 0.0
    %3092 = vmatprep.subr.mxu0 0.0
    %3093 = vmatpush1.msra.mxu0 0.0
    %3094 = vmatprep.subr.mxu0 0.0
    %3095 = vmatpush1.msra.mxu0 0.0
    %3096 = vmatprep.subr.mxu0 0.0
    %3097 = vmatpush1.msra.mxu0 0.0
    %3098 = vmatprep.subr.mxu0 0.0
    %3099 = vmatpush1.msra.mxu0 0.0
    %3100 = vmatprep.subr.mxu0 0.0
    %3101 = vmatpush1.msra.mxu0 0.0
    %3102 = vmatprep.subr.mxu0 0.0
    %3103 = vmatpush1.msra.mxu0 %v3067
    %3104 = vmatprep.subr.mxu0 0.0
    %3105 = vmatpush2.msra.mxu0 0.0
    %3106 = vmatprep.subr.mxu0 0.0
    %3107 = vmatpush2.msra.mxu0 0.0
    %3108 = vmatprep.subr.mxu0 0.0
    %3109 = vmatpush2.msra.mxu0 0.0
    %3110 = vmatprep.subr.mxu0 0.0
    %3111 = vmatpush2.msra.mxu0 0.0
    %3112 = vmatprep.subr.mxu0 0.0
    %3113 = vmatpush2.msra.mxu0 0.0
    %3114 = vmatprep.subr.mxu0 0.0
    %3115 = vmatpush2.msra.mxu0 0.0
    %3116 = vmatprep.subr.mxu0 0.0
    %3117 = vmatpush2.msra.mxu0 0.0
    %3118 = vmatprep.subr.mxu0 0.0
    %3119 = vmatpush2.msra.mxu0 0.0
    %3120 = vmatprep.subr.mxu0 0.0
    %3121 = vmatpush2.msra.mxu0 0.0
    %3122 = vmatprep.subr.mxu0 0.0
    %3123 = vmatpush2.msra.mxu0 0.0
    %3124 = vmatprep.subr.mxu0 0.0
    %3125 = vmatpush2.msra.mxu0 0.0
    %3126 = vmatprep.subr.mxu0 0.0
    %3127 = vmatpush2.msra.mxu0 0.0
    %3128 = vmatprep.subr.mxu0 0.0
    %3129 = vmatpush2.msra.mxu0 0.0
    %3130 = vmatprep.subr.mxu0 0.0
    %3131 = vmatpush2.msra.mxu0 0.0
    %3132 = vmatprep.subr.mxu0 0.0
    %3133 = vmatpush2.msra.mxu0 0.0
    %3134 = vmatprep.subr.mxu0 0.0
    %3135 = vmatpush2.msra.mxu0 0.0
    %3136 = vmatprep.mubr.f32.mxu0 0.0
    %3137 = vmatmul.mubr.f32.gmra.mxu0 %v3070
    %v3138 = vpop.f32.mrf.mxu0
    %v3139 = vadd.f32 0.0, %v3138
    %v3140 = vpop.f32.mrf.mxu0
    %3141 = vdwg.mxu0
    %3142 = vrot.lane.b32.xlu0 %v2145, 116
    %v3143 = vpop.permute.xlu0 %3142
    %3144 = vrot.lane.b32.xlu0 %v2145, 100
    %v3145 = vpop.permute.xlu0 %3144
    %v3146 = vsel %vm2156, %v3143, 0
    %v3148 = vsel %vm2156, %v3145, 0
    %3150 = vmatprep.subr.mxu0 0.0
    %3151 = vmatpush1.xpose.msra.mxu0 0.0
    %3152 = vmatprep.subr.mxu0 0.0
    %3153 = vmatpush1.xpose.msra.mxu0 0.0
    %3154 = vmatprep.subr.mxu0 0.0
    %3155 = vmatpush1.xpose.msra.mxu0 0.0
    %3156 = vmatprep.subr.mxu0 0.0
    %3157 = vmatpush1.xpose.msra.mxu0 0.0
    %3158 = vmatprep.subr.mxu0 0.0
    %3159 = vmatpush1.xpose.msra.mxu0 0.0
    %3160 = vmatprep.subr.mxu0 0.0
    %3161 = vmatpush1.xpose.msra.mxu0 0.0
    %3162 = vmatprep.subr.mxu0 0.0
    %3163 = vmatpush1.xpose.msra.mxu0 0.0
    %3164 = vmatprep.subr.mxu0 0.0
    %3165 = vmatpush1.xpose.msra.mxu0 0.0
    %3166 = vmatprep.subr.mxu0 0.0
    %3167 = vmatpush1.xpose.msra.mxu0 0.0
    %3168 = vmatprep.subr.mxu0 0.0
    %3169 = vmatpush1.xpose.msra.mxu0 0.0
    %3170 = vmatprep.subr.mxu0 0.0
    %3171 = vmatpush1.xpose.msra.mxu0 0.0
    %3172 = vmatprep.subr.mxu0 0.0
    %3173 = vmatpush1.xpose.msra.mxu0 0.0
    %3174 = vmatprep.subr.mxu0 0.0
    %3175 = vmatpush1.xpose.msra.mxu0 0.0
    %3176 = vmatprep.subr.mxu0 0.0
    %3177 = vmatpush1.xpose.msra.mxu0 0.0
    %3178 = vmatprep.subr.mxu0 0.0
    %3179 = vmatpush1.xpose.msra.mxu0 0.0
    %3180 = vmatprep.subr.mxu0 0.0
    %3181 = vmatpush1.xpose.msra.mxu0 %v3148
    %3182 = vmatprep.subr.mxu0 0.0
    %3183 = vmatpush2.xpose.msra.mxu0 0.0
    %3184 = vmatprep.subr.mxu0 0.0
    %3185 = vmatpush2.xpose.msra.mxu0 0.0
    %3186 = vmatprep.subr.mxu0 0.0
    %3187 = vmatpush2.xpose.msra.mxu0 0.0
    %3188 = vmatprep.subr.mxu0 0.0
    %3189 = vmatpush2.xpose.msra.mxu0 0.0
    %3190 = vmatprep.subr.mxu0 0.0
    %3191 = vmatpush2.xpose.msra.mxu0 0.0
    %3192 = vmatprep.subr.mxu0 0.0
    %3193 = vmatpush2.xpose.msra.mxu0 0.0
    %3194 = vmatprep.subr.mxu0 0.0
    %3195 = vmatpush2.xpose.msra.mxu0 0.0
    %3196 = vmatprep.subr.mxu0 0.0
    %3197 = vmatpush2.xpose.msra.mxu0 0.0
    %3198 = vmatprep.subr.mxu0 0.0
    %3199 = vmatpush2.xpose.msra.mxu0 0.0
    %3200 = vmatprep.subr.mxu0 0.0
    %3201 = vmatpush2.xpose.msra.mxu0 0.0
    %3202 = vmatprep.subr.mxu0 0.0
    %3203 = vmatpush2.xpose.msra.mxu0 0.0
    %3204 = vmatprep.subr.mxu0 0.0
    %3205 = vmatpush2.xpose.msra.mxu0 0.0
    %3206 = vmatprep.subr.mxu0 0.0
    %3207 = vmatpush2.xpose.msra.mxu0 0.0
    %3208 = vmatprep.subr.mxu0 0.0
    %3209 = vmatpush2.xpose.msra.mxu0 0.0
    %3210 = vmatprep.subr.mxu0 0.0
    %3211 = vmatpush2.xpose.msra.mxu0 0.0
    %3212 = vmatprep.subr.mxu0 0.0
    %3213 = vmatpush2.xpose.msra.mxu0 0.0
    %3214 = vmatprep.mubr.f32.mxu0 0.0
    %3215 = vmatmul.mubr.f32.gmra.mxu0 %v3146
    %v3216 = vpop.f32.mrf.mxu0
    %v3217 = vadd.f32 0.0, %v3216
    %v3218 = vpop.f32.mrf.mxu0
    %3219 = vdwg.mxu0
    %3220 = vrot.lane.b32.xlu0 %v2150, 116
    %v3221 = vpop.permute.xlu0 %3220
    %3222 = vrot.lane.b32.xlu0 %v2150, 100
    %v3223 = vpop.permute.xlu0 %3222
    %v3224 = vsel %vm2156, %v3221, 0
    %v3226 = vsel %vm2156, %v3223, 0
    %3228 = vmatprep.subr.mxu0 0.0
    %3229 = vmatpush1.xpose.msra.mxu0 0.0
    %3230 = vmatprep.subr.mxu0 0.0
    %3231 = vmatpush1.xpose.msra.mxu0 0.0
    %3232 = vmatprep.subr.mxu0 0.0
    %3233 = vmatpush1.xpose.msra.mxu0 0.0
    %3234 = vmatprep.subr.mxu0 0.0
    %3235 = vmatpush1.xpose.msra.mxu0 0.0
    %3236 = vmatprep.subr.mxu0 0.0
    %3237 = vmatpush1.xpose.msra.mxu0 0.0
    %3238 = vmatprep.subr.mxu0 0.0
    %3239 = vmatpush1.xpose.msra.mxu0 0.0
    %3240 = vmatprep.subr.mxu0 0.0
    %3241 = vmatpush1.xpose.msra.mxu0 0.0
    %3242 = vmatprep.subr.mxu0 0.0
    %3243 = vmatpush1.xpose.msra.mxu0 0.0
    %3244 = vmatprep.subr.mxu0 0.0
    %3245 = vmatpush1.xpose.msra.mxu0 0.0
    %3246 = vmatprep.subr.mxu0 0.0
    %3247 = vmatpush1.xpose.msra.mxu0 0.0
    %3248 = vmatprep.subr.mxu0 0.0
    %3249 = vmatpush1.xpose.msra.mxu0 0.0
    %3250 = vmatprep.subr.mxu0 0.0
    %3251 = vmatpush1.xpose.msra.mxu0 0.0
    %3252 = vmatprep.subr.mxu0 0.0
    %3253 = vmatpush1.xpose.msra.mxu0 0.0
    %3254 = vmatprep.subr.mxu0 0.0
    %3255 = vmatpush1.xpose.msra.mxu0 0.0
    %3256 = vmatprep.subr.mxu0 0.0
    %3257 = vmatpush1.xpose.msra.mxu0 0.0
    %3258 = vmatprep.subr.mxu0 0.0
    %3259 = vmatpush1.xpose.msra.mxu0 %v3226
    %3260 = vmatprep.subr.mxu0 0.0
    %3261 = vmatpush2.xpose.msra.mxu0 0.0
    %3262 = vmatprep.subr.mxu0 0.0
    %3263 = vmatpush2.xpose.msra.mxu0 0.0
    %3264 = vmatprep.subr.mxu0 0.0
    %3265 = vmatpush2.xpose.msra.mxu0 0.0
    %3266 = vmatprep.subr.mxu0 0.0
    %3267 = vmatpush2.xpose.msra.mxu0 0.0
    %3268 = vmatprep.subr.mxu0 0.0
    %3269 = vmatpush2.xpose.msra.mxu0 0.0
    %3270 = vmatprep.subr.mxu0 0.0
    %3271 = vmatpush2.xpose.msra.mxu0 0.0
    %3272 = vmatprep.subr.mxu0 0.0
    %3273 = vmatpush2.xpose.msra.mxu0 0.0
    %3274 = vmatprep.subr.mxu0 0.0
    %3275 = vmatpush2.xpose.msra.mxu0 0.0
    %3276 = vmatprep.subr.mxu0 0.0
    %3277 = vmatpush2.xpose.msra.mxu0 0.0
    %3278 = vmatprep.subr.mxu0 0.0
    %3279 = vmatpush2.xpose.msra.mxu0 0.0
    %3280 = vmatprep.subr.mxu0 0.0
    %3281 = vmatpush2.xpose.msra.mxu0 0.0
    %3282 = vmatprep.subr.mxu0 0.0
    %3283 = vmatpush2.xpose.msra.mxu0 0.0
    %3284 = vmatprep.subr.mxu0 0.0
    %3285 = vmatpush2.xpose.msra.mxu0 0.0
    %3286 = vmatprep.subr.mxu0 0.0
    %3287 = vmatpush2.xpose.msra.mxu0 0.0
    %3288 = vmatprep.subr.mxu0 0.0
    %3289 = vmatpush2.xpose.msra.mxu0 0.0
    %3290 = vmatprep.subr.mxu0 0.0
    %3291 = vmatpush2.xpose.msra.mxu0 0.0
    %3292 = vmatprep.mubr.f32.mxu0 0.0
    %3293 = vmatmul.mubr.f32.gmra.mxu0 %v3224
    %v3294 = vpop.f32.mrf.mxu0
    %v3295 = vadd.f32 0.0, %v3294
    %v3296 = vpop.f32.mrf.mxu0
    %3297 = vdwg.mxu0
    %v3298 = vsel %vm351, %v3217, -inf
    %3299 = vmax.xlane.f32.xlu0 %v3298
    %v3300 = vpop.xlane.xlu0 %3299
    %v3301 = vsel %vm351, %v3295, -inf
    %3302 = vmax.xlane.f32.xlu0 %v3301
    %v3303 = vpop.xlane.xlu0 %3302
    %v3304 = vsub.f32 %v3217, %v3300
    %v3305 = vsub.f32 %v3295, %v3303
    %v3306 = vmul.f32 %v3304, 1.442695
    %v3307 = vpow.pop %v3306
    %v3308 = vmul.f32 %v3305, 1.442695
    %v3309 = vpow.pop %v3308
    %v3310 = vsel %vm351, %v3307, 0.0
    %3311 = vadd.xlane.f32.xlu0 %v3310
    %v3312 = vpop.xlane.xlu0 %3311
    %v3313 = vsel %vm351, %v3309, 0.0
    %3314 = vadd.xlane.f32.xlu0 %v3313
    %v3315 = vpop.xlane.xlu0 %3314
    %v3316 = vrcp.pop %v3312
    %v3317 = vmul.f32 %v3307, %v3316
    %v3318 = vrcp.pop %v3315
    %v3319 = vmul.f32 %v3309, %v3318
    %3320 = vrot.lane.b32.xlu0 %v2145, 84
    %v3321 = vpop.permute.xlu0 %3320
    %v3324 = vsel %vm351, %v3317, 0
    %3326 = vmatprep.subr.mxu0 0.0
    %3327 = vmatpush1.msra.mxu0 0.0
    %3328 = vmatprep.subr.mxu0 0.0
    %3329 = vmatpush1.msra.mxu0 0.0
    %3330 = vmatprep.subr.mxu0 0.0
    %3331 = vmatpush1.msra.mxu0 0.0
    %3332 = vmatprep.subr.mxu0 0.0
    %3333 = vmatpush1.msra.mxu0 0.0
    %3334 = vmatprep.subr.mxu0 0.0
    %3335 = vmatpush1.msra.mxu0 0.0
    %3336 = vmatprep.subr.mxu0 0.0
    %3337 = vmatpush1.msra.mxu0 0.0
    %3338 = vmatprep.subr.mxu0 0.0
    %3339 = vmatpush1.msra.mxu0 0.0
    %3340 = vmatprep.subr.mxu0 0.0
    %3341 = vmatpush1.msra.mxu0 0.0
    %3342 = vmatprep.subr.mxu0 0.0
    %3343 = vmatpush1.msra.mxu0 0.0
    %3344 = vmatprep.subr.mxu0 0.0
    %3345 = vmatpush1.msra.mxu0 0.0
    %3346 = vmatprep.subr.mxu0 0.0
    %3347 = vmatpush1.msra.mxu0 0.0
    %3348 = vmatprep.subr.mxu0 0.0
    %3349 = vmatpush1.msra.mxu0 0.0
    %3350 = vmatprep.subr.mxu0 0.0
    %3351 = vmatpush1.msra.mxu0 0.0
    %3352 = vmatprep.subr.mxu0 0.0
    %3353 = vmatpush1.msra.mxu0 0.0
    %3354 = vmatprep.subr.mxu0 0.0
    %3355 = vmatpush1.msra.mxu0 0.0
    %3356 = vmatprep.subr.mxu0 0.0
    %3357 = vmatpush1.msra.mxu0 %v3321
    %3358 = vmatprep.subr.mxu0 0.0
    %3359 = vmatpush2.msra.mxu0 0.0
    %3360 = vmatprep.subr.mxu0 0.0
    %3361 = vmatpush2.msra.mxu0 0.0
    %3362 = vmatprep.subr.mxu0 0.0
    %3363 = vmatpush2.msra.mxu0 0.0
    %3364 = vmatprep.subr.mxu0 0.0
    %3365 = vmatpush2.msra.mxu0 0.0
    %3366 = vmatprep.subr.mxu0 0.0
    %3367 = vmatpush2.msra.mxu0 0.0
    %3368 = vmatprep.subr.mxu0 0.0
    %3369 = vmatpush2.msra.mxu0 0.0
    %3370 = vmatprep.subr.mxu0 0.0
    %3371 = vmatpush2.msra.mxu0 0.0
    %3372 = vmatprep.subr.mxu0 0.0
    %3373 = vmatpush2.msra.mxu0 0.0
    %3374 = vmatprep.subr.mxu0 0.0
    %3375 = vmatpush2.msra.mxu0 0.0
    %3376 = vmatprep.subr.mxu0 0.0
    %3377 = vmatpush2.msra.mxu0 0.0
    %3378 = vmatprep.subr.mxu0 0.0
    %3379 = vmatpush2.msra.mxu0 0.0
    %3380 = vmatprep.subr.mxu0 0.0
    %3381 = vmatpush2.msra.mxu0 0.0
    %3382 = vmatprep.subr.mxu0 0.0
    %3383 = vmatpush2.msra.mxu0 0.0
    %3384 = vmatprep.subr.mxu0 0.0
    %3385 = vmatpush2.msra.mxu0 0.0
    %3386 = vmatprep.subr.mxu0 0.0
    %3387 = vmatpush2.msra.mxu0 0.0
    %3388 = vmatprep.subr.mxu0 0.0
    %3389 = vmatpush2.msra.mxu0 0.0
    %3390 = vmatprep.mubr.f32.mxu0 0.0
    %3391 = vmatmul.mubr.f32.gmra.mxu0 %v3324
    %v3392 = vpop.f32.mrf.mxu0
    %v3393 = vadd.f32 0.0, %v3392
    %v3394 = vpop.f32.mrf.mxu0
    %3395 = vdwg.mxu0
    %3396 = vrot.lane.b32.xlu0 %v2150, 84
    %v3397 = vpop.permute.xlu0 %3396
    %v3400 = vsel %vm351, %v3319, 0
    %3402 = vmatprep.subr.mxu0 0.0
    %3403 = vmatpush1.msra.mxu0 0.0
    %3404 = vmatprep.subr.mxu0 0.0
    %3405 = vmatpush1.msra.mxu0 0.0
    %3406 = vmatprep.subr.mxu0 0.0
    %3407 = vmatpush1.msra.mxu0 0.0
    %3408 = vmatprep.subr.mxu0 0.0
    %3409 = vmatpush1.msra.mxu0 0.0
    %3410 = vmatprep.subr.mxu0 0.0
    %3411 = vmatpush1.msra.mxu0 0.0
    %3412 = vmatprep.subr.mxu0 0.0
    %3413 = vmatpush1.msra.mxu0 0.0
    %3414 = vmatprep.subr.mxu0 0.0
    %3415 = vmatpush1.msra.mxu0 0.0
    %3416 = vmatprep.subr.mxu0 0.0
    %3417 = vmatpush1.msra.mxu0 0.0
    %3418 = vmatprep.subr.mxu0 0.0
    %3419 = vmatpush1.msra.mxu0 0.0
    %3420 = vmatprep.subr.mxu0 0.0
    %3421 = vmatpush1.msra.mxu0 0.0
    %3422 = vmatprep.subr.mxu0 0.0
    %3423 = vmatpush1.msra.mxu0 0.0
    %3424 = vmatprep.subr.mxu0 0.0
    %3425 = vmatpush1.msra.mxu0 0.0
    %3426 = vmatprep.subr.mxu0 0.0
    %3427 = vmatpush1.msra.mxu0 0.0
    %3428 = vmatprep.subr.mxu0 0.0
    %3429 = vmatpush1.msra.mxu0 0.0
    %3430 = vmatprep.subr.mxu0 0.0
    %3431 = vmatpush1.msra.mxu0 0.0
    %3432 = vmatprep.subr.mxu0 0.0
    %3433 = vmatpush1.msra.mxu0 %v3397
    %3434 = vmatprep.subr.mxu0 0.0
    %3435 = vmatpush2.msra.mxu0 0.0
    %3436 = vmatprep.subr.mxu0 0.0
    %3437 = vmatpush2.msra.mxu0 0.0
    %3438 = vmatprep.subr.mxu0 0.0
    %3439 = vmatpush2.msra.mxu0 0.0
    %3440 = vmatprep.subr.mxu0 0.0
    %3441 = vmatpush2.msra.mxu0 0.0
    %3442 = vmatprep.subr.mxu0 0.0
    %3443 = vmatpush2.msra.mxu0 0.0
    %3444 = vmatprep.subr.mxu0 0.0
    %3445 = vmatpush2.msra.mxu0 0.0
    %3446 = vmatprep.subr.mxu0 0.0
    %3447 = vmatpush2.msra.mxu0 0.0
    %3448 = vmatprep.subr.mxu0 0.0
    %3449 = vmatpush2.msra.mxu0 0.0
    %3450 = vmatprep.subr.mxu0 0.0
    %3451 = vmatpush2.msra.mxu0 0.0
    %3452 = vmatprep.subr.mxu0 0.0
    %3453 = vmatpush2.msra.mxu0 0.0
    %3454 = vmatprep.subr.mxu0 0.0
    %3455 = vmatpush2.msra.mxu0 0.0
    %3456 = vmatprep.subr.mxu0 0.0
    %3457 = vmatpush2.msra.mxu0 0.0
    %3458 = vmatprep.subr.mxu0 0.0
    %3459 = vmatpush2.msra.mxu0 0.0
    %3460 = vmatprep.subr.mxu0 0.0
    %3461 = vmatpush2.msra.mxu0 0.0
    %3462 = vmatprep.subr.mxu0 0.0
    %3463 = vmatpush2.msra.mxu0 0.0
    %3464 = vmatprep.subr.mxu0 0.0
    %3465 = vmatpush2.msra.mxu0 0.0
    %3466 = vmatprep.mubr.f32.mxu0 0.0
    %3467 = vmatmul.mubr.f32.gmra.mxu0 %v3400
    %v3468 = vpop.f32.mrf.mxu0
    %v3469 = vadd.f32 0.0, %v3468
    %v3470 = vpop.f32.mrf.mxu0
    %3471 = vdwg.mxu0
    %3474 = vrot.lane.b32.xlu0 %v2733, 4
    %v3475 = vpop.permute.xlu0 %3474
    %3476 = vrot.lane.b32.xlu0 %v2809, 4
    %v3477 = vpop.permute.xlu0 %3476
    %3482 = vrot.lane.b32.xlu0 %v3063, 8
    %v3483 = vpop.permute.xlu0 %3482
    %3484 = vrot.lane.b32.xlu0 %v3139, 8
    %v3485 = vpop.permute.xlu0 %3484
    %3490 = vrot.lane.b32.xlu0 %v3393, 12
    %v3491 = vpop.permute.xlu0 %3490
    %3492 = vrot.lane.b32.xlu0 %v3469, 12
    %v3493 = vpop.permute.xlu0 %3492
    %v3496 = vsel %vm2156, %v2403, %v3475
    %v3497 = vsel %vm2156, %v2479, %v3477
    %v3498 = vsel %vm351, %v3496, %v3483
    %v3499 = vsel %vm351, %v3497, %v3485
    %v3500 = vsel %vm1542, %v3498, %v3491
    %v3501 = vsel %vm1542, %v3499, %v3493
    %v3502 = vld [vmem:[#allocation6 + $0x130] sm:$0xff]
    %v3503 = vld [vmem:[#allocation6 + $0x138] sm:$0xff]
    %v3505 = vsel %vm2025, %v3500, 0
    %v3508 = vsel %vm2025, %v3501, 0
    %3510 = vmatprep.subr.mxu0 0.0
    %3511 = vmatpush1.msra.mxu0 0.0
    %3512 = vmatprep.subr.mxu0 0.0
    %3513 = vmatpush1.msra.mxu0 0.0
    %3514 = vmatprep.subr.mxu0 0.0
    %3515 = vmatpush1.msra.mxu0 0.0
    %3516 = vmatprep.subr.mxu0 0.0
    %3517 = vmatpush1.msra.mxu0 0.0
    %3518 = vmatprep.subr.mxu0 0.0
    %3519 = vmatpush1.msra.mxu0 0.0
    %3520 = vmatprep.subr.mxu0 0.0
    %3521 = vmatpush1.msra.mxu0 0.0
    %3522 = vmatprep.subr.mxu0 0.0
    %3523 = vmatpush1.msra.mxu0 0.0
    %3524 = vmatprep.subr.mxu0 0.0
    %3525 = vmatpush1.msra.mxu0 0.0
    %3526 = vmatprep.subr.mxu0 0.0
    %3527 = vmatpush1.msra.mxu0 0.0
    %3528 = vmatprep.subr.mxu0 0.0
    %3529 = vmatpush1.msra.mxu0 0.0
    %3530 = vmatprep.subr.mxu0 0.0
    %3531 = vmatpush1.msra.mxu0 0.0
    %3532 = vmatprep.subr.mxu0 0.0
    %3533 = vmatpush1.msra.mxu0 0.0
    %3534 = vmatprep.subr.mxu0 0.0
    %3535 = vmatpush1.msra.mxu0 0.0
    %3536 = vmatprep.subr.mxu0 0.0
    %3537 = vmatpush1.msra.mxu0 0.0
    %3538 = vmatprep.subr.mxu0 0.0
    %3539 = vmatpush1.msra.mxu0 %v3503
    %3540 = vmatprep.subr.mxu0 0.0
    %3541 = vmatpush1.msra.mxu0 %v3502
    %3542 = vmatprep.subr.mxu0 0.0
    %3543 = vmatpush2.msra.mxu0 0.0
    %3544 = vmatprep.subr.mxu0 0.0
    %3545 = vmatpush2.msra.mxu0 0.0
    %3546 = vmatprep.subr.mxu0 0.0
    %3547 = vmatpush2.msra.mxu0 0.0
    %3548 = vmatprep.subr.mxu0 0.0
    %3549 = vmatpush2.msra.mxu0 0.0
    %3550 = vmatprep.subr.mxu0 0.0
    %3551 = vmatpush2.msra.mxu0 0.0
    %3552 = vmatprep.subr.mxu0 0.0
    %3553 = vmatpush2.msra.mxu0 0.0
    %3554 = vmatprep.subr.mxu0 0.0
    %3555 = vmatpush2.msra.mxu0 0.0
    %3556 = vmatprep.subr.mxu0 0.0
    %3557 = vmatpush2.msra.mxu0 0.0
    %3558 = vmatprep.subr.mxu0 0.0
    %3559 = vmatpush2.msra.mxu0 0.0
    %3560 = vmatprep.subr.mxu0 0.0
    %3561 = vmatpush2.msra.mxu0 0.0
    %3562 = vmatprep.subr.mxu0 0.0
    %3563 = vmatpush2.msra.mxu0 0.0
    %3564 = vmatprep.subr.mxu0 0.0
    %3565 = vmatpush2.msra.mxu0 0.0
    %3566 = vmatprep.subr.mxu0 0.0
    %3567 = vmatpush2.msra.mxu0 0.0
    %3568 = vmatprep.subr.mxu0 0.0
    %3569 = vmatpush2.msra.mxu0 0.0
    %3570 = vmatprep.subr.mxu0 0.0
    %3571 = vmatpush2.msra.mxu0 0.0
    %3572 = vmatprep.subr.mxu0 0.0
    %3573 = vmatpush2.msra.mxu0 0.0
    %3574 = vmatprep.mubr.f32.mxu0 0.0
    %3575 = vmatmul.mubr.f32.gmra.mxu0 %v3505
    %v3576 = vpop.f32.mrf.mxu0
    %v3577 = vadd.f32 0.0, %v3576
    %v3578 = vpop.f32.mrf.mxu0
    %3579 = vmatprep.mubr.f32.mxu0 0.0
    %3580 = vmatmul.mubr.f32.gmra.mxu0 %v3508
    %v3581 = vpop.f32.mrf.mxu0
    %v3582 = vadd.f32 0.0, %v3581
    %v3583 = vpop.f32.mrf.mxu0
    %3584 = vdwg.mxu0
    %v3585 = vadd.f32 %v2021, %v3577
    %v3586 = vadd.f32 %v2022, %v3582
    %v3587 = vld [vmem:[#allocation6 + $0x140] sm:$0x1]
    %v3588 = vlaneseq
    %v3589 = vshrl.u32 %v3588, 7
    %v3590 = vsub.s32 0, %v3589
    %v3591 = vrot.slane %v3587, %v3590
    %v3592 = vadd.f32 %v3585, %v3591
    %v3593 = vadd.f32 %v3586, %v3591
    %v3594 = vld [vmem:[#allocation6 + $0x148] sm:$0x1]
    %v3595 = vld [vmem:[#allocation6 + $0x150] sm:$0x1]
    %v3596 = vsel %vm2025, %v3592, 0.0
    %3597 = vadd.xlane.f32.xlu0 %v3596
    %v3598 = vpop.xlane.xlu0 %3597
    %v3599 = vsel %vm2025, %v3593, 0.0
    %3600 = vadd.xlane.f32.xlu0 %v3599
    %v3601 = vpop.xlane.xlu0 %3600
    %v3602 = vmul.f32 %v3598, %v2032
    %v3603 = vmul.f32 %v3601, %v2032
    %v3604 = vsub.f32 %v3592, %v3602
    %v3605 = vsub.f32 %v3593, %v3603
    %v3606 = vmul.f32 %v3604, %v3604
    %v3607 = vmul.f32 %v3605, %v3605
    %v3608 = vsel %vm2025, %v3606, 0.0
    %3609 = vadd.xlane.f32.xlu0 %v3608
    %v3610 = vpop.xlane.xlu0 %3609
    %v3611 = vsel %vm2025, %v3607, 0.0
    %3612 = vadd.xlane.f32.xlu0 %v3611
    %v3613 = vpop.xlane.xlu0 %3612
    %v3614 = vmul.f32 %v3610, %v2032
    %v3615 = vmul.f32 %v3613, %v2032
    %v3616 = vadd.f32 %v3614, 1e-05
    %v3617 = vadd.f32 %v3615, 1e-05
    %v3618 = vrsqrt.pop %v3616
    %v3619 = vrsqrt.pop %v3617
    %v3620 = vmul.f32 %v3604, %v3618
    %v3621 = vmul.f32 %v3605, %v3619
    %v3622 = vlaneseq
    %v3623 = vshrl.u32 %v3622, 7
    %v3624 = vsub.s32 0, %v3623
    %v3625 = vrot.slane %v3594, %v3624
    %v3626 = vmul.f32 %v3620, %v3625
    %v3627 = vmul.f32 %v3621, %v3625
    %v3628 = vlaneseq
    %v3629 = vshrl.u32 %v3628, 7
    %v3630 = vsub.s32 0, %v3629
    %v3631 = vrot.slane %v3595, %v3630
    %v3632 = vadd.f32 %v3626, %v3631
    %v3633 = vadd.f32 %v3627, %v3631
    %v3634 = vld [vmem:[#allocation6 + $0x158] sm:$0xff]
    %v3635 = vld [vmem:[#allocation6 + $0x160] sm:$0xff]
    %v3636 = vld [vmem:[#allocation6 + $0x168] sm:$0x1]
    %v3637 = vlaneseq
    %v3638 = vshrl.u32 %v3637, 7
    %v3639 = vsub.s32 0, %v3638
    %v3640 = vrot.slane %v3636, %v3639
    %v3642 = vsel %vm2025, %v3632, 0
    %v3645 = vsel %vm2025, %v3633, 0
    %3647 = vmatprep.subr.mxu0 0.0
    %3648 = vmatpush1.msra.mxu0 0.0
    %3649 = vmatprep.subr.mxu0 0.0
    %3650 = vmatpush1.msra.mxu0 0.0
    %3651 = vmatprep.subr.mxu0 0.0
    %3652 = vmatpush1.msra.mxu0 0.0
    %3653 = vmatprep.subr.mxu0 0.0
    %3654 = vmatpush1.msra.mxu0 0.0
    %3655 = vmatprep.subr.mxu0 0.0
    %3656 = vmatpush1.msra.mxu0 0.0
    %3657 = vmatprep.subr.mxu0 0.0
    %3658 = vmatpush1.msra.mxu0 0.0
    %3659 = vmatprep.subr.mxu0 0.0
    %3660 = vmatpush1.msra.mxu0 0.0
    %3661 = vmatprep.subr.mxu0 0.0
    %3662 = vmatpush1.msra.mxu0 0.0
    %3663 = vmatprep.subr.mxu0 0.0
    %3664 = vmatpush1.msra.mxu0 0.0
    %3665 = vmatprep.subr.mxu0 0.0
    %3666 = vmatpush1.msra.mxu0 0.0
    %3667 = vmatprep.subr.mxu0 0.0
    %3668 = vmatpush1.msra.mxu0 0.0
    %3669 = vmatprep.subr.mxu0 0.0
    %3670 = vmatpush1.msra.mxu0 0.0
    %3671 = vmatprep.subr.mxu0 0.0
    %3672 = vmatpush1.msra.mxu0 0.0
    %3673 = vmatprep.subr.mxu0 0.0
    %3674 = vmatpush1.msra.mxu0 0.0
    %3675 = vmatprep.subr.mxu0 0.0
    %3676 = vmatpush1.msra.mxu0 %v3635
    %3677 = vmatprep.subr.mxu0 0.0
    %3678 = vmatpush1.msra.mxu0 %v3634
    %3679 = vmatprep.subr.mxu0 0.0
    %3680 = vmatpush2.msra.mxu0 0.0
    %3681 = vmatprep.subr.mxu0 0.0
    %3682 = vmatpush2.msra.mxu0 0.0
    %3683 = vmatprep.subr.mxu0 0.0
    %3684 = vmatpush2.msra.mxu0 0.0
    %3685 = vmatprep.subr.mxu0 0.0
    %3686 = vmatpush2.msra.mxu0 0.0
    %3687 = vmatprep.subr.mxu0 0.0
    %3688 = vmatpush2.msra.mxu0 0.0
    %3689 = vmatprep.subr.mxu0 0.0
    %3690 = vmatpush2.msra.mxu0 0.0
    %3691 = vmatprep.subr.mxu0 0.0
    %3692 = vmatpush2.msra.mxu0 0.0
    %3693 = vmatprep.subr.mxu0 0.0
    %3694 = vmatpush2.msra.mxu0 0.0
    %3695 = vmatprep.subr.mxu0 0.0
    %3696 = vmatpush2.msra.mxu0 0.0
    %3697 = vmatprep.subr.mxu0 0.0
    %3698 = vmatpush2.msra.mxu0 0.0
    %3699 = vmatprep.subr.mxu0 0.0
    %3700 = vmatpush2.msra.mxu0 0.0
    %3701 = vmatprep.subr.mxu0 0.0
    %3702 = vmatpush2.msra.mxu0 0.0
    %3703 = vmatprep.subr.mxu0 0.0
    %3704 = vmatpush2.msra.mxu0 0.0
    %3705 = vmatprep.subr.mxu0 0.0
    %3706 = vmatpush2.msra.mxu0 0.0
    %3707 = vmatprep.subr.mxu0 0.0
    %3708 = vmatpush2.msra.mxu0 0.0
    %3709 = vmatprep.subr.mxu0 0.0
    %3710 = vmatpush2.msra.mxu0 0.0
    %3711 = vmatprep.mubr.f32.mxu0 0.0
    %3712 = vmatmul.mubr.f32.gmra.mxu0 %v3642
    %v3713 = vpop.f32.mrf.mxu0
    %v3714 = vadd.f32 %v3640, %v3713
    %v3715 = vpop.f32.mrf.mxu0
    %3716 = vmatprep.mubr.f32.mxu0 0.0
    %3717 = vmatmul.mubr.f32.gmra.mxu0 %v3645
    %v3718 = vpop.f32.mrf.mxu0
    %v3719 = vadd.f32 %v3640, %v3718
    %v3720 = vpop.f32.mrf.mxu0
    %3721 = vdwg.mxu0
    %v3722 = vmax.f32 %v3714, 0.0
    %v3723 = vmax.f32 %v3719, 0.0
    %v3724 = vld [vmem:[#allocation6 + $0x170] sm:$0xff]
    %v3725 = vld [vmem:[#allocation6 + $0x178] sm:$0xff]
    %v3726 = vld [vmem:[#allocation6 + $0x180] sm:$0xff]
    %v3727 = vld [vmem:[#allocation6 + $0x188] sm:$0xff]
    %v3728 = vld [vmem:[#allocation6 + $0x190] sm:$0xff]
    %v3729 = vld [vmem:[#allocation6 + $0x198] sm:$0xff]
    %v3730 = vld [vmem:[#allocation6 + $0x1a0] sm:$0xff]
    %v3731 = vld [vmem:[#allocation6 + $0x1a8] sm:$0xff]
    %vm3732 = vcmask 523264
    %v3734 = vsel %vm3732, %v3722, 0
    %v3737 = vsel %vm3732, %v3723, 0
    %3739 = vmatprep.subr.mxu0 0.0
    %3740 = vmatpush1.msra.mxu0 0.0
    %3741 = vmatprep.subr.mxu0 0.0
    %3742 = vmatpush1.msra.mxu0 0.0
    %3743 = vmatprep.subr.mxu0 0.0
    %3744 = vmatpush1.msra.mxu0 0.0
    %3745 = vmatprep.subr.mxu0 0.0
    %3746 = vmatpush1.msra.mxu0 0.0
    %3747 = vmatprep.subr.mxu0 0.0
    %3748 = vmatpush1.msra.mxu0 0.0
    %3749 = vmatprep.subr.mxu0 0.0
    %3750 = vmatpush1.msra.mxu0 0.0
    %3751 = vmatprep.subr.mxu0 0.0
    %3752 = vmatpush1.msra.mxu0 0.0
    %3753 = vmatprep.subr.mxu0 0.0
    %3754 = vmatpush1.msra.mxu0 0.0
    %3755 = vmatprep.subr.mxu0 0.0
    %3756 = vmatpush1.msra.mxu0 %v3731
    %3757 = vmatprep.subr.mxu0 0.0
    %3758 = vmatpush1.msra.mxu0 %v3730
    %3759 = vmatprep.subr.mxu0 0.0
    %3760 = vmatpush1.msra.mxu0 %v3729
    %3761 = vmatprep.subr.mxu0 0.0
    %3762 = vmatpush1.msra.mxu0 %v3728
    %3763 = vmatprep.subr.mxu0 0.0
    %3764 = vmatpush1.msra.mxu0 %v3727
    %3765 = vmatprep.subr.mxu0 0.0
    %3766 = vmatpush1.msra.mxu0 %v3726
    %3767 = vmatprep.subr.mxu0 0.0
    %3768 = vmatpush1.msra.mxu0 %v3725
    %3769 = vmatprep.subr.mxu0 0.0
    %3770 = vmatpush1.msra.mxu0 %v3724
    %3771 = vmatprep.subr.mxu0 0.0
    %3772 = vmatpush2.msra.mxu0 0.0
    %3773 = vmatprep.subr.mxu0 0.0
    %3774 = vmatpush2.msra.mxu0 0.0
    %3775 = vmatprep.subr.mxu0 0.0
    %3776 = vmatpush2.msra.mxu0 0.0
    %3777 = vmatprep.subr.mxu0 0.0
    %3778 = vmatpush2.msra.mxu0 0.0
    %3779 = vmatprep.subr.mxu0 0.0
    %3780 = vmatpush2.msra.mxu0 0.0
    %3781 = vmatprep.subr.mxu0 0.0
    %3782 = vmatpush2.msra.mxu0 0.0
    %3783 = vmatprep.subr.mxu0 0.0
    %3784 = vmatpush2.msra.mxu0 0.0
    %3785 = vmatprep.subr.mxu0 0.0
    %3786 = vmatpush2.msra.mxu0 0.0
    %3787 = vmatprep.subr.mxu0 0.0
    %3788 = vmatpush2.msra.mxu0 0.0
    %3789 = vmatprep.subr.mxu0 0.0
    %3790 = vmatpush2.msra.mxu0 0.0
    %3791 = vmatprep.subr.mxu0 0.0
    %3792 = vmatpush2.msra.mxu0 0.0
    %3793 = vmatprep.subr.mxu0 0.0
    %3794 = vmatpush2.msra.mxu0 0.0
    %3795 = vmatprep.subr.mxu0 0.0
    %3796 = vmatpush2.msra.mxu0 0.0
    %3797 = vmatprep.subr.mxu0 0.0
    %3798 = vmatpush2.msra.mxu0 0.0
    %3799 = vmatprep.subr.mxu0 0.0
    %3800 = vmatpush2.msra.mxu0 0.0
    %3801 = vmatprep.subr.mxu0 0.0
    %3802 = vmatpush2.msra.mxu0 0.0
    %3803 = vmatprep.mubr.f32.mxu0 0.0
    %3804 = vmatmul.mubr.f32.gmra.mxu0 %v3734
    %v3805 = vpop.f32.mrf.mxu0
    %v3806 = vadd.f32 0.0, %v3805
    %v3807 = vpop.f32.mrf.mxu0
    %3808 = vmatprep.mubr.f32.mxu0 0.0
    %3809 = vmatmul.mubr.f32.gmra.mxu0 %v3737
    %v3810 = vpop.f32.mrf.mxu0
    %v3811 = vadd.f32 0.0, %v3810
    %v3812 = vpop.f32.mrf.mxu0
    %3813 = vdwg.mxu0
    %v3814 = vadd.f32 %v3592, %v3806
    %v3815 = vadd.f32 %v3593, %v3811
    %v3816 = vld [vmem:[#allocation6 + $0x1b0] sm:$0x1]
    %v3817 = vlaneseq
    %v3818 = vshrl.u32 %v3817, 7
    %v3819 = vsub.s32 0, %v3818
    %v3820 = vrot.slane %v3816, %v3819
    %v3821 = vadd.f32 %v3814, %v3820
    %v3822 = vadd.f32 %v3815, %v3820
    %v3823 = vld [vmem:[#allocation6 + $0x1b8] sm:$0x1]
    %v3824 = vld [vmem:[#allocation6 + $0x1c0] sm:$0x1]
    %v3825 = vsel %vm2025, %v3821, 0.0
    %3826 = vadd.xlane.f32.xlu0 %v3825
    %v3827 = vpop.xlane.xlu0 %3826
    %v3828 = vsel %vm2025, %v3822, 0.0
    %3829 = vadd.xlane.f32.xlu0 %v3828
    %v3830 = vpop.xlane.xlu0 %3829
    %v3831 = vmul.f32 %v3827, %v2032
    %v3832 = vmul.f32 %v3830, %v2032
    %v3833 = vsub.f32 %v3821, %v3831
    %v3834 = vsub.f32 %v3822, %v3832
    %v3835 = vmul.f32 %v3833, %v3833
    %v3836 = vmul.f32 %v3834, %v3834
    %v3837 = vsel %vm2025, %v3835, 0.0
    %3838 = vadd.xlane.f32.xlu0 %v3837
    %v3839 = vpop.xlane.xlu0 %3838
    %v3840 = vsel %vm2025, %v3836, 0.0
    %3841 = vadd.xlane.f32.xlu0 %v3840
    %v3842 = vpop.xlane.xlu0 %3841
    %v3843 = vmul.f32 %v3839, %v2032
    %v3844 = vmul.f32 %v3842, %v2032
    %v3845 = vadd.f32 %v3843, 1e-05
    %v3846 = vadd.f32 %v3844, 1e-05
    %v3847 = vrsqrt.pop %v3845
    %v3848 = vrsqrt.pop %v3846
    %v3849 = vmul.f32 %v3833, %v3847
    %v3850 = vmul.f32 %v3834, %v3848
    %v3851 = vlaneseq
    %v3852 = vshrl.u32 %v3851, 7
    %v3853 = vsub.s32 0, %v3852
    %v3854 = vrot.slane %v3823, %v3853
    %v3855 = vmul.f32 %v3849, %v3854
    %v3856 = vmul.f32 %v3850, %v3854
    %v3857 = vlaneseq
    %v3858 = vshrl.u32 %v3857, 7
    %v3859 = vsub.s32 0, %v3858
    %v3860 = vrot.slane %v3824, %v3859
    %v3861 = vadd.f32 %v3855, %v3860
    %v3862 = vadd.f32 %v3856, %v3860
    %v3863 = vsel %vm2025, %v3861, 0.0
    %v3864 = vrot.slane %v3863, 4
    %v3865 = vadd.f32 %v3863, %v3864
    %v3866 = vrot.slane %v3865, 2
    %v3867 = vadd.f32 %v3865, %v3866
    %v3868 = vrot.slane %v3867, 1
    %v3869 = vadd.f32 %v3867, %v3868
    %v3870 = vsel %vm2025, %v3862, 0.0
    %v3871 = vrot.slane %v3870, 4
    %v3872 = vadd.f32 %v3870, %v3871
    %v3873 = vrot.slane %v3872, 2
    %v3874 = vadd.f32 %v3872, %v3873
    %v3875 = vrot.slane %v3874, 1
    %v3876 = vadd.f32 %v3874, %v3875
    %v3877 = vmul.f32 %v3869, %v1929
    %v3878 = vmul.f32 %v3876, %v1929
    %v3879 = vld [vmem:[#allocation6 + $0x1e8] sm:$0xff]
    %v3880 = vld [vmem:[#allocation6 + $0x1f0] sm:$0xff]
    %v3881 = vld [vmem:[#allocation6 + $0x1f8] sm:$0x1]
    %v3882 = vlaneseq
    %v3883 = vshrl.u32 %v3882, 7
    %v3884 = vsub.s32 0, %v3883
    %v3885 = vrot.slane %v3881, %v3884
    %v3888 = vsel %vm1942, %v3878, %v3877
    %v3889 = vsel %vm2025, %v3888, 0
    %3891 = vmatprep.subr.mxu0 0.0
    %3892 = vmatpush1.msra.mxu0 0.0
    %3893 = vmatprep.subr.mxu0 0.0
    %3894 = vmatpush1.msra.mxu0 0.0
    %3895 = vmatprep.subr.mxu0 0.0
    %3896 = vmatpush1.msra.mxu0 0.0
    %3897 = vmatprep.subr.mxu0 0.0
    %3898 = vmatpush1.msra.mxu0 0.0
    %3899 = vmatprep.subr.mxu0 0.0
    %3900 = vmatpush1.msra.mxu0 0.0
    %3901 = vmatprep.subr.mxu0 0.0
    %3902 = vmatpush1.msra.mxu0 0.0
    %3903 = vmatprep.subr.mxu0 0.0
    %3904 = vmatpush1.msra.mxu0 0.0
    %3905 = vmatprep.subr.mxu0 0.0
    %3906 = vmatpush1.msra.mxu0 0.0
    %3907 = vmatprep.subr.mxu0 0.0
    %3908 = vmatpush1.msra.mxu0 0.0
    %3909 = vmatprep.subr.mxu0 0.0
    %3910 = vmatpush1.msra.mxu0 0.0
    %3911 = vmatprep.subr.mxu0 0.0
    %3912 = vmatpush1.msra.mxu0 0.0
    %3913 = vmatprep.subr.mxu0 0.0
    %3914 = vmatpush1.msra.mxu0 0.0
    %3915 = vmatprep.subr.mxu0 0.0
    %3916 = vmatpush1.msra.mxu0 0.0
    %3917 = vmatprep.subr.mxu0 0.0
    %3918 = vmatpush1.msra.mxu0 0.0
    %3919 = vmatprep.subr.mxu0 0.0
    %3920 = vmatpush1.msra.mxu0 %v3880
    %3921 = vmatprep.subr.mxu0 0.0
    %3922 = vmatpush1.msra.mxu0 %v3879
    %3923 = vmatprep.subr.mxu0 0.0
    %3924 = vmatpush2.msra.mxu0 0.0
    %3925 = vmatprep.subr.mxu0 0.0
    %3926 = vmatpush2.msra.mxu0 0.0
    %3927 = vmatprep.subr.mxu0 0.0
    %3928 = vmatpush2.msra.mxu0 0.0
    %3929 = vmatprep.subr.mxu0 0.0
    %3930 = vmatpush2.msra.mxu0 0.0
    %3931 = vmatprep.subr.mxu0 0.0
    %3932 = vmatpush2.msra.mxu0 0.0
    %3933 = vmatprep.subr.mxu0 0.0
    %3934 = vmatpush2.msra.mxu0 0.0
    %3935 = vmatprep.subr.mxu0 0.0
    %3936 = vmatpush2.msra.mxu0 0.0
    %3937 = vmatprep.subr.mxu0 0.0
    %3938 = vmatpush2.msra.mxu0 0.0
    %3939 = vmatprep.subr.mxu0 0.0
    %3940 = vmatpush2.msra.mxu0 0.0
    %3941 = vmatprep.subr.mxu0 0.0
    %3942 = vmatpush2.msra.mxu0 0.0
    %3943 = vmatprep.subr.mxu0 0.0
    %3944 = vmatpush2.msra.mxu0 0.0
    %3945 = vmatprep.subr.mxu0 0.0
    %3946 = vmatpush2.msra.mxu0 0.0
    %3947 = vmatprep.subr.mxu0 0.0
    %3948 = vmatpush2.msra.mxu0 0.0
    %3949 = vmatprep.subr.mxu0 0.0
    %3950 = vmatpush2.msra.mxu0 0.0
    %3951 = vmatprep.subr.mxu0 0.0
    %3952 = vmatpush2.msra.mxu0 0.0
    %3953 = vmatprep.subr.mxu0 0.0
    %3954 = vmatpush2.msra.mxu0 0.0
    %3955 = vmatprep.mubr.f32.mxu0 0.0
    %3956 = vmatmul.mubr.f32.gmra.mxu0 %v3889
    %v3957 = vpop.f32.mrf.mxu0
    %v3958 = vadd.f32 %v3885, %v3957
    %v3959 = vpop.f32.mrf.mxu0
    %3960 = vdwg.mxu0
    %v3961 = vld [vmem:[%s0] sm:$0x3]
    %3963 = vrot.lane.b32.xlu0 %v2013, 32
    %v3964 = vpop.permute.xlu0 %3963
    %3967 = vrot.lane.b32.xlu0 %v3958, 64
    %v3968 = vpop.permute.xlu0 %3967
    %vm3970 = vcmask 261120
    %v3971 = vsel %vm3970, %v3961, %v3964
    %v3972 = vsel %vm3732, %v3971, %v3968
    %v3973 = vld [vmem:[#allocation6 + $0x200] sm:$0xff]
    %v3974 = vld [vmem:[#allocation6 + $0x208] sm:$0xff]
    %v3975 = vld [vmem:[#allocation6 + $0x210] sm:$0xff]
    %v3976 = vld [vmem:[#allocation6 + $0x218] sm:$0xff]
    %v3977 = vld [vmem:[#allocation6 + $0x220] sm:$0xff]
    %v3978 = vld [vmem:[#allocation6 + $0x228] sm:$0xff]
    %v3979 = vld [vmem:[#allocation6 + $0x230] sm:$0xff]
    %v3980 = vld [vmem:[#allocation6 + $0x238] sm:$0xff]
    %v3981 = vld [vmem:[#allocation6 + $0x240] sm:$0xff]
    %v3982 = vld [vmem:[#allocation6 + $0x248] sm:$0xff]
    %v3983 = vld [vmem:[#allocation6 + $0x250] sm:$0xff]
    %v3984 = vld [vmem:[#allocation6 + $0x258] sm:$0xff]
    %v3985 = vld [vmem:[#allocation6 + $0x260] sm:$0x1]
    %v3986 = vlaneseq
    %v3987 = vshrl.u32 %v3986, 7
    %v3988 = vsub.s32 0, %v3987
    %v3989 = vrot.slane %v3985, %v3988
    %v3991 = vsel %vm1784, %v3972, 0
    %3993 = vmatprep.subr.mxu0 0.0
    %3994 = vmatpush1.msra.mxu0 0.0
    %3995 = vmatprep.subr.mxu0 0.0
    %3996 = vmatpush1.msra.mxu0 0.0
    %3997 = vmatprep.subr.mxu0 0.0
    %3998 = vmatpush1.msra.mxu0 0.0
    %3999 = vmatprep.subr.mxu0 0.0
    %4000 = vmatpush1.msra.mxu0 0.0
    %4001 = vmatprep.subr.mxu0 0.0
    %4002 = vmatpush1.msra.mxu0 %v3984
    %4003 = vmatprep.subr.mxu0 0.0
    %4004 = vmatpush1.msra.mxu0 %v3983
    %4005 = vmatprep.subr.mxu0 0.0
    %4006 = vmatpush1.msra.mxu0 %v3982
    %4007 = vmatprep.subr.mxu0 0.0
    %4008 = vmatpush1.msra.mxu0 %v3981
    %4009 = vmatprep.subr.mxu0 0.0
    %4010 = vmatpush1.msra.mxu0 %v3980
    %4011 = vmatprep.subr.mxu0 0.0
    %4012 = vmatpush1.msra.mxu0 %v3979
    %4013 = vmatprep.subr.mxu0 0.0
    %4014 = vmatpush1.msra.mxu0 %v3978
    %4015 = vmatprep.subr.mxu0 0.0
    %4016 = vmatpush1.msra.mxu0 %v3977
    %4017 = vmatprep.subr.mxu0 0.0
    %4018 = vmatpush1.msra.mxu0 %v3976
    %4019 = vmatprep.subr.mxu0 0.0
    %4020 = vmatpush1.msra.mxu0 %v3975
    %4021 = vmatprep.subr.mxu0 0.0
    %4022 = vmatpush1.msra.mxu0 %v3974
    %4023 = vmatprep.subr.mxu0 0.0
    %4024 = vmatpush1.msra.mxu0 %v3973
    %4025 = vmatprep.subr.mxu0 0.0
    %4026 = vmatpush2.msra.mxu0 0.0
    %4027 = vmatprep.subr.mxu0 0.0
    %4028 = vmatpush2.msra.mxu0 0.0
    %4029 = vmatprep.subr.mxu0 0.0
    %4030 = vmatpush2.msra.mxu0 0.0
    %4031 = vmatprep.subr.mxu0 0.0
    %4032 = vmatpush2.msra.mxu0 0.0
    %4033 = vmatprep.subr.mxu0 0.0
    %4034 = vmatpush2.msra.mxu0 0.0
    %4035 = vmatprep.subr.mxu0 0.0
    %4036 = vmatpush2.msra.mxu0 0.0
    %4037 = vmatprep.subr.mxu0 0.0
    %4038 = vmatpush2.msra.mxu0 0.0
    %4039 = vmatprep.subr.mxu0 0.0
    %4040 = vmatpush2.msra.mxu0 0.0
    %4041 = vmatprep.subr.mxu0 0.0
    %4042 = vmatpush2.msra.mxu0 0.0
    %4043 = vmatprep.subr.mxu0 0.0
    %4044 = vmatpush2.msra.mxu0 0.0
    %4045 = vmatprep.subr.mxu0 0.0
    %4046 = vmatpush2.msra.mxu0 0.0
    %4047 = vmatprep.subr.mxu0 0.0
    %4048 = vmatpush2.msra.mxu0 0.0
    %4049 = vmatprep.subr.mxu0 0.0
    %4050 = vmatpush2.msra.mxu0 0.0
    %4051 = vmatprep.subr.mxu0 0.0
    %4052 = vmatpush2.msra.mxu0 0.0
    %4053 = vmatprep.subr.mxu0 0.0
    %4054 = vmatpush2.msra.mxu0 0.0
    %4055 = vmatprep.subr.mxu0 0.0
    %4056 = vmatpush2.msra.mxu0 0.0
    %4057 = vmatprep.mubr.f32.mxu0 0.0
    %4058 = vmatmul.mubr.f32.gmra.mxu0 %v3991
    %v4059 = vpop.f32.mrf.mxu0
    %v4060 = vadd.f32 %v3989, %v4059
    %v4061 = vpop.f32.mrf.mxu0
    %4062 = vdwg.mxu0
    %4064 = vrot.lane.b32.xlu0 %v4060, 96
    %v4065 = vpop.permute.xlu0 %4064
    %v4067 = vsel %vm1784, %v3972, %v4065
    %4068 = vst [vmem:[%s4] sm:$0x3] %v4067
    // Predicated region
    $region30: #{forward.1} parent=1 // pred_check
      _
    $region31: #{forward.1} parent=1 // pred_check_branch
      %4070 = sbr.rel (0) target = $region33
    $region32: #{forward.1} parent=1 // pred_region
      _
    $region33: #{forward.1} parent=1 // pred_fallthru
      _
    // Predicated region
    $region34: #{forward.1} parent=1 // pred_check
      _
    $region35: #{forward.1} parent=1 // pred_check_branch
      %4072 = sbr.rel (0) target = $region37
    $region36: #{forward.1} parent=1 // pred_region
      _
    $region37: #{forward.1} parent=1 // pred_fallthru
      _
    %4073 = vsyncpa [#allocation3], 1
    %4074 = vsyncpa [#allocation5], 1

</llo_original>
